<compile_context>
chip_gen: v7x
topology: tpu7x:2x2x1
jax: 0.10.0
libtpu: 0.0.40
codegen_flags: <defaults>
</compile_context>

<pallas_src>
import math

import jax
import jax.numpy as jnp
from jax.experimental import pallas as pl
from jax.experimental.pallas import tpu as pltpu

# ----------------------------- configuration -------------------------------
HIDDEN_DIM = 32          # model_config['hidden_dim']
NUM_HEADS = 4            # model_config['num_heads']
NUM_LAYERS = 2           # model_config['num_transformer_layers']
MLP_DIM = 64             # model_config['mlp_dim']
CLIP_FEATURE_DIM = 64    # stand-in for self.clip_feature_dim
FFN_DIM = HIDDEN_DIM * 4
HEAD_DIM = HIDDEN_DIM // NUM_HEADS
PATCH = 4
LN_EPS = 1e-5
MAX_LEN = 512
LOGIT_PAD = 128          # lane-dense final store (real logit in column 0)
VEC_WIDTH = 128          # packed bias/LN slab width

# --- packed bias / LayerNorm slab row layout ---
ROW_BFUSED = 0           # fused (trunk o proj) bias
ROW_HLN_G = 1
ROW_HLN_B = 2
ROW_HB1 = 3
ROW_HB2 = 4              # padded to 128 lanes
ROW_LAYER0 = 5
ROWS_PER_LAYER = 7
L_OUT_B, L_LN1_G, L_LN1_B, L_FF_B1, L_FF_B2, L_LN2_G, L_LN2_B = range(7)
VEC_ROWS_RAW = ROW_LAYER0 + ROWS_PER_LAYER * NUM_LAYERS      # 19
VEC_ROWS = ((VEC_ROWS_RAW + 7) // 8) * 8                     # 24


# ------------------------------ fused kernel --------------------------------
def _ln(y, g, b):
    """LayerNorm over the last axis (eps = PyTorch default)."""
    mu = jnp.mean(y, axis=-1, keepdims=True)
    var = jnp.mean((y - mu) ** 2, axis=-1, keepdims=True)
    return (y - mu) * jax.lax.rsqrt(var + LN_EPS) * g + b


def _fused_forward_kernel(pooled_ref, kbias_ref, wsum_ref,
                          wfused_ref, pe_ref,
                          qkv_w_ref, qkv_b_ref, out_w_ref,
                          ff_w1_ref, ff_w2_ref,
                          head_w1_ref, head_w2_ref, vec_ref,
                          out_ref):
    """One grid step == one full sequence (grid axis = batch, 'parallel')."""
    D, Dh, H = HIDDEN_DIM, HEAD_DIM, NUM_HEADS
    scale = 1.0 / math.sqrt(Dh)

    vecs = vec_ref[...]                                   # (VEC_ROWS, 128)

    def vrow(r, w=D):
        return vecs[r:r + 1, :w]                          # (1, w), lane offset 0

    pooled = pooled_ref[0]                                # (T, patch_dim)
    kbias = kbias_ref[0]                                  # (1, T) key-padding bias

    # --- fused trunk(stand-in) o feature-projection + sinusoidal PE ---
    h = (jnp.dot(pooled, wfused_ref[...], preferred_element_type=jnp.float32)
         + vrow(ROW_BFUSED) + pe_ref[...])                # (T, D)

    # --- transformer encoder layers, statically unrolled ---
    for l in range(NUM_LAYERS):
        base = ROW_LAYER0 + l * ROWS_PER_LAYER
        head_outs = []
        for hh in range(H):
            iq = (l * 3 + 0) * H + hh
            ik = (l * 3 + 1) * H + hh
            iv = (l * 3 + 2) * H + hh
            # per-head weights were sliced host-side -> no lane-sliced activations
            q = jnp.dot(h, qkv_w_ref[iq],
                        preferred_element_type=jnp.float32) + qkv_b_ref[iq]
            k = jnp.dot(h, qkv_w_ref[ik],
                        preferred_element_type=jnp.float32) + qkv_b_ref[ik]
            v = jnp.dot(h, qkv_w_ref[iv],
                        preferred_element_type=jnp.float32) + qkv_b_ref[iv]
            s = jax.lax.dot_general(
                q, k, (((1,), (1,)), ((), ())),
                preferred_element_type=jnp.float32) * scale + kbias   # (T, T)
            m = jnp.max(s, axis=-1, keepdims=True)
            e = jnp.exp(s - m)
            p = e * pl.reciprocal(jnp.sum(e, axis=-1, keepdims=True), approx=True)
            head_outs.append(jnp.dot(p, v, preferred_element_type=jnp.float32))
        # concat heads once, then a single (T, D) @ (D, D) output projection
        attn = (jnp.dot(jnp.concatenate(head_outs, axis=-1), out_w_ref[l],
                        preferred_element_type=jnp.float32)
                + vrow(base + L_OUT_B))

        h = _ln(h + attn, vrow(base + L_LN1_G), vrow(base + L_LN1_B))   # norm1
        f = jnp.maximum(
            jnp.dot(h, ff_w1_ref[l], preferred_element_type=jnp.float32)
            + vrow(base + L_FF_B1, FFN_DIM), 0.0)
        f = (jnp.dot(f, ff_w2_ref[l], preferred_element_type=jnp.float32)
             + vrow(base + L_FF_B2))
        h = _ln(h + f, vrow(base + L_LN2_G), vrow(base + L_LN2_B))      # norm2

    # --- masked mean pooling: per-frame weights already hold valid/cnt ---
    pooled_seq = jnp.sum(h * wsum_ref[0], axis=0, keepdims=True)        # (1, D)

    # --- MLP head: LayerNorm -> Linear -> ReLU -> Linear (lane-padded store) ---
    y = _ln(pooled_seq, vrow(ROW_HLN_G), vrow(ROW_HLN_B))
    y = jnp.maximum(
        jnp.dot(y, head_w1_ref[...], preferred_element_type=jnp.float32)
        + vrow(ROW_HB1, MLP_DIM), 0.0)
    out_ref[0] = (jnp.dot(y, head_w2_ref[...], preferred_element_type=jnp.float32)
                  + vrow(ROW_HB2, LOGIT_PAD)).astype(out_ref.dtype)     # (1, 128)


# ------------------------------ parameter init ------------------------------
def _dense(key, fan_in, fan_out):
    w = jax.random.normal(key, (fan_in, fan_out), jnp.float32) / math.sqrt(fan_in)
    b = jnp.zeros((1, fan_out), jnp.float32)
    return w, b


def make_sinusoidal_pe(d_model, max_len=MAX_LEN):
    position = jnp.arange(max_len, dtype=jnp.float32)[:, None]
    div_term = jnp.exp(
        jnp.arange(0, d_model, 2, dtype=jnp.float32) * (-math.log(10000.0) / d_model))
    pe = jnp.zeros((max_len, d_model), jnp.float32)
    pe = pe.at[:, 0::2].set(jnp.sin(position * div_term))
    pe = pe.at[:, 1::2].set(jnp.cos(position * div_term))
    return pe


def init_params(key, in_channels):
    keys = jax.random.split(key, 8 + NUM_LAYERS * 4)
    ki = iter(keys)
    params = {}
    patch_dim = in_channels * PATCH * PATCH
    params["trunk_w"], params["trunk_b"] = _dense(next(ki), patch_dim, CLIP_FEATURE_DIM)
    params["proj_w"], params["proj_b"] = _dense(next(ki), CLIP_FEATURE_DIM, HIDDEN_DIM)
    params["pe"] = make_sinusoidal_pe(HIDDEN_DIM)

    layers = []
    for _ in range(NUM_LAYERS):
        lp = {}
        lp["in_w"], lp["in_b"] = _dense(next(ki), HIDDEN_DIM, 3 * HIDDEN_DIM)
        lp["out_w"], lp["out_b"] = _dense(next(ki), HIDDEN_DIM, HIDDEN_DIM)
        lp["ff_w1"], lp["ff_b1"] = _dense(next(ki), HIDDEN_DIM, FFN_DIM)
        lp["ff_w2"], lp["ff_b2"] = _dense(next(ki), FFN_DIM, HIDDEN_DIM)
        lp["ln1_g"] = jnp.ones((1, HIDDEN_DIM), jnp.float32)
        lp["ln1_b"] = jnp.zeros((1, HIDDEN_DIM), jnp.float32)
        lp["ln2_g"] = jnp.ones((1, HIDDEN_DIM), jnp.float32)
        lp["ln2_b"] = jnp.zeros((1, HIDDEN_DIM), jnp.float32)
        layers.append(lp)
    params["layers"] = layers

    params["head_ln_g"] = jnp.ones((1, HIDDEN_DIM), jnp.float32)
    params["head_ln_b"] = jnp.zeros((1, HIDDEN_DIM), jnp.float32)
    params["head_w1"], params["head_b1"] = _dense(next(ki), HIDDEN_DIM, MLP_DIM)
    params["head_w2"], params["head_b2"] = _dense(next(ki), MLP_DIM, 1)
    return params


def _pad_row(v):
    return jnp.pad(v, ((0, 0), (0, VEC_WIDTH - v.shape[1])))


def pack_params(params):
    """Host-side one-time packing: fold trunk o proj, split Q/K/V per head,
    stack per-layer weights, and pack every (1, <=128) vector into one slab."""
    D, Dh, H = HIDDEN_DIM, HEAD_DIM, NUM_HEADS
    packed = {}

    packed["w_fused"] = params["trunk_w"] @ params["proj_w"]                 # (patch_dim, D)
    b_fused = params["trunk_b"] @ params["proj_w"] + params["proj_b"]        # (1, D)
    packed["pe"] = params["pe"]

    qkv_w, qkv_b, out_w, ff_w1, ff_w2 = [], [], [], [], []
    vec_rows = [
        _pad_row(b_fused),
        _pad_row(params["head_ln_g"]),
        _pad_row(params["head_ln_b"]),
        _pad_row(params["head_b1"]),
        _pad_row(params["head_b2"]),
    ]
    for lp in params["layers"]:
        for qi in range(3):
            for hh in range(H):
                c0 = qi * D + hh * Dh
                qkv_w.append(lp["in_w"][:, c0:c0 + Dh])                      # (D, Dh)
                qkv_b.append(lp["in_b"][:, c0:c0 + Dh])                      # (1, Dh)
        out_w.append(lp["out_w"])
        ff_w1.append(lp["ff_w1"])
        ff_w2.append(lp["ff_w2"])
        vec_rows += [_pad_row(lp["out_b"]), _pad_row(lp["ln1_g"]), _pad_row(lp["ln1_b"]),
                     _pad_row(lp["ff_b1"]), _pad_row(lp["ff_b2"]),
                     _pad_row(lp["ln2_g"]), _pad_row(lp["ln2_b"])]

    packed["qkv_w"] = jnp.stack(qkv_w)          # (L*3*H, D, Dh)
    packed["qkv_b"] = jnp.stack(qkv_b)          # (L*3*H, 1, Dh)
    packed["out_w"] = jnp.stack(out_w)          # (L, D, D)
    packed["ff_w1"] = jnp.stack(ff_w1)          # (L, D, FFN)
    packed["ff_w2"] = jnp.stack(ff_w2)          # (L, FFN, D)
    packed["head_w1"] = params["head_w1"]       # (D, MLP)
    packed["head_w2"] = jnp.pad(params["head_w2"],
                                ((0, 0), (0, LOGIT_PAD - 1)))  # (MLP, 128), col 0 real
    vec = jnp.concatenate(vec_rows, axis=0)
    packed["vec"] = jnp.pad(vec, ((0, VEC_ROWS - vec.shape[0]), (0, 0)))     # (24, 128)
    return packed


# ------------------------------ forward pass --------------------------------
def video_classifier_forward(packed, x, mask):
    """x: (B, T, C, H, W) float32, mask: (B, T) bool (True = padding frame)."""
    B, T, C, H, W = x.shape
    patch_dim = C * PATCH * PATCH

    # Pre-pool patches host-side (pool commutes with the linear trunk stand-in):
    # 16x smaller kernel input than shipping every patch.
    pooled = jnp.mean(
        x.reshape(B, T, C, H // PATCH, PATCH, W // PATCH, PATCH),
        axis=(3, 5)).reshape(B, T, patch_dim)

    valid = (~mask).astype(jnp.float32)                                   # (B, T)
    cnt = jnp.maximum(jnp.sum(valid, axis=1, keepdims=True), 1.0)         # (B, 1)
    wsum = (valid / cnt)[..., None]                                       # (B, T, 1)
    kbias = (mask.astype(jnp.float32) * jnp.float32(-1e30))[:, None, :]   # (B, 1, T)
    pe_t = packed["pe"][:T]                                               # (T, D)

    def const_spec(a):
        zeros = (0,) * a.ndim
        return pl.BlockSpec(a.shape, lambda b: zeros)      # weights stay resident

    in_specs = [
        pl.BlockSpec((1, T, patch_dim), lambda b: (b, 0, 0)),
        pl.BlockSpec((1, 1, T), lambda b: (b, 0, 0)),
        pl.BlockSpec((1, T, 1), lambda b: (b, 0, 0)),
        const_spec(packed["w_fused"]),
        const_spec(pe_t),
        const_spec(packed["qkv_w"]),
        const_spec(packed["qkv_b"]),
        const_spec(packed["out_w"]),
        const_spec(packed["ff_w1"]),
        const_spec(packed["ff_w2"]),
        const_spec(packed["head_w1"]),
        const_spec(packed["head_w2"]),
        const_spec(packed["vec"]),
    ]
    out_spec = pl.BlockSpec((1, 1, LOGIT_PAD), lambda b: (b, 0, 0))

    logits_pad = pl.pallas_call(
        _fused_forward_kernel,
        grid=(B,),
        in_specs=in_specs,
        out_specs=out_spec,
        out_shape=jax.ShapeDtypeStruct((B, 1, LOGIT_PAD), jnp.float32),
        compiler_params=pltpu.CompilerParams(
            dimension_semantics=("parallel",),
            vmem_limit_bytes=32 * 1024 * 1024),
    )(pooled, kbias, wsum,
      packed["w_fused"], pe_t,
      packed["qkv_w"], packed["qkv_b"], packed["out_w"],
      packed["ff_w1"], packed["ff_w2"],
      packed["head_w1"], packed["head_w2"], packed["vec"])

    return logits_pad[:, 0, 0]                              # (B,)  == squeeze(-1)


# ----------------------------------- main ------------------------------------
if __name__ == "__main__":
    B, T, C, H, W = 2, 8, 3, 16, 16
    key = jax.random.PRNGKey(0)
    k_param, k_x = jax.random.split(key)

    params = init_params(k_param, in_channels=C)
    packed = pack_params(params)                # one-time host-side packing

    x = jax.random.normal(k_x, (B, T, C, H, W), jnp.float32)
    # key padding mask: True = padded frame (sample 0 has 8 valid, sample 1 has 5)
    valid_lengths = jnp.array([8, 5])
    mask = jnp.arange(T)[None, :] >= valid_lengths[:, None]   # (B, T) bool

    fwd = jax.jit(video_classifier_forward)
    logits = fwd(packed, x, mask)
    jax.block_until_ready(logits)
    assert logits.shape == (B,)
    print("KERNEL_OK")
</pallas_src>

<mosaic_0001>
module attributes {stable_mosaic.version = 11 : i64} {
  func.func @_fused_forward_kernel(%arg0: i32, %arg1: memref<1x8x48xf32, #tpu.memory_space<vmem>>, %arg2: memref<1x1x8xf32, #tpu.memory_space<vmem>>, %arg3: memref<1x8x1xf32, #tpu.memory_space<vmem>>, %arg4: memref<48x32xf32, #tpu.memory_space<vmem>>, %arg5: memref<8x32xf32, #tpu.memory_space<vmem>>, %arg6: memref<24x32x8xf32, #tpu.memory_space<vmem>>, %arg7: memref<24x1x8xf32, #tpu.memory_space<vmem>>, %arg8: memref<2x32x32xf32, #tpu.memory_space<vmem>>, %arg9: memref<2x32x128xf32, #tpu.memory_space<vmem>>, %arg10: memref<2x128x32xf32, #tpu.memory_space<vmem>>, %arg11: memref<32x64xf32, #tpu.memory_space<vmem>>, %arg12: memref<64x128xf32, #tpu.memory_space<vmem>>, %arg13: memref<24x128xf32, #tpu.memory_space<vmem>>, %arg14: memref<1x1x128xf32, #tpu.memory_space<vmem>>) attributes {dimension_semantics = [#tpu.dimension_semantics<parallel>], iteration_bounds = array<i64: 2>, scalar_prefetch = 0 : i64, scratch_operands = 0 : i64, tpu.core_type = #tpu.core_type<tc>, window_params = [{transform_indices = @transform_0, window_bounds = array<i64: 1, 8, 48>}, {transform_indices = @transform_1, window_bounds = array<i64: 1, 1, 8>}, {transform_indices = @transform_2, window_bounds = array<i64: 1, 8, 1>}, {pipeline_mode = #tpu.pipeline_mode<synchronous>, transform_indices = @transform_3, window_bounds = array<i64: 48, 32>}, {pipeline_mode = #tpu.pipeline_mode<synchronous>, transform_indices = @transform_4, window_bounds = array<i64: 8, 32>}, {pipeline_mode = #tpu.pipeline_mode<synchronous>, transform_indices = @transform_5, window_bounds = array<i64: 24, 32, 8>}, {pipeline_mode = #tpu.pipeline_mode<synchronous>, transform_indices = @transform_6, window_bounds = array<i64: 24, 1, 8>}, {pipeline_mode = #tpu.pipeline_mode<synchronous>, transform_indices = @transform_7, window_bounds = array<i64: 2, 32, 32>}, {pipeline_mode = #tpu.pipeline_mode<synchronous>, transform_indices = @transform_8, window_bounds = array<i64: 2, 32, 128>}, {pipeline_mode = #tpu.pipeline_mode<synchronous>, transform_indices = @transform_9, window_bounds = array<i64: 2, 128, 32>}, {pipeline_mode = #tpu.pipeline_mode<synchronous>, transform_indices = @transform_10, window_bounds = array<i64: 32, 64>}, {pipeline_mode = #tpu.pipeline_mode<synchronous>, transform_indices = @transform_11, window_bounds = array<i64: 64, 128>}, {pipeline_mode = #tpu.pipeline_mode<synchronous>, transform_indices = @transform_12, window_bounds = array<i64: 24, 128>}, {transform_indices = @transform_13, window_bounds = array<i64: 1, 1, 128>}]} {
    %c0 = arith.constant 0 : index
    %c0_0 = arith.constant 0 : index
    %0 = vector.load %arg13[%c0, %c0_0] : memref<24x128xf32, #tpu.memory_space<vmem>>, vector<24x128xf32>
    %c0_1 = arith.constant 0 : index
    %c0_2 = arith.constant 0 : index
    %c0_3 = arith.constant 0 : index
    %1 = vector.load %arg1[%c0_1, %c0_2, %c0_3] : memref<1x8x48xf32, #tpu.memory_space<vmem>>, vector<1x8x48xf32>
    %2 = vector.shape_cast %1 : vector<1x8x48xf32> to vector<8x48xf32>
    %c0_4 = arith.constant 0 : index
    %c0_5 = arith.constant 0 : index
    %c0_6 = arith.constant 0 : index
    %3 = vector.load %arg2[%c0_4, %c0_5, %c0_6] : memref<1x1x8xf32, #tpu.memory_space<vmem>>, vector<1x1x8xf32>
    %4 = vector.shape_cast %3 : vector<1x1x8xf32> to vector<1x8xf32>
    %c0_7 = arith.constant 0 : index
    %c0_8 = arith.constant 0 : index
    %5 = vector.load %arg4[%c0_7, %c0_8] : memref<48x32xf32, #tpu.memory_space<vmem>>, vector<48x32xf32>
    %cst = arith.constant dense<0.000000e+00> : vector<8x32xf32>
    %6 = tpu.matmul %2, %5, %cst {dimension_numbers = #tpu.dot_dimension_numbers<[1], [0], [0], [1], [0, 0, 1, 1], [], []>} : vector<8x48xf32>, vector<48x32xf32>, vector<8x32xf32> -> vector<8x32xf32>
    %7 = vector.extract_strided_slice %0 {offsets = [0, 0], sizes = [1, 32], strides = [1, 1]} : vector<24x128xf32> to vector<1x32xf32>
    %8 = vector.broadcast %7 : vector<1x32xf32> to vector<8x32xf32>
    %9 = arith.addf %6, %8 : vector<8x32xf32>
    %c0_9 = arith.constant 0 : index
    %c0_10 = arith.constant 0 : index
    %10 = vector.load %arg5[%c0_9, %c0_10] : memref<8x32xf32, #tpu.memory_space<vmem>>, vector<8x32xf32>
    %11 = arith.addf %9, %10 : vector<8x32xf32>
    %c0_11 = arith.constant 0 : index
    %c0_12 = arith.constant 0 : index
    %c0_13 = arith.constant 0 : index
    %12 = vector.load %arg6[%c0_11, %c0_12, %c0_13] : memref<24x32x8xf32, #tpu.memory_space<vmem>>, vector<1x32x8xf32>
    %13 = vector.shape_cast %12 : vector<1x32x8xf32> to vector<32x8xf32>
    %cst_14 = arith.constant dense<0.000000e+00> : vector<8x8xf32>
    %14 = tpu.matmul %11, %13, %cst_14 {dimension_numbers = #tpu.dot_dimension_numbers<[1], [0], [0], [1], [0, 0, 1, 1], [], []>} : vector<8x32xf32>, vector<32x8xf32>, vector<8x8xf32> -> vector<8x8xf32>
    %c0_15 = arith.constant 0 : index
    %c0_16 = arith.constant 0 : index
    %c0_17 = arith.constant 0 : index
    %15 = vector.load %arg7[%c0_15, %c0_16, %c0_17] : memref<24x1x8xf32, #tpu.memory_space<vmem>>, vector<1x1x8xf32>
    %16 = vector.shape_cast %15 : vector<1x1x8xf32> to vector<1x8xf32>
    %17 = vector.broadcast %16 : vector<1x8xf32> to vector<8x8xf32>
    %18 = arith.addf %14, %17 : vector<8x8xf32>
    %c4 = arith.constant 4 : index
    %c0_18 = arith.constant 0 : index
    %c0_19 = arith.constant 0 : index
    %19 = vector.load %arg6[%c4, %c0_18, %c0_19] : memref<24x32x8xf32, #tpu.memory_space<vmem>>, vector<1x32x8xf32>
    %20 = vector.shape_cast %19 : vector<1x32x8xf32> to vector<32x8xf32>
    %cst_20 = arith.constant dense<0.000000e+00> : vector<8x8xf32>
    %21 = tpu.matmul %11, %20, %cst_20 {dimension_numbers = #tpu.dot_dimension_numbers<[1], [0], [0], [1], [0, 0, 1, 1], [], []>} : vector<8x32xf32>, vector<32x8xf32>, vector<8x8xf32> -> vector<8x8xf32>
    %c4_21 = arith.constant 4 : index
    %c0_22 = arith.constant 0 : index
    %c0_23 = arith.constant 0 : index
    %22 = vector.load %arg7[%c4_21, %c0_22, %c0_23] : memref<24x1x8xf32, #tpu.memory_space<vmem>>, vector<1x1x8xf32>
    %23 = vector.shape_cast %22 : vector<1x1x8xf32> to vector<1x8xf32>
    %24 = vector.broadcast %23 : vector<1x8xf32> to vector<8x8xf32>
    %25 = arith.addf %21, %24 : vector<8x8xf32>
    %c8 = arith.constant 8 : index
    %c0_24 = arith.constant 0 : index
    %c0_25 = arith.constant 0 : index
    %26 = vector.load %arg6[%c8, %c0_24, %c0_25] : memref<24x32x8xf32, #tpu.memory_space<vmem>>, vector<1x32x8xf32>
    %27 = vector.shape_cast %26 : vector<1x32x8xf32> to vector<32x8xf32>
    %cst_26 = arith.constant dense<0.000000e+00> : vector<8x8xf32>
    %28 = tpu.matmul %11, %27, %cst_26 {dimension_numbers = #tpu.dot_dimension_numbers<[1], [0], [0], [1], [0, 0, 1, 1], [], []>} : vector<8x32xf32>, vector<32x8xf32>, vector<8x8xf32> -> vector<8x8xf32>
    %c8_27 = arith.constant 8 : index
    %c0_28 = arith.constant 0 : index
    %c0_29 = arith.constant 0 : index
    %29 = vector.load %arg7[%c8_27, %c0_28, %c0_29] : memref<24x1x8xf32, #tpu.memory_space<vmem>>, vector<1x1x8xf32>
    %30 = vector.shape_cast %29 : vector<1x1x8xf32> to vector<1x8xf32>
    %31 = vector.broadcast %30 : vector<1x8xf32> to vector<8x8xf32>
    %32 = arith.addf %28, %31 : vector<8x8xf32>
    %cst_30 = arith.constant dense<0.000000e+00> : vector<8x8xf32>
    %33 = tpu.matmul %18, %25, %cst_30 {dimension_numbers = #tpu.dot_dimension_numbers<[1], [1], [0], [0], [0, 0, 1, 0], [], []>} : vector<8x8xf32>, vector<8x8xf32>, vector<8x8xf32> -> vector<8x8xf32>
    %cst_31 = arith.constant 0.353553385 : f32
    %34 = vector.broadcast %cst_31 : f32 to vector<8x8xf32>
    %35 = arith.mulf %33, %34 : vector<8x8xf32>
    %36 = vector.broadcast %4 : vector<1x8xf32> to vector<8x8xf32>
    %37 = arith.addf %35, %36 : vector<8x8xf32>
    %cst_32 = arith.constant dense<0xFF800000> : vector<8xf32>
    %38 = vector.multi_reduction <maximumf>, %37, %cst_32 [1] : vector<8x8xf32> to vector<8xf32>
    %39 = vector.shape_cast %38 : vector<8xf32> to vector<8x1xf32>
    %40 = vector.broadcast %39 : vector<8x1xf32> to vector<8x8xf32>
    %41 = arith.subf %37, %40 : vector<8x8xf32>
    %42 = math.exp %41 : vector<8x8xf32>
    %cst_33 = arith.constant dense<0.000000e+00> : vector<8xf32>
    %43 = vector.multi_reduction <add>, %42, %cst_33 [1] : vector<8x8xf32> to vector<8xf32>
    %44 = vector.shape_cast %43 : vector<8xf32> to vector<8x1xf32>
    %45 = tpu.reciprocal %44 {approx = true} : vector<8x1xf32> -> vector<8x1xf32>
    %46 = vector.broadcast %45 : vector<8x1xf32> to vector<8x8xf32>
    %47 = arith.mulf %42, %46 : vector<8x8xf32>
    %cst_34 = arith.constant dense<0.000000e+00> : vector<8x8xf32>
    %48 = tpu.matmul %47, %32, %cst_34 {dimension_numbers = #tpu.dot_dimension_numbers<[1], [0], [0], [1], [0, 0, 1, 1], [], []>} : vector<8x8xf32>, vector<8x8xf32>, vector<8x8xf32> -> vector<8x8xf32>
    %c1 = arith.constant 1 : index
    %c0_35 = arith.constant 0 : index
    %c0_36 = arith.constant 0 : index
    %49 = vector.load %arg6[%c1, %c0_35, %c0_36] : memref<24x32x8xf32, #tpu.memory_space<vmem>>, vector<1x32x8xf32>
    %50 = vector.shape_cast %49 : vector<1x32x8xf32> to vector<32x8xf32>
    %cst_37 = arith.constant dense<0.000000e+00> : vector<8x8xf32>
    %51 = tpu.matmul %11, %50, %cst_37 {dimension_numbers = #tpu.dot_dimension_numbers<[1], [0], [0], [1], [0, 0, 1, 1], [], []>} : vector<8x32xf32>, vector<32x8xf32>, vector<8x8xf32> -> vector<8x8xf32>
    %c1_38 = arith.constant 1 : index
    %c0_39 = arith.constant 0 : index
    %c0_40 = arith.constant 0 : index
    %52 = vector.load %arg7[%c1_38, %c0_39, %c0_40] : memref<24x1x8xf32, #tpu.memory_space<vmem>>, vector<1x1x8xf32>
    %53 = vector.shape_cast %52 : vector<1x1x8xf32> to vector<1x8xf32>
    %54 = vector.broadcast %53 : vector<1x8xf32> to vector<8x8xf32>
    %55 = arith.addf %51, %54 : vector<8x8xf32>
    %c5 = arith.constant 5 : index
    %c0_41 = arith.constant 0 : index
    %c0_42 = arith.constant 0 : index
    %56 = vector.load %arg6[%c5, %c0_41, %c0_42] : memref<24x32x8xf32, #tpu.memory_space<vmem>>, vector<1x32x8xf32>
    %57 = vector.shape_cast %56 : vector<1x32x8xf32> to vector<32x8xf32>
    %cst_43 = arith.constant dense<0.000000e+00> : vector<8x8xf32>
    %58 = tpu.matmul %11, %57, %cst_43 {dimension_numbers = #tpu.dot_dimension_numbers<[1], [0], [0], [1], [0, 0, 1, 1], [], []>} : vector<8x32xf32>, vector<32x8xf32>, vector<8x8xf32> -> vector<8x8xf32>
    %c5_44 = arith.constant 5 : index
    %c0_45 = arith.constant 0 : index
    %c0_46 = arith.constant 0 : index
    %59 = vector.load %arg7[%c5_44, %c0_45, %c0_46] : memref<24x1x8xf32, #tpu.memory_space<vmem>>, vector<1x1x8xf32>
    %60 = vector.shape_cast %59 : vector<1x1x8xf32> to vector<1x8xf32>
    %61 = vector.broadcast %60 : vector<1x8xf32> to vector<8x8xf32>
    %62 = arith.addf %58, %61 : vector<8x8xf32>
    %c9 = arith.constant 9 : index
    %c0_47 = arith.constant 0 : index
    %c0_48 = arith.constant 0 : index
    %63 = vector.load %arg6[%c9, %c0_47, %c0_48] : memref<24x32x8xf32, #tpu.memory_space<vmem>>, vector<1x32x8xf32>
    %64 = vector.shape_cast %63 : vector<1x32x8xf32> to vector<32x8xf32>
    %cst_49 = arith.constant dense<0.000000e+00> : vector<8x8xf32>
    %65 = tpu.matmul %11, %64, %cst_49 {dimension_numbers = #tpu.dot_dimension_numbers<[1], [0], [0], [1], [0, 0, 1, 1], [], []>} : vector<8x32xf32>, vector<32x8xf32>, vector<8x8xf32> -> vector<8x8xf32>
    %c9_50 = arith.constant 9 : index
    %c0_51 = arith.constant 0 : index
    %c0_52 = arith.constant 0 : index
    %66 = vector.load %arg7[%c9_50, %c0_51, %c0_52] : memref<24x1x8xf32, #tpu.memory_space<vmem>>, vector<1x1x8xf32>
    %67 = vector.shape_cast %66 : vector<1x1x8xf32> to vector<1x8xf32>
    %68 = vector.broadcast %67 : vector<1x8xf32> to vector<8x8xf32>
    %69 = arith.addf %65, %68 : vector<8x8xf32>
    %cst_53 = arith.constant dense<0.000000e+00> : vector<8x8xf32>
    %70 = tpu.matmul %55, %62, %cst_53 {dimension_numbers = #tpu.dot_dimension_numbers<[1], [1], [0], [0], [0, 0, 1, 0], [], []>} : vector<8x8xf32>, vector<8x8xf32>, vector<8x8xf32> -> vector<8x8xf32>
    %cst_54 = arith.constant 0.353553385 : f32
    %71 = vector.broadcast %cst_54 : f32 to vector<8x8xf32>
    %72 = arith.mulf %70, %71 : vector<8x8xf32>
    %73 = vector.broadcast %4 : vector<1x8xf32> to vector<8x8xf32>
    %74 = arith.addf %72, %73 : vector<8x8xf32>
    %cst_55 = arith.constant dense<0xFF800000> : vector<8xf32>
    %75 = vector.multi_reduction <maximumf>, %74, %cst_55 [1] : vector<8x8xf32> to vector<8xf32>
    %76 = vector.shape_cast %75 : vector<8xf32> to vector<8x1xf32>
    %77 = vector.broadcast %76 : vector<8x1xf32> to vector<8x8xf32>
    %78 = arith.subf %74, %77 : vector<8x8xf32>
    %79 = math.exp %78 : vector<8x8xf32>
    %cst_56 = arith.constant dense<0.000000e+00> : vector<8xf32>
    %80 = vector.multi_reduction <add>, %79, %cst_56 [1] : vector<8x8xf32> to vector<8xf32>
    %81 = vector.shape_cast %80 : vector<8xf32> to vector<8x1xf32>
    %82 = tpu.reciprocal %81 {approx = true} : vector<8x1xf32> -> vector<8x1xf32>
    %83 = vector.broadcast %82 : vector<8x1xf32> to vector<8x8xf32>
    %84 = arith.mulf %79, %83 : vector<8x8xf32>
    %cst_57 = arith.constant dense<0.000000e+00> : vector<8x8xf32>
    %85 = tpu.matmul %84, %69, %cst_57 {dimension_numbers = #tpu.dot_dimension_numbers<[1], [0], [0], [1], [0, 0, 1, 1], [], []>} : vector<8x8xf32>, vector<8x8xf32>, vector<8x8xf32> -> vector<8x8xf32>
    %c2 = arith.constant 2 : index
    %c0_58 = arith.constant 0 : index
    %c0_59 = arith.constant 0 : index
    %86 = vector.load %arg6[%c2, %c0_58, %c0_59] : memref<24x32x8xf32, #tpu.memory_space<vmem>>, vector<1x32x8xf32>
    %87 = vector.shape_cast %86 : vector<1x32x8xf32> to vector<32x8xf32>
    %cst_60 = arith.constant dense<0.000000e+00> : vector<8x8xf32>
    %88 = tpu.matmul %11, %87, %cst_60 {dimension_numbers = #tpu.dot_dimension_numbers<[1], [0], [0], [1], [0, 0, 1, 1], [], []>} : vector<8x32xf32>, vector<32x8xf32>, vector<8x8xf32> -> vector<8x8xf32>
    %c2_61 = arith.constant 2 : index
    %c0_62 = arith.constant 0 : index
    %c0_63 = arith.constant 0 : index
    %89 = vector.load %arg7[%c2_61, %c0_62, %c0_63] : memref<24x1x8xf32, #tpu.memory_space<vmem>>, vector<1x1x8xf32>
    %90 = vector.shape_cast %89 : vector<1x1x8xf32> to vector<1x8xf32>
    %91 = vector.broadcast %90 : vector<1x8xf32> to vector<8x8xf32>
    %92 = arith.addf %88, %91 : vector<8x8xf32>
    %c6 = arith.constant 6 : index
    %c0_64 = arith.constant 0 : index
    %c0_65 = arith.constant 0 : index
    %93 = vector.load %arg6[%c6, %c0_64, %c0_65] : memref<24x32x8xf32, #tpu.memory_space<vmem>>, vector<1x32x8xf32>
    %94 = vector.shape_cast %93 : vector<1x32x8xf32> to vector<32x8xf32>
    %cst_66 = arith.constant dense<0.000000e+00> : vector<8x8xf32>
    %95 = tpu.matmul %11, %94, %cst_66 {dimension_numbers = #tpu.dot_dimension_numbers<[1], [0], [0], [1], [0, 0, 1, 1], [], []>} : vector<8x32xf32>, vector<32x8xf32>, vector<8x8xf32> -> vector<8x8xf32>
    %c6_67 = arith.constant 6 : index
    %c0_68 = arith.constant 0 : index
    %c0_69 = arith.constant 0 : index
    %96 = vector.load %arg7[%c6_67, %c0_68, %c0_69] : memref<24x1x8xf32, #tpu.memory_space<vmem>>, vector<1x1x8xf32>
    %97 = vector.shape_cast %96 : vector<1x1x8xf32> to vector<1x8xf32>
    %98 = vector.broadcast %97 : vector<1x8xf32> to vector<8x8xf32>
    %99 = arith.addf %95, %98 : vector<8x8xf32>
    %c10 = arith.constant 10 : index
    %c0_70 = arith.constant 0 : index
    %c0_71 = arith.constant 0 : index
    %100 = vector.load %arg6[%c10, %c0_70, %c0_71] : memref<24x32x8xf32, #tpu.memory_space<vmem>>, vector<1x32x8xf32>
    %101 = vector.shape_cast %100 : vector<1x32x8xf32> to vector<32x8xf32>
    %cst_72 = arith.constant dense<0.000000e+00> : vector<8x8xf32>
    %102 = tpu.matmul %11, %101, %cst_72 {dimension_numbers = #tpu.dot_dimension_numbers<[1], [0], [0], [1], [0, 0, 1, 1], [], []>} : vector<8x32xf32>, vector<32x8xf32>, vector<8x8xf32> -> vector<8x8xf32>
    %c10_73 = arith.constant 10 : index
    %c0_74 = arith.constant 0 : index
    %c0_75 = arith.constant 0 : index
    %103 = vector.load %arg7[%c10_73, %c0_74, %c0_75] : memref<24x1x8xf32, #tpu.memory_space<vmem>>, vector<1x1x8xf32>
    %104 = vector.shape_cast %103 : vector<1x1x8xf32> to vector<1x8xf32>
    %105 = vector.broadcast %104 : vector<1x8xf32> to vector<8x8xf32>
    %106 = arith.addf %102, %105 : vector<8x8xf32>
    %cst_76 = arith.constant dense<0.000000e+00> : vector<8x8xf32>
    %107 = tpu.matmul %92, %99, %cst_76 {dimension_numbers = #tpu.dot_dimension_numbers<[1], [1], [0], [0], [0, 0, 1, 0], [], []>} : vector<8x8xf32>, vector<8x8xf32>, vector<8x8xf32> -> vector<8x8xf32>
    %cst_77 = arith.constant 0.353553385 : f32
    %108 = vector.broadcast %cst_77 : f32 to vector<8x8xf32>
    %109 = arith.mulf %107, %108 : vector<8x8xf32>
    %110 = vector.broadcast %4 : vector<1x8xf32> to vector<8x8xf32>
    %111 = arith.addf %109, %110 : vector<8x8xf32>
    %cst_78 = arith.constant dense<0xFF800000> : vector<8xf32>
    %112 = vector.multi_reduction <maximumf>, %111, %cst_78 [1] : vector<8x8xf32> to vector<8xf32>
    %113 = vector.shape_cast %112 : vector<8xf32> to vector<8x1xf32>
    %114 = vector.broadcast %113 : vector<8x1xf32> to vector<8x8xf32>
    %115 = arith.subf %111, %114 : vector<8x8xf32>
    %116 = math.exp %115 : vector<8x8xf32>
    %cst_79 = arith.constant dense<0.000000e+00> : vector<8xf32>
    %117 = vector.multi_reduction <add>, %116, %cst_79 [1] : vector<8x8xf32> to vector<8xf32>
    %118 = vector.shape_cast %117 : vector<8xf32> to vector<8x1xf32>
    %119 = tpu.reciprocal %118 {approx = true} : vector<8x1xf32> -> vector<8x1xf32>
    %120 = vector.broadcast %119 : vector<8x1xf32> to vector<8x8xf32>
    %121 = arith.mulf %116, %120 : vector<8x8xf32>
    %cst_80 = arith.constant dense<0.000000e+00> : vector<8x8xf32>
    %122 = tpu.matmul %121, %106, %cst_80 {dimension_numbers = #tpu.dot_dimension_numbers<[1], [0], [0], [1], [0, 0, 1, 1], [], []>} : vector<8x8xf32>, vector<8x8xf32>, vector<8x8xf32> -> vector<8x8xf32>
    %c3 = arith.constant 3 : index
    %c0_81 = arith.constant 0 : index
    %c0_82 = arith.constant 0 : index
    %123 = vector.load %arg6[%c3, %c0_81, %c0_82] : memref<24x32x8xf32, #tpu.memory_space<vmem>>, vector<1x32x8xf32>
    %124 = vector.shape_cast %123 : vector<1x32x8xf32> to vector<32x8xf32>
    %cst_83 = arith.constant dense<0.000000e+00> : vector<8x8xf32>
    %125 = tpu.matmul %11, %124, %cst_83 {dimension_numbers = #tpu.dot_dimension_numbers<[1], [0], [0], [1], [0, 0, 1, 1], [], []>} : vector<8x32xf32>, vector<32x8xf32>, vector<8x8xf32> -> vector<8x8xf32>
    %c3_84 = arith.constant 3 : index
    %c0_85 = arith.constant 0 : index
    %c0_86 = arith.constant 0 : index
    %126 = vector.load %arg7[%c3_84, %c0_85, %c0_86] : memref<24x1x8xf32, #tpu.memory_space<vmem>>, vector<1x1x8xf32>
    %127 = vector.shape_cast %126 : vector<1x1x8xf32> to vector<1x8xf32>
    %128 = vector.broadcast %127 : vector<1x8xf32> to vector<8x8xf32>
    %129 = arith.addf %125, %128 : vector<8x8xf32>
    %c7 = arith.constant 7 : index
    %c0_87 = arith.constant 0 : index
    %c0_88 = arith.constant 0 : index
    %130 = vector.load %arg6[%c7, %c0_87, %c0_88] : memref<24x32x8xf32, #tpu.memory_space<vmem>>, vector<1x32x8xf32>
    %131 = vector.shape_cast %130 : vector<1x32x8xf32> to vector<32x8xf32>
    %cst_89 = arith.constant dense<0.000000e+00> : vector<8x8xf32>
    %132 = tpu.matmul %11, %131, %cst_89 {dimension_numbers = #tpu.dot_dimension_numbers<[1], [0], [0], [1], [0, 0, 1, 1], [], []>} : vector<8x32xf32>, vector<32x8xf32>, vector<8x8xf32> -> vector<8x8xf32>
    %c7_90 = arith.constant 7 : index
    %c0_91 = arith.constant 0 : index
    %c0_92 = arith.constant 0 : index
    %133 = vector.load %arg7[%c7_90, %c0_91, %c0_92] : memref<24x1x8xf32, #tpu.memory_space<vmem>>, vector<1x1x8xf32>
    %134 = vector.shape_cast %133 : vector<1x1x8xf32> to vector<1x8xf32>
    %135 = vector.broadcast %134 : vector<1x8xf32> to vector<8x8xf32>
    %136 = arith.addf %132, %135 : vector<8x8xf32>
    %c11 = arith.constant 11 : index
    %c0_93 = arith.constant 0 : index
    %c0_94 = arith.constant 0 : index
    %137 = vector.load %arg6[%c11, %c0_93, %c0_94] : memref<24x32x8xf32, #tpu.memory_space<vmem>>, vector<1x32x8xf32>
    %138 = vector.shape_cast %137 : vector<1x32x8xf32> to vector<32x8xf32>
    %cst_95 = arith.constant dense<0.000000e+00> : vector<8x8xf32>
    %139 = tpu.matmul %11, %138, %cst_95 {dimension_numbers = #tpu.dot_dimension_numbers<[1], [0], [0], [1], [0, 0, 1, 1], [], []>} : vector<8x32xf32>, vector<32x8xf32>, vector<8x8xf32> -> vector<8x8xf32>
    %c11_96 = arith.constant 11 : index
    %c0_97 = arith.constant 0 : index
    %c0_98 = arith.constant 0 : index
    %140 = vector.load %arg7[%c11_96, %c0_97, %c0_98] : memref<24x1x8xf32, #tpu.memory_space<vmem>>, vector<1x1x8xf32>
    %141 = vector.shape_cast %140 : vector<1x1x8xf32> to vector<1x8xf32>
    %142 = vector.broadcast %141 : vector<1x8xf32> to vector<8x8xf32>
    %143 = arith.addf %139, %142 : vector<8x8xf32>
    %cst_99 = arith.constant dense<0.000000e+00> : vector<8x8xf32>
    %144 = tpu.matmul %129, %136, %cst_99 {dimension_numbers = #tpu.dot_dimension_numbers<[1], [1], [0], [0], [0, 0, 1, 0], [], []>} : vector<8x8xf32>, vector<8x8xf32>, vector<8x8xf32> -> vector<8x8xf32>
    %cst_100 = arith.constant 0.353553385 : f32
    %145 = vector.broadcast %cst_100 : f32 to vector<8x8xf32>
    %146 = arith.mulf %144, %145 : vector<8x8xf32>
    %147 = vector.broadcast %4 : vector<1x8xf32> to vector<8x8xf32>
    %148 = arith.addf %146, %147 : vector<8x8xf32>
    %cst_101 = arith.constant dense<0xFF800000> : vector<8xf32>
    %149 = vector.multi_reduction <maximumf>, %148, %cst_101 [1] : vector<8x8xf32> to vector<8xf32>
    %150 = vector.shape_cast %149 : vector<8xf32> to vector<8x1xf32>
    %151 = vector.broadcast %150 : vector<8x1xf32> to vector<8x8xf32>
    %152 = arith.subf %148, %151 : vector<8x8xf32>
    %153 = math.exp %152 : vector<8x8xf32>
    %cst_102 = arith.constant dense<0.000000e+00> : vector<8xf32>
    %154 = vector.multi_reduction <add>, %153, %cst_102 [1] : vector<8x8xf32> to vector<8xf32>
    %155 = vector.shape_cast %154 : vector<8xf32> to vector<8x1xf32>
    %156 = tpu.reciprocal %155 {approx = true} : vector<8x1xf32> -> vector<8x1xf32>
    %157 = vector.broadcast %156 : vector<8x1xf32> to vector<8x8xf32>
    %158 = arith.mulf %153, %157 : vector<8x8xf32>
    %cst_103 = arith.constant dense<0.000000e+00> : vector<8x8xf32>
    %159 = tpu.matmul %158, %143, %cst_103 {dimension_numbers = #tpu.dot_dimension_numbers<[1], [0], [0], [1], [0, 0, 1, 1], [], []>} : vector<8x8xf32>, vector<8x8xf32>, vector<8x8xf32> -> vector<8x8xf32>
    %160 = tpu.concatenate %48, %85, %122, %159 in 1 : vector<8x8xf32>, vector<8x8xf32>, vector<8x8xf32>, vector<8x8xf32> -> vector<8x32xf32>
    %c0_104 = arith.constant 0 : index
    %c0_105 = arith.constant 0 : index
    %c0_106 = arith.constant 0 : index
    %161 = vector.load %arg8[%c0_104, %c0_105, %c0_106] : memref<2x32x32xf32, #tpu.memory_space<vmem>>, vector<1x32x32xf32>
    %162 = vector.shape_cast %161 : vector<1x32x32xf32> to vector<32x32xf32>
    %cst_107 = arith.constant dense<0.000000e+00> : vector<8x32xf32>
    %163 = tpu.matmul %160, %162, %cst_107 {dimension_numbers = #tpu.dot_dimension_numbers<[1], [0], [0], [1], [0, 0, 1, 1], [], []>} : vector<8x32xf32>, vector<32x32xf32>, vector<8x32xf32> -> vector<8x32xf32>
    %164 = vector.extract_strided_slice %0 {offsets = [5, 0], sizes = [1, 32], strides = [1, 1]} : vector<24x128xf32> to vector<1x32xf32>
    %165 = vector.broadcast %164 : vector<1x32xf32> to vector<8x32xf32>
    %166 = arith.addf %163, %165 : vector<8x32xf32>
    %167 = arith.addf %11, %166 : vector<8x32xf32>
    %168 = vector.extract_strided_slice %0 {offsets = [6, 0], sizes = [1, 32], strides = [1, 1]} : vector<24x128xf32> to vector<1x32xf32>
    %169 = vector.extract_strided_slice %0 {offsets = [7, 0], sizes = [1, 32], strides = [1, 1]} : vector<24x128xf32> to vector<1x32xf32>
    %cst_108 = arith.constant dense<0.000000e+00> : vector<8xf32>
    %170 = vector.multi_reduction <add>, %167, %cst_108 [1] : vector<8x32xf32> to vector<8xf32>
    %171 = vector.shape_cast %170 : vector<8xf32> to vector<8x1xf32>
    %cst_109 = arith.constant 3.200000e+01 : f32
    %172 = vector.broadcast %cst_109 : f32 to vector<8x1xf32>
    %173 = arith.divf %171, %172 : vector<8x1xf32>
    %174 = vector.broadcast %173 : vector<8x1xf32> to vector<8x32xf32>
    %175 = arith.subf %167, %174 : vector<8x32xf32>
    %176 = arith.mulf %175, %175 : vector<8x32xf32>
    %cst_110 = arith.constant dense<0.000000e+00> : vector<8xf32>
    %177 = vector.multi_reduction <add>, %176, %cst_110 [1] : vector<8x32xf32> to vector<8xf32>
    %178 = vector.shape_cast %177 : vector<8xf32> to vector<8x1xf32>
    %cst_111 = arith.constant 3.200000e+01 : f32
    %179 = vector.broadcast %cst_111 : f32 to vector<8x1xf32>
    %180 = arith.divf %178, %179 : vector<8x1xf32>
    %181 = vector.broadcast %173 : vector<8x1xf32> to vector<8x32xf32>
    %182 = arith.subf %167, %181 : vector<8x32xf32>
    %cst_112 = arith.constant 9.99999974E-6 : f32
    %183 = vector.broadcast %cst_112 : f32 to vector<8x1xf32>
    %184 = arith.addf %180, %183 : vector<8x1xf32>
    %185 = math.rsqrt %184 : vector<8x1xf32>
    %186 = vector.broadcast %185 : vector<8x1xf32> to vector<8x32xf32>
    %187 = arith.mulf %182, %186 : vector<8x32xf32>
    %188 = vector.broadcast %168 : vector<1x32xf32> to vector<8x32xf32>
    %189 = arith.mulf %187, %188 : vector<8x32xf32>
    %190 = vector.broadcast %169 : vector<1x32xf32> to vector<8x32xf32>
    %191 = arith.addf %189, %190 : vector<8x32xf32>
    %c0_113 = arith.constant 0 : index
    %c0_114 = arith.constant 0 : index
    %c0_115 = arith.constant 0 : index
    %192 = vector.load %arg9[%c0_113, %c0_114, %c0_115] : memref<2x32x128xf32, #tpu.memory_space<vmem>>, vector<1x32x128xf32>
    %193 = vector.shape_cast %192 : vector<1x32x128xf32> to vector<32x128xf32>
    %cst_116 = arith.constant dense<0.000000e+00> : vector<8x128xf32>
    %194 = tpu.matmul %191, %193, %cst_116 {dimension_numbers = #tpu.dot_dimension_numbers<[1], [0], [0], [1], [0, 0, 1, 1], [], []>} : vector<8x32xf32>, vector<32x128xf32>, vector<8x128xf32> -> vector<8x128xf32>
    %195 = vector.extract_strided_slice %0 {offsets = [8, 0], sizes = [1, 128], strides = [1, 1]} : vector<24x128xf32> to vector<1x128xf32>
    %196 = vector.broadcast %195 : vector<1x128xf32> to vector<8x128xf32>
    %197 = arith.addf %194, %196 : vector<8x128xf32>
    %cst_117 = arith.constant 0.000000e+00 : f32
    %198 = vector.broadcast %cst_117 : f32 to vector<8x128xf32>
    %199 = arith.maximumf %197, %198 : vector<8x128xf32>
    %c0_118 = arith.constant 0 : index
    %c0_119 = arith.constant 0 : index
    %c0_120 = arith.constant 0 : index
    %200 = vector.load %arg10[%c0_118, %c0_119, %c0_120] : memref<2x128x32xf32, #tpu.memory_space<vmem>>, vector<1x128x32xf32>
    %201 = vector.shape_cast %200 : vector<1x128x32xf32> to vector<128x32xf32>
    %cst_121 = arith.constant dense<0.000000e+00> : vector<8x32xf32>
    %202 = tpu.matmul %199, %201, %cst_121 {dimension_numbers = #tpu.dot_dimension_numbers<[1], [0], [0], [1], [0, 0, 1, 1], [], []>} : vector<8x128xf32>, vector<128x32xf32>, vector<8x32xf32> -> vector<8x32xf32>
    %203 = vector.extract_strided_slice %0 {offsets = [9, 0], sizes = [1, 32], strides = [1, 1]} : vector<24x128xf32> to vector<1x32xf32>
    %204 = vector.broadcast %203 : vector<1x32xf32> to vector<8x32xf32>
    %205 = arith.addf %202, %204 : vector<8x32xf32>
    %206 = arith.addf %191, %205 : vector<8x32xf32>
    %207 = vector.extract_strided_slice %0 {offsets = [10, 0], sizes = [1, 32], strides = [1, 1]} : vector<24x128xf32> to vector<1x32xf32>
    %208 = vector.extract_strided_slice %0 {offsets = [11, 0], sizes = [1, 32], strides = [1, 1]} : vector<24x128xf32> to vector<1x32xf32>
    %cst_122 = arith.constant dense<0.000000e+00> : vector<8xf32>
    %209 = vector.multi_reduction <add>, %206, %cst_122 [1] : vector<8x32xf32> to vector<8xf32>
    %210 = vector.shape_cast %209 : vector<8xf32> to vector<8x1xf32>
    %cst_123 = arith.constant 3.200000e+01 : f32
    %211 = vector.broadcast %cst_123 : f32 to vector<8x1xf32>
    %212 = arith.divf %210, %211 : vector<8x1xf32>
    %213 = vector.broadcast %212 : vector<8x1xf32> to vector<8x32xf32>
    %214 = arith.subf %206, %213 : vector<8x32xf32>
    %215 = arith.mulf %214, %214 : vector<8x32xf32>
    %cst_124 = arith.constant dense<0.000000e+00> : vector<8xf32>
    %216 = vector.multi_reduction <add>, %215, %cst_124 [1] : vector<8x32xf32> to vector<8xf32>
    %217 = vector.shape_cast %216 : vector<8xf32> to vector<8x1xf32>
    %cst_125 = arith.constant 3.200000e+01 : f32
    %218 = vector.broadcast %cst_125 : f32 to vector<8x1xf32>
    %219 = arith.divf %217, %218 : vector<8x1xf32>
    %220 = vector.broadcast %212 : vector<8x1xf32> to vector<8x32xf32>
    %221 = arith.subf %206, %220 : vector<8x32xf32>
    %cst_126 = arith.constant 9.99999974E-6 : f32
    %222 = vector.broadcast %cst_126 : f32 to vector<8x1xf32>
    %223 = arith.addf %219, %222 : vector<8x1xf32>
    %224 = math.rsqrt %223 : vector<8x1xf32>
    %225 = vector.broadcast %224 : vector<8x1xf32> to vector<8x32xf32>
    %226 = arith.mulf %221, %225 : vector<8x32xf32>
    %227 = vector.broadcast %207 : vector<1x32xf32> to vector<8x32xf32>
    %228 = arith.mulf %226, %227 : vector<8x32xf32>
    %229 = vector.broadcast %208 : vector<1x32xf32> to vector<8x32xf32>
    %230 = arith.addf %228, %229 : vector<8x32xf32>
    %c12 = arith.constant 12 : index
    %c0_127 = arith.constant 0 : index
    %c0_128 = arith.constant 0 : index
    %231 = vector.load %arg6[%c12, %c0_127, %c0_128] : memref<24x32x8xf32, #tpu.memory_space<vmem>>, vector<1x32x8xf32>
    %232 = vector.shape_cast %231 : vector<1x32x8xf32> to vector<32x8xf32>
    %cst_129 = arith.constant dense<0.000000e+00> : vector<8x8xf32>
    %233 = tpu.matmul %230, %232, %cst_129 {dimension_numbers = #tpu.dot_dimension_numbers<[1], [0], [0], [1], [0, 0, 1, 1], [], []>} : vector<8x32xf32>, vector<32x8xf32>, vector<8x8xf32> -> vector<8x8xf32>
    %c12_130 = arith.constant 12 : index
    %c0_131 = arith.constant 0 : index
    %c0_132 = arith.constant 0 : index
    %234 = vector.load %arg7[%c12_130, %c0_131, %c0_132] : memref<24x1x8xf32, #tpu.memory_space<vmem>>, vector<1x1x8xf32>
    %235 = vector.shape_cast %234 : vector<1x1x8xf32> to vector<1x8xf32>
    %236 = vector.broadcast %235 : vector<1x8xf32> to vector<8x8xf32>
    %237 = arith.addf %233, %236 : vector<8x8xf32>
    %c16 = arith.constant 16 : index
    %c0_133 = arith.constant 0 : index
    %c0_134 = arith.constant 0 : index
    %238 = vector.load %arg6[%c16, %c0_133, %c0_134] : memref<24x32x8xf32, #tpu.memory_space<vmem>>, vector<1x32x8xf32>
    %239 = vector.shape_cast %238 : vector<1x32x8xf32> to vector<32x8xf32>
    %cst_135 = arith.constant dense<0.000000e+00> : vector<8x8xf32>
    %240 = tpu.matmul %230, %239, %cst_135 {dimension_numbers = #tpu.dot_dimension_numbers<[1], [0], [0], [1], [0, 0, 1, 1], [], []>} : vector<8x32xf32>, vector<32x8xf32>, vector<8x8xf32> -> vector<8x8xf32>
    %c16_136 = arith.constant 16 : index
    %c0_137 = arith.constant 0 : index
    %c0_138 = arith.constant 0 : index
    %241 = vector.load %arg7[%c16_136, %c0_137, %c0_138] : memref<24x1x8xf32, #tpu.memory_space<vmem>>, vector<1x1x8xf32>
    %242 = vector.shape_cast %241 : vector<1x1x8xf32> to vector<1x8xf32>
    %243 = vector.broadcast %242 : vector<1x8xf32> to vector<8x8xf32>
    %244 = arith.addf %240, %243 : vector<8x8xf32>
    %c20 = arith.constant 20 : index
    %c0_139 = arith.constant 0 : index
    %c0_140 = arith.constant 0 : index
    %245 = vector.load %arg6[%c20, %c0_139, %c0_140] : memref<24x32x8xf32, #tpu.memory_space<vmem>>, vector<1x32x8xf32>
    %246 = vector.shape_cast %245 : vector<1x32x8xf32> to vector<32x8xf32>
    %cst_141 = arith.constant dense<0.000000e+00> : vector<8x8xf32>
    %247 = tpu.matmul %230, %246, %cst_141 {dimension_numbers = #tpu.dot_dimension_numbers<[1], [0], [0], [1], [0, 0, 1, 1], [], []>} : vector<8x32xf32>, vector<32x8xf32>, vector<8x8xf32> -> vector<8x8xf32>
    %c20_142 = arith.constant 20 : index
    %c0_143 = arith.constant 0 : index
    %c0_144 = arith.constant 0 : index
    %248 = vector.load %arg7[%c20_142, %c0_143, %c0_144] : memref<24x1x8xf32, #tpu.memory_space<vmem>>, vector<1x1x8xf32>
    %249 = vector.shape_cast %248 : vector<1x1x8xf32> to vector<1x8xf32>
    %250 = vector.broadcast %249 : vector<1x8xf32> to vector<8x8xf32>
    %251 = arith.addf %247, %250 : vector<8x8xf32>
    %cst_145 = arith.constant dense<0.000000e+00> : vector<8x8xf32>
    %252 = tpu.matmul %237, %244, %cst_145 {dimension_numbers = #tpu.dot_dimension_numbers<[1], [1], [0], [0], [0, 0, 1, 0], [], []>} : vector<8x8xf32>, vector<8x8xf32>, vector<8x8xf32> -> vector<8x8xf32>
    %cst_146 = arith.constant 0.353553385 : f32
    %253 = vector.broadcast %cst_146 : f32 to vector<8x8xf32>
    %254 = arith.mulf %252, %253 : vector<8x8xf32>
    %255 = vector.broadcast %4 : vector<1x8xf32> to vector<8x8xf32>
    %256 = arith.addf %254, %255 : vector<8x8xf32>
    %cst_147 = arith.constant dense<0xFF800000> : vector<8xf32>
    %257 = vector.multi_reduction <maximumf>, %256, %cst_147 [1] : vector<8x8xf32> to vector<8xf32>
    %258 = vector.shape_cast %257 : vector<8xf32> to vector<8x1xf32>
    %259 = vector.broadcast %258 : vector<8x1xf32> to vector<8x8xf32>
    %260 = arith.subf %256, %259 : vector<8x8xf32>
    %261 = math.exp %260 : vector<8x8xf32>
    %cst_148 = arith.constant dense<0.000000e+00> : vector<8xf32>
    %262 = vector.multi_reduction <add>, %261, %cst_148 [1] : vector<8x8xf32> to vector<8xf32>
    %263 = vector.shape_cast %262 : vector<8xf32> to vector<8x1xf32>
    %264 = tpu.reciprocal %263 {approx = true} : vector<8x1xf32> -> vector<8x1xf32>
    %265 = vector.broadcast %264 : vector<8x1xf32> to vector<8x8xf32>
    %266 = arith.mulf %261, %265 : vector<8x8xf32>
    %cst_149 = arith.constant dense<0.000000e+00> : vector<8x8xf32>
    %267 = tpu.matmul %266, %251, %cst_149 {dimension_numbers = #tpu.dot_dimension_numbers<[1], [0], [0], [1], [0, 0, 1, 1], [], []>} : vector<8x8xf32>, vector<8x8xf32>, vector<8x8xf32> -> vector<8x8xf32>
    %c13 = arith.constant 13 : index
    %c0_150 = arith.constant 0 : index
    %c0_151 = arith.constant 0 : index
    %268 = vector.load %arg6[%c13, %c0_150, %c0_151] : memref<24x32x8xf32, #tpu.memory_space<vmem>>, vector<1x32x8xf32>
    %269 = vector.shape_cast %268 : vector<1x32x8xf32> to vector<32x8xf32>
    %cst_152 = arith.constant dense<0.000000e+00> : vector<8x8xf32>
    %270 = tpu.matmul %230, %269, %cst_152 {dimension_numbers = #tpu.dot_dimension_numbers<[1], [0], [0], [1], [0, 0, 1, 1], [], []>} : vector<8x32xf32>, vector<32x8xf32>, vector<8x8xf32> -> vector<8x8xf32>
    %c13_153 = arith.constant 13 : index
    %c0_154 = arith.constant 0 : index
    %c0_155 = arith.constant 0 : index
    %271 = vector.load %arg7[%c13_153, %c0_154, %c0_155] : memref<24x1x8xf32, #tpu.memory_space<vmem>>, vector<1x1x8xf32>
    %272 = vector.shape_cast %271 : vector<1x1x8xf32> to vector<1x8xf32>
    %273 = vector.broadcast %272 : vector<1x8xf32> to vector<8x8xf32>
    %274 = arith.addf %270, %273 : vector<8x8xf32>
    %c17 = arith.constant 17 : index
    %c0_156 = arith.constant 0 : index
    %c0_157 = arith.constant 0 : index
    %275 = vector.load %arg6[%c17, %c0_156, %c0_157] : memref<24x32x8xf32, #tpu.memory_space<vmem>>, vector<1x32x8xf32>
    %276 = vector.shape_cast %275 : vector<1x32x8xf32> to vector<32x8xf32>
    %cst_158 = arith.constant dense<0.000000e+00> : vector<8x8xf32>
    %277 = tpu.matmul %230, %276, %cst_158 {dimension_numbers = #tpu.dot_dimension_numbers<[1], [0], [0], [1], [0, 0, 1, 1], [], []>} : vector<8x32xf32>, vector<32x8xf32>, vector<8x8xf32> -> vector<8x8xf32>
    %c17_159 = arith.constant 17 : index
    %c0_160 = arith.constant 0 : index
    %c0_161 = arith.constant 0 : index
    %278 = vector.load %arg7[%c17_159, %c0_160, %c0_161] : memref<24x1x8xf32, #tpu.memory_space<vmem>>, vector<1x1x8xf32>
    %279 = vector.shape_cast %278 : vector<1x1x8xf32> to vector<1x8xf32>
    %280 = vector.broadcast %279 : vector<1x8xf32> to vector<8x8xf32>
    %281 = arith.addf %277, %280 : vector<8x8xf32>
    %c21 = arith.constant 21 : index
    %c0_162 = arith.constant 0 : index
    %c0_163 = arith.constant 0 : index
    %282 = vector.load %arg6[%c21, %c0_162, %c0_163] : memref<24x32x8xf32, #tpu.memory_space<vmem>>, vector<1x32x8xf32>
    %283 = vector.shape_cast %282 : vector<1x32x8xf32> to vector<32x8xf32>
    %cst_164 = arith.constant dense<0.000000e+00> : vector<8x8xf32>
    %284 = tpu.matmul %230, %283, %cst_164 {dimension_numbers = #tpu.dot_dimension_numbers<[1], [0], [0], [1], [0, 0, 1, 1], [], []>} : vector<8x32xf32>, vector<32x8xf32>, vector<8x8xf32> -> vector<8x8xf32>
    %c21_165 = arith.constant 21 : index
    %c0_166 = arith.constant 0 : index
    %c0_167 = arith.constant 0 : index
    %285 = vector.load %arg7[%c21_165, %c0_166, %c0_167] : memref<24x1x8xf32, #tpu.memory_space<vmem>>, vector<1x1x8xf32>
    %286 = vector.shape_cast %285 : vector<1x1x8xf32> to vector<1x8xf32>
    %287 = vector.broadcast %286 : vector<1x8xf32> to vector<8x8xf32>
    %288 = arith.addf %284, %287 : vector<8x8xf32>
    %cst_168 = arith.constant dense<0.000000e+00> : vector<8x8xf32>
    %289 = tpu.matmul %274, %281, %cst_168 {dimension_numbers = #tpu.dot_dimension_numbers<[1], [1], [0], [0], [0, 0, 1, 0], [], []>} : vector<8x8xf32>, vector<8x8xf32>, vector<8x8xf32> -> vector<8x8xf32>
    %cst_169 = arith.constant 0.353553385 : f32
    %290 = vector.broadcast %cst_169 : f32 to vector<8x8xf32>
    %291 = arith.mulf %289, %290 : vector<8x8xf32>
    %292 = vector.broadcast %4 : vector<1x8xf32> to vector<8x8xf32>
    %293 = arith.addf %291, %292 : vector<8x8xf32>
    %cst_170 = arith.constant dense<0xFF800000> : vector<8xf32>
    %294 = vector.multi_reduction <maximumf>, %293, %cst_170 [1] : vector<8x8xf32> to vector<8xf32>
    %295 = vector.shape_cast %294 : vector<8xf32> to vector<8x1xf32>
    %296 = vector.broadcast %295 : vector<8x1xf32> to vector<8x8xf32>
    %297 = arith.subf %293, %296 : vector<8x8xf32>
    %298 = math.exp %297 : vector<8x8xf32>
    %cst_171 = arith.constant dense<0.000000e+00> : vector<8xf32>
    %299 = vector.multi_reduction <add>, %298, %cst_171 [1] : vector<8x8xf32> to vector<8xf32>
    %300 = vector.shape_cast %299 : vector<8xf32> to vector<8x1xf32>
    %301 = tpu.reciprocal %300 {approx = true} : vector<8x1xf32> -> vector<8x1xf32>
    %302 = vector.broadcast %301 : vector<8x1xf32> to vector<8x8xf32>
    %303 = arith.mulf %298, %302 : vector<8x8xf32>
    %cst_172 = arith.constant dense<0.000000e+00> : vector<8x8xf32>
    %304 = tpu.matmul %303, %288, %cst_172 {dimension_numbers = #tpu.dot_dimension_numbers<[1], [0], [0], [1], [0, 0, 1, 1], [], []>} : vector<8x8xf32>, vector<8x8xf32>, vector<8x8xf32> -> vector<8x8xf32>
    %c14 = arith.constant 14 : index
    %c0_173 = arith.constant 0 : index
    %c0_174 = arith.constant 0 : index
    %305 = vector.load %arg6[%c14, %c0_173, %c0_174] : memref<24x32x8xf32, #tpu.memory_space<vmem>>, vector<1x32x8xf32>
    %306 = vector.shape_cast %305 : vector<1x32x8xf32> to vector<32x8xf32>
    %cst_175 = arith.constant dense<0.000000e+00> : vector<8x8xf32>
    %307 = tpu.matmul %230, %306, %cst_175 {dimension_numbers = #tpu.dot_dimension_numbers<[1], [0], [0], [1], [0, 0, 1, 1], [], []>} : vector<8x32xf32>, vector<32x8xf32>, vector<8x8xf32> -> vector<8x8xf32>
    %c14_176 = arith.constant 14 : index
    %c0_177 = arith.constant 0 : index
    %c0_178 = arith.constant 0 : index
    %308 = vector.load %arg7[%c14_176, %c0_177, %c0_178] : memref<24x1x8xf32, #tpu.memory_space<vmem>>, vector<1x1x8xf32>
    %309 = vector.shape_cast %308 : vector<1x1x8xf32> to vector<1x8xf32>
    %310 = vector.broadcast %309 : vector<1x8xf32> to vector<8x8xf32>
    %311 = arith.addf %307, %310 : vector<8x8xf32>
    %c18 = arith.constant 18 : index
    %c0_179 = arith.constant 0 : index
    %c0_180 = arith.constant 0 : index
    %312 = vector.load %arg6[%c18, %c0_179, %c0_180] : memref<24x32x8xf32, #tpu.memory_space<vmem>>, vector<1x32x8xf32>
    %313 = vector.shape_cast %312 : vector<1x32x8xf32> to vector<32x8xf32>
    %cst_181 = arith.constant dense<0.000000e+00> : vector<8x8xf32>
    %314 = tpu.matmul %230, %313, %cst_181 {dimension_numbers = #tpu.dot_dimension_numbers<[1], [0], [0], [1], [0, 0, 1, 1], [], []>} : vector<8x32xf32>, vector<32x8xf32>, vector<8x8xf32> -> vector<8x8xf32>
    %c18_182 = arith.constant 18 : index
    %c0_183 = arith.constant 0 : index
    %c0_184 = arith.constant 0 : index
    %315 = vector.load %arg7[%c18_182, %c0_183, %c0_184] : memref<24x1x8xf32, #tpu.memory_space<vmem>>, vector<1x1x8xf32>
    %316 = vector.shape_cast %315 : vector<1x1x8xf32> to vector<1x8xf32>
    %317 = vector.broadcast %316 : vector<1x8xf32> to vector<8x8xf32>
    %318 = arith.addf %314, %317 : vector<8x8xf32>
    %c22 = arith.constant 22 : index
    %c0_185 = arith.constant 0 : index
    %c0_186 = arith.constant 0 : index
    %319 = vector.load %arg6[%c22, %c0_185, %c0_186] : memref<24x32x8xf32, #tpu.memory_space<vmem>>, vector<1x32x8xf32>
    %320 = vector.shape_cast %319 : vector<1x32x8xf32> to vector<32x8xf32>
    %cst_187 = arith.constant dense<0.000000e+00> : vector<8x8xf32>
    %321 = tpu.matmul %230, %320, %cst_187 {dimension_numbers = #tpu.dot_dimension_numbers<[1], [0], [0], [1], [0, 0, 1, 1], [], []>} : vector<8x32xf32>, vector<32x8xf32>, vector<8x8xf32> -> vector<8x8xf32>
    %c22_188 = arith.constant 22 : index
    %c0_189 = arith.constant 0 : index
    %c0_190 = arith.constant 0 : index
    %322 = vector.load %arg7[%c22_188, %c0_189, %c0_190] : memref<24x1x8xf32, #tpu.memory_space<vmem>>, vector<1x1x8xf32>
    %323 = vector.shape_cast %322 : vector<1x1x8xf32> to vector<1x8xf32>
    %324 = vector.broadcast %323 : vector<1x8xf32> to vector<8x8xf32>
    %325 = arith.addf %321, %324 : vector<8x8xf32>
    %cst_191 = arith.constant dense<0.000000e+00> : vector<8x8xf32>
    %326 = tpu.matmul %311, %318, %cst_191 {dimension_numbers = #tpu.dot_dimension_numbers<[1], [1], [0], [0], [0, 0, 1, 0], [], []>} : vector<8x8xf32>, vector<8x8xf32>, vector<8x8xf32> -> vector<8x8xf32>
    %cst_192 = arith.constant 0.353553385 : f32
    %327 = vector.broadcast %cst_192 : f32 to vector<8x8xf32>
    %328 = arith.mulf %326, %327 : vector<8x8xf32>
    %329 = vector.broadcast %4 : vector<1x8xf32> to vector<8x8xf32>
    %330 = arith.addf %328, %329 : vector<8x8xf32>
    %cst_193 = arith.constant dense<0xFF800000> : vector<8xf32>
    %331 = vector.multi_reduction <maximumf>, %330, %cst_193 [1] : vector<8x8xf32> to vector<8xf32>
    %332 = vector.shape_cast %331 : vector<8xf32> to vector<8x1xf32>
    %333 = vector.broadcast %332 : vector<8x1xf32> to vector<8x8xf32>
    %334 = arith.subf %330, %333 : vector<8x8xf32>
    %335 = math.exp %334 : vector<8x8xf32>
    %cst_194 = arith.constant dense<0.000000e+00> : vector<8xf32>
    %336 = vector.multi_reduction <add>, %335, %cst_194 [1] : vector<8x8xf32> to vector<8xf32>
    %337 = vector.shape_cast %336 : vector<8xf32> to vector<8x1xf32>
    %338 = tpu.reciprocal %337 {approx = true} : vector<8x1xf32> -> vector<8x1xf32>
    %339 = vector.broadcast %338 : vector<8x1xf32> to vector<8x8xf32>
    %340 = arith.mulf %335, %339 : vector<8x8xf32>
    %cst_195 = arith.constant dense<0.000000e+00> : vector<8x8xf32>
    %341 = tpu.matmul %340, %325, %cst_195 {dimension_numbers = #tpu.dot_dimension_numbers<[1], [0], [0], [1], [0, 0, 1, 1], [], []>} : vector<8x8xf32>, vector<8x8xf32>, vector<8x8xf32> -> vector<8x8xf32>
    %c15 = arith.constant 15 : index
    %c0_196 = arith.constant 0 : index
    %c0_197 = arith.constant 0 : index
    %342 = vector.load %arg6[%c15, %c0_196, %c0_197] : memref<24x32x8xf32, #tpu.memory_space<vmem>>, vector<1x32x8xf32>
    %343 = vector.shape_cast %342 : vector<1x32x8xf32> to vector<32x8xf32>
    %cst_198 = arith.constant dense<0.000000e+00> : vector<8x8xf32>
    %344 = tpu.matmul %230, %343, %cst_198 {dimension_numbers = #tpu.dot_dimension_numbers<[1], [0], [0], [1], [0, 0, 1, 1], [], []>} : vector<8x32xf32>, vector<32x8xf32>, vector<8x8xf32> -> vector<8x8xf32>
    %c15_199 = arith.constant 15 : index
    %c0_200 = arith.constant 0 : index
    %c0_201 = arith.constant 0 : index
    %345 = vector.load %arg7[%c15_199, %c0_200, %c0_201] : memref<24x1x8xf32, #tpu.memory_space<vmem>>, vector<1x1x8xf32>
    %346 = vector.shape_cast %345 : vector<1x1x8xf32> to vector<1x8xf32>
    %347 = vector.broadcast %346 : vector<1x8xf32> to vector<8x8xf32>
    %348 = arith.addf %344, %347 : vector<8x8xf32>
    %c19 = arith.constant 19 : index
    %c0_202 = arith.constant 0 : index
    %c0_203 = arith.constant 0 : index
    %349 = vector.load %arg6[%c19, %c0_202, %c0_203] : memref<24x32x8xf32, #tpu.memory_space<vmem>>, vector<1x32x8xf32>
    %350 = vector.shape_cast %349 : vector<1x32x8xf32> to vector<32x8xf32>
    %cst_204 = arith.constant dense<0.000000e+00> : vector<8x8xf32>
    %351 = tpu.matmul %230, %350, %cst_204 {dimension_numbers = #tpu.dot_dimension_numbers<[1], [0], [0], [1], [0, 0, 1, 1], [], []>} : vector<8x32xf32>, vector<32x8xf32>, vector<8x8xf32> -> vector<8x8xf32>
    %c19_205 = arith.constant 19 : index
    %c0_206 = arith.constant 0 : index
    %c0_207 = arith.constant 0 : index
    %352 = vector.load %arg7[%c19_205, %c0_206, %c0_207] : memref<24x1x8xf32, #tpu.memory_space<vmem>>, vector<1x1x8xf32>
    %353 = vector.shape_cast %352 : vector<1x1x8xf32> to vector<1x8xf32>
    %354 = vector.broadcast %353 : vector<1x8xf32> to vector<8x8xf32>
    %355 = arith.addf %351, %354 : vector<8x8xf32>
    %c23 = arith.constant 23 : index
    %c0_208 = arith.constant 0 : index
    %c0_209 = arith.constant 0 : index
    %356 = vector.load %arg6[%c23, %c0_208, %c0_209] : memref<24x32x8xf32, #tpu.memory_space<vmem>>, vector<1x32x8xf32>
    %357 = vector.shape_cast %356 : vector<1x32x8xf32> to vector<32x8xf32>
    %cst_210 = arith.constant dense<0.000000e+00> : vector<8x8xf32>
    %358 = tpu.matmul %230, %357, %cst_210 {dimension_numbers = #tpu.dot_dimension_numbers<[1], [0], [0], [1], [0, 0, 1, 1], [], []>} : vector<8x32xf32>, vector<32x8xf32>, vector<8x8xf32> -> vector<8x8xf32>
    %c23_211 = arith.constant 23 : index
    %c0_212 = arith.constant 0 : index
    %c0_213 = arith.constant 0 : index
    %359 = vector.load %arg7[%c23_211, %c0_212, %c0_213] : memref<24x1x8xf32, #tpu.memory_space<vmem>>, vector<1x1x8xf32>
    %360 = vector.shape_cast %359 : vector<1x1x8xf32> to vector<1x8xf32>
    %361 = vector.broadcast %360 : vector<1x8xf32> to vector<8x8xf32>
    %362 = arith.addf %358, %361 : vector<8x8xf32>
    %cst_214 = arith.constant dense<0.000000e+00> : vector<8x8xf32>
    %363 = tpu.matmul %348, %355, %cst_214 {dimension_numbers = #tpu.dot_dimension_numbers<[1], [1], [0], [0], [0, 0, 1, 0], [], []>} : vector<8x8xf32>, vector<8x8xf32>, vector<8x8xf32> -> vector<8x8xf32>
    %cst_215 = arith.constant 0.353553385 : f32
    %364 = vector.broadcast %cst_215 : f32 to vector<8x8xf32>
    %365 = arith.mulf %363, %364 : vector<8x8xf32>
    %366 = vector.broadcast %4 : vector<1x8xf32> to vector<8x8xf32>
    %367 = arith.addf %365, %366 : vector<8x8xf32>
    %cst_216 = arith.constant dense<0xFF800000> : vector<8xf32>
    %368 = vector.multi_reduction <maximumf>, %367, %cst_216 [1] : vector<8x8xf32> to vector<8xf32>
    %369 = vector.shape_cast %368 : vector<8xf32> to vector<8x1xf32>
    %370 = vector.broadcast %369 : vector<8x1xf32> to vector<8x8xf32>
    %371 = arith.subf %367, %370 : vector<8x8xf32>
    %372 = math.exp %371 : vector<8x8xf32>
    %cst_217 = arith.constant dense<0.000000e+00> : vector<8xf32>
    %373 = vector.multi_reduction <add>, %372, %cst_217 [1] : vector<8x8xf32> to vector<8xf32>
    %374 = vector.shape_cast %373 : vector<8xf32> to vector<8x1xf32>
    %375 = tpu.reciprocal %374 {approx = true} : vector<8x1xf32> -> vector<8x1xf32>
    %376 = vector.broadcast %375 : vector<8x1xf32> to vector<8x8xf32>
    %377 = arith.mulf %372, %376 : vector<8x8xf32>
    %cst_218 = arith.constant dense<0.000000e+00> : vector<8x8xf32>
    %378 = tpu.matmul %377, %362, %cst_218 {dimension_numbers = #tpu.dot_dimension_numbers<[1], [0], [0], [1], [0, 0, 1, 1], [], []>} : vector<8x8xf32>, vector<8x8xf32>, vector<8x8xf32> -> vector<8x8xf32>
    %379 = tpu.concatenate %267, %304, %341, %378 in 1 : vector<8x8xf32>, vector<8x8xf32>, vector<8x8xf32>, vector<8x8xf32> -> vector<8x32xf32>
    %c1_219 = arith.constant 1 : index
    %c0_220 = arith.constant 0 : index
    %c0_221 = arith.constant 0 : index
    %380 = vector.load %arg8[%c1_219, %c0_220, %c0_221] : memref<2x32x32xf32, #tpu.memory_space<vmem>>, vector<1x32x32xf32>
    %381 = vector.shape_cast %380 : vector<1x32x32xf32> to vector<32x32xf32>
    %cst_222 = arith.constant dense<0.000000e+00> : vector<8x32xf32>
    %382 = tpu.matmul %379, %381, %cst_222 {dimension_numbers = #tpu.dot_dimension_numbers<[1], [0], [0], [1], [0, 0, 1, 1], [], []>} : vector<8x32xf32>, vector<32x32xf32>, vector<8x32xf32> -> vector<8x32xf32>
    %383 = vector.extract_strided_slice %0 {offsets = [12, 0], sizes = [1, 32], strides = [1, 1]} : vector<24x128xf32> to vector<1x32xf32>
    %384 = vector.broadcast %383 : vector<1x32xf32> to vector<8x32xf32>
    %385 = arith.addf %382, %384 : vector<8x32xf32>
    %386 = arith.addf %230, %385 : vector<8x32xf32>
    %387 = vector.extract_strided_slice %0 {offsets = [13, 0], sizes = [1, 32], strides = [1, 1]} : vector<24x128xf32> to vector<1x32xf32>
    %388 = vector.extract_strided_slice %0 {offsets = [14, 0], sizes = [1, 32], strides = [1, 1]} : vector<24x128xf32> to vector<1x32xf32>
    %cst_223 = arith.constant dense<0.000000e+00> : vector<8xf32>
    %389 = vector.multi_reduction <add>, %386, %cst_223 [1] : vector<8x32xf32> to vector<8xf32>
    %390 = vector.shape_cast %389 : vector<8xf32> to vector<8x1xf32>
    %cst_224 = arith.constant 3.200000e+01 : f32
    %391 = vector.broadcast %cst_224 : f32 to vector<8x1xf32>
    %392 = arith.divf %390, %391 : vector<8x1xf32>
    %393 = vector.broadcast %392 : vector<8x1xf32> to vector<8x32xf32>
    %394 = arith.subf %386, %393 : vector<8x32xf32>
    %395 = arith.mulf %394, %394 : vector<8x32xf32>
    %cst_225 = arith.constant dense<0.000000e+00> : vector<8xf32>
    %396 = vector.multi_reduction <add>, %395, %cst_225 [1] : vector<8x32xf32> to vector<8xf32>
    %397 = vector.shape_cast %396 : vector<8xf32> to vector<8x1xf32>
    %cst_226 = arith.constant 3.200000e+01 : f32
    %398 = vector.broadcast %cst_226 : f32 to vector<8x1xf32>
    %399 = arith.divf %397, %398 : vector<8x1xf32>
    %400 = vector.broadcast %392 : vector<8x1xf32> to vector<8x32xf32>
    %401 = arith.subf %386, %400 : vector<8x32xf32>
    %cst_227 = arith.constant 9.99999974E-6 : f32
    %402 = vector.broadcast %cst_227 : f32 to vector<8x1xf32>
    %403 = arith.addf %399, %402 : vector<8x1xf32>
    %404 = math.rsqrt %403 : vector<8x1xf32>
    %405 = vector.broadcast %404 : vector<8x1xf32> to vector<8x32xf32>
    %406 = arith.mulf %401, %405 : vector<8x32xf32>
    %407 = vector.broadcast %387 : vector<1x32xf32> to vector<8x32xf32>
    %408 = arith.mulf %406, %407 : vector<8x32xf32>
    %409 = vector.broadcast %388 : vector<1x32xf32> to vector<8x32xf32>
    %410 = arith.addf %408, %409 : vector<8x32xf32>
    %c1_228 = arith.constant 1 : index
    %c0_229 = arith.constant 0 : index
    %c0_230 = arith.constant 0 : index
    %411 = vector.load %arg9[%c1_228, %c0_229, %c0_230] : memref<2x32x128xf32, #tpu.memory_space<vmem>>, vector<1x32x128xf32>
    %412 = vector.shape_cast %411 : vector<1x32x128xf32> to vector<32x128xf32>
    %cst_231 = arith.constant dense<0.000000e+00> : vector<8x128xf32>
    %413 = tpu.matmul %410, %412, %cst_231 {dimension_numbers = #tpu.dot_dimension_numbers<[1], [0], [0], [1], [0, 0, 1, 1], [], []>} : vector<8x32xf32>, vector<32x128xf32>, vector<8x128xf32> -> vector<8x128xf32>
    %414 = vector.extract_strided_slice %0 {offsets = [15, 0], sizes = [1, 128], strides = [1, 1]} : vector<24x128xf32> to vector<1x128xf32>
    %415 = vector.broadcast %414 : vector<1x128xf32> to vector<8x128xf32>
    %416 = arith.addf %413, %415 : vector<8x128xf32>
    %cst_232 = arith.constant 0.000000e+00 : f32
    %417 = vector.broadcast %cst_232 : f32 to vector<8x128xf32>
    %418 = arith.maximumf %416, %417 : vector<8x128xf32>
    %c1_233 = arith.constant 1 : index
    %c0_234 = arith.constant 0 : index
    %c0_235 = arith.constant 0 : index
    %419 = vector.load %arg10[%c1_233, %c0_234, %c0_235] : memref<2x128x32xf32, #tpu.memory_space<vmem>>, vector<1x128x32xf32>
    %420 = vector.shape_cast %419 : vector<1x128x32xf32> to vector<128x32xf32>
    %cst_236 = arith.constant dense<0.000000e+00> : vector<8x32xf32>
    %421 = tpu.matmul %418, %420, %cst_236 {dimension_numbers = #tpu.dot_dimension_numbers<[1], [0], [0], [1], [0, 0, 1, 1], [], []>} : vector<8x128xf32>, vector<128x32xf32>, vector<8x32xf32> -> vector<8x32xf32>
    %422 = vector.extract_strided_slice %0 {offsets = [16, 0], sizes = [1, 32], strides = [1, 1]} : vector<24x128xf32> to vector<1x32xf32>
    %423 = vector.broadcast %422 : vector<1x32xf32> to vector<8x32xf32>
    %424 = arith.addf %421, %423 : vector<8x32xf32>
    %425 = arith.addf %410, %424 : vector<8x32xf32>
    %426 = vector.extract_strided_slice %0 {offsets = [17, 0], sizes = [1, 32], strides = [1, 1]} : vector<24x128xf32> to vector<1x32xf32>
    %427 = vector.extract_strided_slice %0 {offsets = [18, 0], sizes = [1, 32], strides = [1, 1]} : vector<24x128xf32> to vector<1x32xf32>
    %cst_237 = arith.constant dense<0.000000e+00> : vector<8xf32>
    %428 = vector.multi_reduction <add>, %425, %cst_237 [1] : vector<8x32xf32> to vector<8xf32>
    %429 = vector.shape_cast %428 : vector<8xf32> to vector<8x1xf32>
    %cst_238 = arith.constant 3.200000e+01 : f32
    %430 = vector.broadcast %cst_238 : f32 to vector<8x1xf32>
    %431 = arith.divf %429, %430 : vector<8x1xf32>
    %432 = vector.broadcast %431 : vector<8x1xf32> to vector<8x32xf32>
    %433 = arith.subf %425, %432 : vector<8x32xf32>
    %434 = arith.mulf %433, %433 : vector<8x32xf32>
    %cst_239 = arith.constant dense<0.000000e+00> : vector<8xf32>
    %435 = vector.multi_reduction <add>, %434, %cst_239 [1] : vector<8x32xf32> to vector<8xf32>
    %436 = vector.shape_cast %435 : vector<8xf32> to vector<8x1xf32>
    %cst_240 = arith.constant 3.200000e+01 : f32
    %437 = vector.broadcast %cst_240 : f32 to vector<8x1xf32>
    %438 = arith.divf %436, %437 : vector<8x1xf32>
    %439 = vector.broadcast %431 : vector<8x1xf32> to vector<8x32xf32>
    %440 = arith.subf %425, %439 : vector<8x32xf32>
    %cst_241 = arith.constant 9.99999974E-6 : f32
    %441 = vector.broadcast %cst_241 : f32 to vector<8x1xf32>
    %442 = arith.addf %438, %441 : vector<8x1xf32>
    %443 = math.rsqrt %442 : vector<8x1xf32>
    %444 = vector.broadcast %443 : vector<8x1xf32> to vector<8x32xf32>
    %445 = arith.mulf %440, %444 : vector<8x32xf32>
    %446 = vector.broadcast %426 : vector<1x32xf32> to vector<8x32xf32>
    %447 = arith.mulf %445, %446 : vector<8x32xf32>
    %448 = vector.broadcast %427 : vector<1x32xf32> to vector<8x32xf32>
    %449 = arith.addf %447, %448 : vector<8x32xf32>
    %c0_242 = arith.constant 0 : index
    %c0_243 = arith.constant 0 : index
    %c0_244 = arith.constant 0 : index
    %450 = vector.load %arg3[%c0_242, %c0_243, %c0_244] : memref<1x8x1xf32, #tpu.memory_space<vmem>>, vector<1x8x1xf32>
    %451 = vector.shape_cast %450 : vector<1x8x1xf32> to vector<8x1xf32>
    %452 = vector.broadcast %451 : vector<8x1xf32> to vector<8x32xf32>
    %453 = arith.mulf %449, %452 : vector<8x32xf32>
    %cst_245 = arith.constant dense<0.000000e+00> : vector<32xf32>
    %454 = vector.multi_reduction <add>, %453, %cst_245 [0] : vector<8x32xf32> to vector<32xf32>
    %455 = vector.shape_cast %454 : vector<32xf32> to vector<1x32xf32>
    %456 = vector.extract_strided_slice %0 {offsets = [1, 0], sizes = [1, 32], strides = [1, 1]} : vector<24x128xf32> to vector<1x32xf32>
    %457 = vector.extract_strided_slice %0 {offsets = [2, 0], sizes = [1, 32], strides = [1, 1]} : vector<24x128xf32> to vector<1x32xf32>
    %cst_246 = arith.constant dense<0.000000e+00> : vector<1xf32>
    %458 = vector.multi_reduction <add>, %455, %cst_246 [1] : vector<1x32xf32> to vector<1xf32>
    %459 = vector.shape_cast %458 : vector<1xf32> to vector<1x1xf32>
    %cst_247 = arith.constant 3.200000e+01 : f32
    %460 = vector.broadcast %cst_247 : f32 to vector<1x1xf32>
    %461 = arith.divf %459, %460 : vector<1x1xf32>
    %462 = vector.broadcast %461 : vector<1x1xf32> to vector<1x32xf32>
    %463 = arith.subf %455, %462 : vector<1x32xf32>
    %464 = arith.mulf %463, %463 : vector<1x32xf32>
    %cst_248 = arith.constant dense<0.000000e+00> : vector<1xf32>
    %465 = vector.multi_reduction <add>, %464, %cst_248 [1] : vector<1x32xf32> to vector<1xf32>
    %466 = vector.shape_cast %465 : vector<1xf32> to vector<1x1xf32>
    %cst_249 = arith.constant 3.200000e+01 : f32
    %467 = vector.broadcast %cst_249 : f32 to vector<1x1xf32>
    %468 = arith.divf %466, %467 : vector<1x1xf32>
    %469 = vector.broadcast %461 : vector<1x1xf32> to vector<1x32xf32>
    %470 = arith.subf %455, %469 : vector<1x32xf32>
    %cst_250 = arith.constant 9.99999974E-6 : f32
    %471 = vector.broadcast %cst_250 : f32 to vector<1x1xf32>
    %472 = arith.addf %468, %471 : vector<1x1xf32>
    %473 = math.rsqrt %472 : vector<1x1xf32>
    %474 = vector.broadcast %473 : vector<1x1xf32> to vector<1x32xf32>
    %475 = arith.mulf %470, %474 : vector<1x32xf32>
    %476 = arith.mulf %475, %456 : vector<1x32xf32>
    %477 = arith.addf %476, %457 : vector<1x32xf32>
    %c0_251 = arith.constant 0 : index
    %c0_252 = arith.constant 0 : index
    %478 = vector.load %arg11[%c0_251, %c0_252] : memref<32x64xf32, #tpu.memory_space<vmem>>, vector<32x64xf32>
    %cst_253 = arith.constant dense<0.000000e+00> : vector<1x64xf32>
    %479 = tpu.matmul %477, %478, %cst_253 {dimension_numbers = #tpu.dot_dimension_numbers<[1], [0], [0], [1], [0, 0, 1, 1], [], []>} : vector<1x32xf32>, vector<32x64xf32>, vector<1x64xf32> -> vector<1x64xf32>
    %480 = vector.extract_strided_slice %0 {offsets = [3, 0], sizes = [1, 64], strides = [1, 1]} : vector<24x128xf32> to vector<1x64xf32>
    %481 = arith.addf %479, %480 : vector<1x64xf32>
    %cst_254 = arith.constant 0.000000e+00 : f32
    %482 = vector.broadcast %cst_254 : f32 to vector<1x64xf32>
    %483 = arith.maximumf %481, %482 : vector<1x64xf32>
    %c0_255 = arith.constant 0 : index
    %c0_256 = arith.constant 0 : index
    %484 = vector.load %arg12[%c0_255, %c0_256] : memref<64x128xf32, #tpu.memory_space<vmem>>, vector<64x128xf32>
    %cst_257 = arith.constant dense<0.000000e+00> : vector<1x128xf32>
    %485 = tpu.matmul %483, %484, %cst_257 {dimension_numbers = #tpu.dot_dimension_numbers<[1], [0], [0], [1], [0, 0, 1, 1], [], []>} : vector<1x64xf32>, vector<64x128xf32>, vector<1x128xf32> -> vector<1x128xf32>
    %486 = vector.extract_strided_slice %0 {offsets = [4, 0], sizes = [1, 128], strides = [1, 1]} : vector<24x128xf32> to vector<1x128xf32>
    %487 = arith.addf %485, %486 : vector<1x128xf32>
    %c0_258 = arith.constant 0 : index
    %c0_259 = arith.constant 0 : index
    %c0_260 = arith.constant 0 : index
    %488 = vector.load %arg14[%c0_258, %c0_259, %c0_260] : memref<1x1x128xf32, #tpu.memory_space<vmem>>, vector<1x1x128xf32>
    %489 = vector.shape_cast %488 : vector<1x1x128xf32> to vector<1x128xf32>
    %490 = vector.shape_cast %487 : vector<1x128xf32> to vector<1x1x128xf32>
    tpu.vector_store %arg14[%c0_258, %c0_259, %c0_260], %490 {strides = array<i32>} : memref<1x1x128xf32, #tpu.memory_space<vmem>>, vector<1x1x128xf32>,
    return
  }
  func.func @transform_0(%arg0: i32) -> (i32, i32, i32) {
    %c0_i32 = arith.constant 0 : i32
    %c0_i32_0 = arith.constant 0 : i32
    %c0_i32_1 = arith.constant 0 : i32
    return %arg0, %c0_i32, %c0_i32_0 : i32, i32, i32
  }
  func.func @transform_1(%arg0: i32) -> (i32, i32, i32) {
    %c0_i32 = arith.constant 0 : i32
    %c0_i32_0 = arith.constant 0 : i32
    %c0_i32_1 = arith.constant 0 : i32
    return %arg0, %c0_i32, %c0_i32_0 : i32, i32, i32
  }
  func.func @transform_2(%arg0: i32) -> (i32, i32, i32) {
    %c0_i32 = arith.constant 0 : i32
    %c0_i32_0 = arith.constant 0 : i32
    %c0_i32_1 = arith.constant 0 : i32
    return %arg0, %c0_i32, %c0_i32_0 : i32, i32, i32
  }
  func.func @transform_3(%arg0: i32) -> (i32, i32) {
    %c0_i32 = arith.constant 0 : i32
    %c0_i32_0 = arith.constant 0 : i32
    %c0_i32_1 = arith.constant 0 : i32
    return %c0_i32, %c0_i32_0 : i32, i32
  }
  func.func @transform_4(%arg0: i32) -> (i32, i32) {
    %c0_i32 = arith.constant 0 : i32
    %c0_i32_0 = arith.constant 0 : i32
    %c0_i32_1 = arith.constant 0 : i32
    return %c0_i32, %c0_i32_0 : i32, i32
  }
  func.func @transform_5(%arg0: i32) -> (i32, i32, i32) {
    %c0_i32 = arith.constant 0 : i32
    %c0_i32_0 = arith.constant 0 : i32
    %c0_i32_1 = arith.constant 0 : i32
    %c0_i32_2 = arith.constant 0 : i32
    return %c0_i32, %c0_i32_0, %c0_i32_1 : i32, i32, i32
  }
  func.func @transform_6(%arg0: i32) -> (i32, i32, i32) {
    %c0_i32 = arith.constant 0 : i32
    %c0_i32_0 = arith.constant 0 : i32
    %c0_i32_1 = arith.constant 0 : i32
    %c0_i32_2 = arith.constant 0 : i32
    return %c0_i32, %c0_i32_0, %c0_i32_1 : i32, i32, i32
  }
  func.func @transform_7(%arg0: i32) -> (i32, i32, i32) {
    %c0_i32 = arith.constant 0 : i32
    %c0_i32_0 = arith.constant 0 : i32
    %c0_i32_1 = arith.constant 0 : i32
    %c0_i32_2 = arith.constant 0 : i32
    return %c0_i32, %c0_i32_0, %c0_i32_1 : i32, i32, i32
  }
  func.func @transform_8(%arg0: i32) -> (i32, i32, i32) {
    %c0_i32 = arith.constant 0 : i32
    %c0_i32_0 = arith.constant 0 : i32
    %c0_i32_1 = arith.constant 0 : i32
    %c0_i32_2 = arith.constant 0 : i32
    return %c0_i32, %c0_i32_0, %c0_i32_1 : i32, i32, i32
  }
  func.func @transform_9(%arg0: i32) -> (i32, i32, i32) {
    %c0_i32 = arith.constant 0 : i32
    %c0_i32_0 = arith.constant 0 : i32
    %c0_i32_1 = arith.constant 0 : i32
    %c0_i32_2 = arith.constant 0 : i32
    return %c0_i32, %c0_i32_0, %c0_i32_1 : i32, i32, i32
  }
  func.func @transform_10(%arg0: i32) -> (i32, i32) {
    %c0_i32 = arith.constant 0 : i32
    %c0_i32_0 = arith.constant 0 : i32
    %c0_i32_1 = arith.constant 0 : i32
    return %c0_i32, %c0_i32_0 : i32, i32
  }
  func.func @transform_11(%arg0: i32) -> (i32, i32) {
    %c0_i32 = arith.constant 0 : i32
    %c0_i32_0 = arith.constant 0 : i32
    %c0_i32_1 = arith.constant 0 : i32
    return %c0_i32, %c0_i32_0 : i32, i32
  }
  func.func @transform_12(%arg0: i32) -> (i32, i32) {
    %c0_i32 = arith.constant 0 : i32
    %c0_i32_0 = arith.constant 0 : i32
    %c0_i32_1 = arith.constant 0 : i32
    return %c0_i32, %c0_i32_0 : i32, i32
  }
  func.func @transform_13(%arg0: i32) -> (i32, i32, i32) {
    %c0_i32 = arith.constant 0 : i32
    %c0_i32_0 = arith.constant 0 : i32
    %c0_i32_1 = arith.constant 0 : i32
    return %arg0, %c0_i32, %c0_i32_0 : i32, i32, i32
  }
}

</mosaic_0001>

<llo_original>
// kernel: video_classifier_forward.1
$region0: #{video_classifier_forward.1}
  #allocation0 [shape = 'u32[]', space=smem, size = 0x4, offset = 0x4, fixed_abs, tag = 'smem constant byte address 0x4 - core index']
  #allocation1 [shape = 'u32[144,128]{1,0:T(1,128)}', space=vmem, size = 0x12000, scoped, tag = 'internal scratch']
  %s0 = inlined_call_operand.vmem [shape: f32[2,8,48], index: 0, kind: input, shape index: {}]
  %s1 = inlined_call_operand.vmem [shape: f32[2,1,8], index: 1, kind: input, shape index: {}]
  %s2 = inlined_call_operand.vmem [shape: f32[2,8,1], index: 2, kind: input, shape index: {}]
  %s3 = inlined_call_operand.vmem [shape: f32[48,32], index: 3, kind: input, shape index: {}]
  %s4 = inlined_call_operand.vmem [shape: f32[8,32], index: 4, kind: input, shape index: {}]
  %s5 = inlined_call_operand.vmem [shape: f32[24,32,8], index: 5, kind: input, shape index: {}]
  %s6 = inlined_call_operand.vmem [shape: f32[24,1,8], index: 6, kind: input, shape index: {}]
  %s7 = inlined_call_operand.vmem [shape: f32[2,32,32], index: 7, kind: input, shape index: {}]
  %s8 = inlined_call_operand.vmem [shape: f32[2,32,128], index: 8, kind: input, shape index: {}]
  %s9 = inlined_call_operand.vmem [shape: f32[2,128,32], index: 9, kind: input, shape index: {}]
  %s10 = inlined_call_operand.vmem [shape: f32[32,64], index: 10, kind: input, shape index: {}]
  %s11 = inlined_call_operand.vmem [shape: f32[64,128], index: 11, kind: input, shape index: {}]
  %s12 = inlined_call_operand.vmem [shape: f32[24,128], index: 12, kind: input, shape index: {}]
  %s13 = inlined_call_operand.vmem [shape: f32[2,1,128], index: 13, kind: output, shape index: {}]
  %s14 = sld [smem:[#allocation0]]
  $region85: #{video_classifier_forward.1} parent=0
    _
  %s16 = ssub.s32 1, %s14
  %s17 = scalar_select 0, %s16, %s14
  loop: start=0, step=1, limit=4
  $region2: #{video_classifier_forward.1} parent=0 // loop_pre_header
    _
  $region3: #{video_classifier_forward.1} parent=0 // loop_header
    %s19 = sphi 0, %s23
    %p20 = scmp.ge.s32.totalorder %s19, 4
    %s29 = sphi 0, %s31
    %s32 = sphi 0, %s29
    %s33 = sphi 0, %s32
    %s49 = sphi 0, %s33
    %s55 = sphi 0, %s57
    %s58 = sphi 0, %s55
    %s59 = sphi 0, %s58
    %s75 = sphi 0, %s59
    %s81 = sphi 0, %s83
    %s84 = sphi 0, %s81
    %s85 = sphi 0, %s84
    %s101 = sphi 0, %s85
    %s105 = sphi 0, %s105
    %s107 = sphi 0, %s105
    %s108 = sphi 0, %s107
    %s122 = sphi 0, %s108
    %s126 = sphi 0, %s126
    %s128 = sphi 0, %s126
    %s129 = sphi 0, %s128
    %s143 = sphi 0, %s129
    %s147 = sphi 0, %s147
    %s149 = sphi 0, %s147
    %s150 = sphi 0, %s149
    %s164 = sphi 0, %s150
    %s168 = sphi 0, %s168
    %s170 = sphi 0, %s168
    %s171 = sphi 0, %s170
    %s185 = sphi 0, %s171
    %s189 = sphi 0, %s189
    %s191 = sphi 0, %s189
    %s192 = sphi 0, %s191
    %s206 = sphi 0, %s192
    %s210 = sphi 0, %s210
    %s212 = sphi 0, %s210
    %s213 = sphi 0, %s212
    %s227 = sphi 0, %s213
    %s231 = sphi 0, %s231
    %s233 = sphi 0, %s231
    %s234 = sphi 0, %s233
    %s248 = sphi 0, %s234
    %s252 = sphi 0, %s252
    %s254 = sphi 0, %s252
    %s255 = sphi 0, %s254
    %s269 = sphi 0, %s255
    %s273 = sphi 0, %s273
    %s275 = sphi 0, %s273
    %s276 = sphi 0, %s275
    %s290 = sphi 0, %s276
    %s294 = sphi 0, %s294
    %s296 = sphi 0, %s294
    %s297 = sphi 0, %s296
    %s311 = sphi 0, %s297
    %s317 = sphi 0, %s319
    %s320 = sphi 0, %s317
    %s321 = sphi 0, %s320
    %s337 = sphi 0, %s321
  $region4: #{video_classifier_forward.1} parent=0 // loop_header_branch
    %22 = sbr.rel (%p20) target = $region8
  $region5: #{video_classifier_forward.1} parent=0 // loop_body
    %s24 = ssub.s32 %s19, 1
    %s25 = ssub.s32 %s19, 2
    %s26 = sadd.s32 %s19, 1
    %s27 = ssub.s32 %s19, %s26
    %p28 = scmp.eq.s32.totalorder %s27, 0
    %s30 = sadd.s32 %s29, 1
    %s31 = scalar_select %p28, %s29, %s30
    %p34 = pneg %p28
    %p35 = scmp.eq.s32.totalorder %s19, 1
    %p36 = por %p34, %p35
    %p37 = scmp.ne.s32.totalorder %s29, %s32
    %p38 = scmp.eq.s32.totalorder %s19, 0
    %p39 = por %p37, %p38
    %p40 = scmp.ne.s32.totalorder %s29, %s32
    %p41 = scmp.eq.s32.totalorder %s24, 1
    %p42 = por %p40, %p41
    %p43 = scmp.ne.s32.totalorder %s32, %s33
    %p44 = scmp.eq.s32.totalorder %s24, 0
    %p45 = por %p43, %p44
    %p46 = scmp.ne.s32.totalorder %s32, %s33
    %p47 = scmp.eq.s32.totalorder %s25, 1
    %p48 = por %p46, %p47
    %p50 = scmp.ne.s32.totalorder %s33, %s49
    %p51 = scmp.eq.s32.totalorder %s25, 0
    %p52 = por %p50, %p51
    %s53 = ssub.s32 %s19, %s26
    %p54 = scmp.eq.s32.totalorder %s53, 0
    %s56 = sadd.s32 %s55, 1
    %s57 = scalar_select %p54, %s55, %s56
    %p60 = pneg %p54
    %p61 = scmp.eq.s32.totalorder %s19, 1
    %p62 = por %p60, %p61
    %p63 = scmp.ne.s32.totalorder %s55, %s58
    %p64 = scmp.eq.s32.totalorder %s19, 0
    %p65 = por %p63, %p64
    %p66 = scmp.ne.s32.totalorder %s55, %s58
    %p67 = scmp.eq.s32.totalorder %s24, 1
    %p68 = por %p66, %p67
    %p69 = scmp.ne.s32.totalorder %s58, %s59
    %p70 = scmp.eq.s32.totalorder %s24, 0
    %p71 = por %p69, %p70
    %p72 = scmp.ne.s32.totalorder %s58, %s59
    %p73 = scmp.eq.s32.totalorder %s25, 1
    %p74 = por %p72, %p73
    %p76 = scmp.ne.s32.totalorder %s59, %s75
    %p77 = scmp.eq.s32.totalorder %s25, 0
    %p78 = por %p76, %p77
    %s79 = ssub.s32 %s19, %s26
    %p80 = scmp.eq.s32.totalorder %s79, 0
    %s82 = sadd.s32 %s81, 1
    %s83 = scalar_select %p80, %s81, %s82
    %p86 = pneg %p80
    %p87 = scmp.eq.s32.totalorder %s19, 1
    %p88 = por %p86, %p87
    %p89 = scmp.ne.s32.totalorder %s81, %s84
    %p90 = scmp.eq.s32.totalorder %s19, 0
    %p91 = por %p89, %p90
    %p92 = scmp.ne.s32.totalorder %s81, %s84
    %p93 = scmp.eq.s32.totalorder %s24, 1
    %p94 = por %p92, %p93
    %p95 = scmp.ne.s32.totalorder %s84, %s85
    %p96 = scmp.eq.s32.totalorder %s24, 0
    %p97 = por %p95, %p96
    %p98 = scmp.ne.s32.totalorder %s84, %s85
    %p99 = scmp.eq.s32.totalorder %s25, 1
    %p100 = por %p98, %p99
    %p102 = scmp.ne.s32.totalorder %s85, %s101
    %p103 = scmp.eq.s32.totalorder %s25, 0
    %p104 = por %p102, %p103
    %s106 = sadd.s32 %s105, 1
    %p109 = scmp.eq.s32.totalorder %s19, 1
    %p110 = scmp.ne.s32.totalorder %s105, %s107
    %p111 = scmp.eq.s32.totalorder %s19, 0
    %p112 = por %p110, %p111
    %p113 = scmp.ne.s32.totalorder %s105, %s107
    %p114 = scmp.eq.s32.totalorder %s24, 1
    %p115 = por %p113, %p114
    %p116 = scmp.ne.s32.totalorder %s107, %s108
    %p117 = scmp.eq.s32.totalorder %s24, 0
    %p118 = por %p116, %p117
    %p119 = scmp.ne.s32.totalorder %s107, %s108
    %p120 = scmp.eq.s32.totalorder %s25, 1
    %p121 = por %p119, %p120
    %p123 = scmp.ne.s32.totalorder %s108, %s122
    %p124 = scmp.eq.s32.totalorder %s25, 0
    %p125 = por %p123, %p124
    %s127 = sadd.s32 %s126, 1
    %p130 = scmp.eq.s32.totalorder %s19, 1
    %p131 = scmp.ne.s32.totalorder %s126, %s128
    %p132 = scmp.eq.s32.totalorder %s19, 0
    %p133 = por %p131, %p132
    %p134 = scmp.ne.s32.totalorder %s126, %s128
    %p135 = scmp.eq.s32.totalorder %s24, 1
    %p136 = por %p134, %p135
    %p137 = scmp.ne.s32.totalorder %s128, %s129
    %p138 = scmp.eq.s32.totalorder %s24, 0
    %p139 = por %p137, %p138
    %p140 = scmp.ne.s32.totalorder %s128, %s129
    %p141 = scmp.eq.s32.totalorder %s25, 1
    %p142 = por %p140, %p141
    %p144 = scmp.ne.s32.totalorder %s129, %s143
    %p145 = scmp.eq.s32.totalorder %s25, 0
    %p146 = por %p144, %p145
    %s148 = sadd.s32 %s147, 1
    %p151 = scmp.eq.s32.totalorder %s19, 1
    %p152 = scmp.ne.s32.totalorder %s147, %s149
    %p153 = scmp.eq.s32.totalorder %s19, 0
    %p154 = por %p152, %p153
    %p155 = scmp.ne.s32.totalorder %s147, %s149
    %p156 = scmp.eq.s32.totalorder %s24, 1
    %p157 = por %p155, %p156
    %p158 = scmp.ne.s32.totalorder %s149, %s150
    %p159 = scmp.eq.s32.totalorder %s24, 0
    %p160 = por %p158, %p159
    %p161 = scmp.ne.s32.totalorder %s149, %s150
    %p162 = scmp.eq.s32.totalorder %s25, 1
    %p163 = por %p161, %p162
    %p165 = scmp.ne.s32.totalorder %s150, %s164
    %p166 = scmp.eq.s32.totalorder %s25, 0
    %p167 = por %p165, %p166
    %s169 = sadd.s32 %s168, 1
    %p172 = scmp.eq.s32.totalorder %s19, 1
    %p173 = scmp.ne.s32.totalorder %s168, %s170
    %p174 = scmp.eq.s32.totalorder %s19, 0
    %p175 = por %p173, %p174
    %p176 = scmp.ne.s32.totalorder %s168, %s170
    %p177 = scmp.eq.s32.totalorder %s24, 1
    %p178 = por %p176, %p177
    %p179 = scmp.ne.s32.totalorder %s170, %s171
    %p180 = scmp.eq.s32.totalorder %s24, 0
    %p181 = por %p179, %p180
    %p182 = scmp.ne.s32.totalorder %s170, %s171
    %p183 = scmp.eq.s32.totalorder %s25, 1
    %p184 = por %p182, %p183
    %p186 = scmp.ne.s32.totalorder %s171, %s185
    %p187 = scmp.eq.s32.totalorder %s25, 0
    %p188 = por %p186, %p187
    %s190 = sadd.s32 %s189, 1
    %p193 = scmp.eq.s32.totalorder %s19, 1
    %p194 = scmp.ne.s32.totalorder %s189, %s191
    %p195 = scmp.eq.s32.totalorder %s19, 0
    %p196 = por %p194, %p195
    %p197 = scmp.ne.s32.totalorder %s189, %s191
    %p198 = scmp.eq.s32.totalorder %s24, 1
    %p199 = por %p197, %p198
    %p200 = scmp.ne.s32.totalorder %s191, %s192
    %p201 = scmp.eq.s32.totalorder %s24, 0
    %p202 = por %p200, %p201
    %p203 = scmp.ne.s32.totalorder %s191, %s192
    %p204 = scmp.eq.s32.totalorder %s25, 1
    %p205 = por %p203, %p204
    %p207 = scmp.ne.s32.totalorder %s192, %s206
    %p208 = scmp.eq.s32.totalorder %s25, 0
    %p209 = por %p207, %p208
    %s211 = sadd.s32 %s210, 1
    %p214 = scmp.eq.s32.totalorder %s19, 1
    %p215 = scmp.ne.s32.totalorder %s210, %s212
    %p216 = scmp.eq.s32.totalorder %s19, 0
    %p217 = por %p215, %p216
    %p218 = scmp.ne.s32.totalorder %s210, %s212
    %p219 = scmp.eq.s32.totalorder %s24, 1
    %p220 = por %p218, %p219
    %p221 = scmp.ne.s32.totalorder %s212, %s213
    %p222 = scmp.eq.s32.totalorder %s24, 0
    %p223 = por %p221, %p222
    %p224 = scmp.ne.s32.totalorder %s212, %s213
    %p225 = scmp.eq.s32.totalorder %s25, 1
    %p226 = por %p224, %p225
    %p228 = scmp.ne.s32.totalorder %s213, %s227
    %p229 = scmp.eq.s32.totalorder %s25, 0
    %p230 = por %p228, %p229
    %s232 = sadd.s32 %s231, 1
    %p235 = scmp.eq.s32.totalorder %s19, 1
    %p236 = scmp.ne.s32.totalorder %s231, %s233
    %p237 = scmp.eq.s32.totalorder %s19, 0
    %p238 = por %p236, %p237
    %p239 = scmp.ne.s32.totalorder %s231, %s233
    %p240 = scmp.eq.s32.totalorder %s24, 1
    %p241 = por %p239, %p240
    %p242 = scmp.ne.s32.totalorder %s233, %s234
    %p243 = scmp.eq.s32.totalorder %s24, 0
    %p244 = por %p242, %p243
    %p245 = scmp.ne.s32.totalorder %s233, %s234
    %p246 = scmp.eq.s32.totalorder %s25, 1
    %p247 = por %p245, %p246
    %p249 = scmp.ne.s32.totalorder %s234, %s248
    %p250 = scmp.eq.s32.totalorder %s25, 0
    %p251 = por %p249, %p250
    %s253 = sadd.s32 %s252, 1
    %p256 = scmp.eq.s32.totalorder %s19, 1
    %p257 = scmp.ne.s32.totalorder %s252, %s254
    %p258 = scmp.eq.s32.totalorder %s19, 0
    %p259 = por %p257, %p258
    %p260 = scmp.ne.s32.totalorder %s252, %s254
    %p261 = scmp.eq.s32.totalorder %s24, 1
    %p262 = por %p260, %p261
    %p263 = scmp.ne.s32.totalorder %s254, %s255
    %p264 = scmp.eq.s32.totalorder %s24, 0
    %p265 = por %p263, %p264
    %p266 = scmp.ne.s32.totalorder %s254, %s255
    %p267 = scmp.eq.s32.totalorder %s25, 1
    %p268 = por %p266, %p267
    %p270 = scmp.ne.s32.totalorder %s255, %s269
    %p271 = scmp.eq.s32.totalorder %s25, 0
    %p272 = por %p270, %p271
    %s274 = sadd.s32 %s273, 1
    %p277 = scmp.eq.s32.totalorder %s19, 1
    %p278 = scmp.ne.s32.totalorder %s273, %s275
    %p279 = scmp.eq.s32.totalorder %s19, 0
    %p280 = por %p278, %p279
    %p281 = scmp.ne.s32.totalorder %s273, %s275
    %p282 = scmp.eq.s32.totalorder %s24, 1
    %p283 = por %p281, %p282
    %p284 = scmp.ne.s32.totalorder %s275, %s276
    %p285 = scmp.eq.s32.totalorder %s24, 0
    %p286 = por %p284, %p285
    %p287 = scmp.ne.s32.totalorder %s275, %s276
    %p288 = scmp.eq.s32.totalorder %s25, 1
    %p289 = por %p287, %p288
    %p291 = scmp.ne.s32.totalorder %s276, %s290
    %p292 = scmp.eq.s32.totalorder %s25, 0
    %p293 = por %p291, %p292
    %s295 = sadd.s32 %s294, 1
    %p298 = scmp.eq.s32.totalorder %s19, 1
    %p299 = scmp.ne.s32.totalorder %s294, %s296
    %p300 = scmp.eq.s32.totalorder %s19, 0
    %p301 = por %p299, %p300
    %p302 = scmp.ne.s32.totalorder %s294, %s296
    %p303 = scmp.eq.s32.totalorder %s24, 1
    %p304 = por %p302, %p303
    %p305 = scmp.ne.s32.totalorder %s296, %s297
    %p306 = scmp.eq.s32.totalorder %s24, 0
    %p307 = por %p305, %p306
    %p308 = scmp.ne.s32.totalorder %s296, %s297
    %p309 = scmp.eq.s32.totalorder %s25, 1
    %p310 = por %p308, %p309
    %p312 = scmp.ne.s32.totalorder %s297, %s311
    %p313 = scmp.eq.s32.totalorder %s25, 0
    %p314 = por %p312, %p313
    %s315 = ssub.s32 %s19, %s26
    %p316 = scmp.eq.s32.totalorder %s315, 0
    %s318 = sadd.s32 %s317, 1
    %s319 = scalar_select %p316, %s317, %s318
    %p322 = pneg %p316
    %p323 = scmp.eq.s32.totalorder %s19, 1
    %p324 = por %p322, %p323
    %p325 = scmp.ne.s32.totalorder %s317, %s320
    %p326 = scmp.eq.s32.totalorder %s19, 0
    %p327 = por %p325, %p326
    %p328 = scmp.ne.s32.totalorder %s317, %s320
    %p329 = scmp.eq.s32.totalorder %s24, 1
    %p330 = por %p328, %p329
    %p331 = scmp.ne.s32.totalorder %s320, %s321
    %p332 = scmp.eq.s32.totalorder %s24, 0
    %p333 = por %p331, %p332
    %p334 = scmp.ne.s32.totalorder %s320, %s321
    %p335 = scmp.eq.s32.totalorder %s25, 1
    %p336 = por %p334, %p335
    %p338 = scmp.ne.s32.totalorder %s321, %s337
    %p339 = scmp.eq.s32.totalorder %s25, 0
    %p340 = por %p338, %p339
    %p341 = scmp.le.s32.totalorder 1, %s19
    %p342 = scmp.lt.s32.totalorder %s19, 3
    %p343 = pnand %p341, %p342
    %p344 = pneg %p343
    // Predicated region
    $region9: #{video_classifier_forward.1} parent=5 // pred_check
      _
    $region10: #{video_classifier_forward.1} parent=5 // pred_check_branch
      %346 = sbr.rel (%p343) target = $region12
    $region11: #{video_classifier_forward.1} parent=5 // pred_region
      %s347 = ssub.s32 %s19, 1
      // Predicated region
      $region13: #{video_classifier_forward.1} parent=11 // pred_check
        %p348 = pneg %p118
      $region14: #{video_classifier_forward.1} parent=11 // pred_check_branch
        %350 = sbr.rel (%p348) target = $region16
      $region15: #{video_classifier_forward.1} parent=11 // pred_region
        _
      $region16: #{video_classifier_forward.1} parent=11 // pred_fallthru
        _
      // Predicated region
      $region17: #{video_classifier_forward.1} parent=11 // pred_check
        %p351 = pneg %p139
      $region18: #{video_classifier_forward.1} parent=11 // pred_check_branch
        %353 = sbr.rel (%p351) target = $region20
      $region19: #{video_classifier_forward.1} parent=11 // pred_region
        _
      $region20: #{video_classifier_forward.1} parent=11 // pred_fallthru
        _
      // Predicated region
      $region21: #{video_classifier_forward.1} parent=11 // pred_check
        %p354 = pneg %p160
      $region22: #{video_classifier_forward.1} parent=11 // pred_check_branch
        %356 = sbr.rel (%p354) target = $region24
      $region23: #{video_classifier_forward.1} parent=11 // pred_region
        _
      $region24: #{video_classifier_forward.1} parent=11 // pred_fallthru
        _
      // Predicated region
      $region25: #{video_classifier_forward.1} parent=11 // pred_check
        %p357 = pneg %p181
      $region26: #{video_classifier_forward.1} parent=11 // pred_check_branch
        %359 = sbr.rel (%p357) target = $region28
      $region27: #{video_classifier_forward.1} parent=11 // pred_region
        _
      $region28: #{video_classifier_forward.1} parent=11 // pred_fallthru
        _
      // Predicated region
      $region29: #{video_classifier_forward.1} parent=11 // pred_check
        %p360 = pneg %p202
      $region30: #{video_classifier_forward.1} parent=11 // pred_check_branch
        %362 = sbr.rel (%p360) target = $region32
      $region31: #{video_classifier_forward.1} parent=11 // pred_region
        _
      $region32: #{video_classifier_forward.1} parent=11 // pred_fallthru
        _
      // Predicated region
      $region33: #{video_classifier_forward.1} parent=11 // pred_check
        %p363 = pneg %p223
      $region34: #{video_classifier_forward.1} parent=11 // pred_check_branch
        %365 = sbr.rel (%p363) target = $region36
      $region35: #{video_classifier_forward.1} parent=11 // pred_region
        _
      $region36: #{video_classifier_forward.1} parent=11 // pred_fallthru
        _
      // Predicated region
      $region37: #{video_classifier_forward.1} parent=11 // pred_check
        %p366 = pneg %p244
      $region38: #{video_classifier_forward.1} parent=11 // pred_check_branch
        %368 = sbr.rel (%p366) target = $region40
      $region39: #{video_classifier_forward.1} parent=11 // pred_region
        _
      $region40: #{video_classifier_forward.1} parent=11 // pred_fallthru
        _
      // Predicated region
      $region41: #{video_classifier_forward.1} parent=11 // pred_check
        %p369 = pneg %p265
      $region42: #{video_classifier_forward.1} parent=11 // pred_check_branch
        %371 = sbr.rel (%p369) target = $region44
      $region43: #{video_classifier_forward.1} parent=11 // pred_region
        _
      $region44: #{video_classifier_forward.1} parent=11 // pred_fallthru
        _
      // Predicated region
      $region45: #{video_classifier_forward.1} parent=11 // pred_check
        %p372 = pneg %p286
      $region46: #{video_classifier_forward.1} parent=11 // pred_check_branch
        %374 = sbr.rel (%p372) target = $region48
      $region47: #{video_classifier_forward.1} parent=11 // pred_region
        _
      $region48: #{video_classifier_forward.1} parent=11 // pred_fallthru
        _
      // Predicated region
      $region49: #{video_classifier_forward.1} parent=11 // pred_check
        %p375 = pneg %p307
      $region50: #{video_classifier_forward.1} parent=11 // pred_check_branch
        %377 = sbr.rel (%p375) target = $region52
      $region51: #{video_classifier_forward.1} parent=11 // pred_region
        _
      $region52: #{video_classifier_forward.1} parent=11 // pred_fallthru
        _
    $region12: #{video_classifier_forward.1} parent=5 // pred_fallthru
      _
    %p378 = scmp.lt.s32.totalorder %s19, 2
    // Predicated region
    $region53: #{video_classifier_forward.1} parent=5 // pred_check
      %p379 = pneg %p378
    $region54: #{video_classifier_forward.1} parent=5 // pred_check_branch
      %381 = sbr.rel (%p379) target = $region56
    $region55: #{video_classifier_forward.1} parent=5 // pred_region
      // Predicated region
      $region57: #{video_classifier_forward.1} parent=55 // pred_check
        %p382 = pneg %p39
      $region58: #{video_classifier_forward.1} parent=55 // pred_check_branch
        %384 = sbr.rel (%p382) target = $region60
      $region59: #{video_classifier_forward.1} parent=55 // pred_region
        %p385 = scmp.lt.s32.totalorder %s19, 1
        %s386 = scalar_select %p385, %s19, 1
        %s387 = smul.addr %s386, 8
        %s388 = scalar_lea.vmem %s0, %s387
      $region60: #{video_classifier_forward.1} parent=55 // pred_fallthru
        _
      // Predicated region
      $region61: #{video_classifier_forward.1} parent=55 // pred_check
        %p389 = pneg %p65
      $region62: #{video_classifier_forward.1} parent=55 // pred_check_branch
        %391 = sbr.rel (%p389) target = $region64
      $region63: #{video_classifier_forward.1} parent=55 // pred_region
        %p392 = scmp.lt.s32.totalorder %s19, 1
        %s393 = scalar_select %p392, %s19, 1
        %s394 = scalar_lea.vmem %s1, %s393
      $region64: #{video_classifier_forward.1} parent=55 // pred_fallthru
        _
      // Predicated region
      $region65: #{video_classifier_forward.1} parent=55 // pred_check
        %p395 = pneg %p91
      $region66: #{video_classifier_forward.1} parent=55 // pred_check_branch
        %397 = sbr.rel (%p395) target = $region68
      $region67: #{video_classifier_forward.1} parent=55 // pred_region
        %p398 = scmp.lt.s32.totalorder %s19, 1
        %s399 = scalar_select %p398, %s19, 1
        %s400 = smul.addr %s399, 8
        %s401 = scalar_lea.vmem %s2, %s400
      $region68: #{video_classifier_forward.1} parent=55 // pred_fallthru
        _
    $region56: #{video_classifier_forward.1} parent=5 // pred_fallthru
      _
    %p402 = scmp.le.s32.totalorder 1, %s19
    %p403 = scmp.lt.s32.totalorder %s19, 3
    %p404 = pnand %p402, %p403
    %p405 = pneg %p404
    // Predicated region
    $region69: #{video_classifier_forward.1} parent=5 // pred_check
      _
    $region70: #{video_classifier_forward.1} parent=5 // pred_check_branch
      %407 = sbr.rel (%p404) target = $region72
    $region71: #{video_classifier_forward.1} parent=5 // pred_region
      %s408 = ssub.s32 %s19, 1
      %p409 = scmp.lt.s32.totalorder %s24, 1
      %s410 = scalar_select %p409, %s24, 1
      %s411 = smul.addr %s410, 8
      %s412 = scalar_lea.vmem %s0, %s411
      %p413 = pneg %p45
      %p414 = pneg %p42
      %p415 = scmp.lt.s32.totalorder %s24, 1
      %s416 = scalar_select %p415, %s24, 1
      %s417 = scalar_lea.vmem %s1, %s416
      %p418 = pneg %p71
      %p419 = pneg %p68
      %p420 = scmp.lt.s32.totalorder %s24, 1
      %s421 = scalar_select %p420, %s24, 1
      %s422 = smul.addr %s421, 8
      %s423 = scalar_lea.vmem %s2, %s422
      %p424 = pneg %p97
      %p425 = pneg %p94
      %p426 = pneg %p118
      %p427 = pneg %p115
      %p428 = pneg %p139
      %p429 = pneg %p136
      %p430 = pneg %p160
      %p431 = pneg %p157
      %p432 = pneg %p181
      %p433 = pneg %p178
      %p434 = pneg %p202
      %p435 = pneg %p199
      %p436 = pneg %p223
      %p437 = pneg %p220
      %p438 = pneg %p244
      %p439 = pneg %p241
      %p440 = pneg %p265
      %p441 = pneg %p262
      %p442 = pneg %p286
      %p443 = pneg %p283
      %p444 = pneg %p307
      %p445 = pneg %p304
      %p446 = pneg %p333
      %p447 = pneg %p330
      %p448 = scmp.lt.s32.totalorder %s24, 1
      %s449 = scalar_select %p448, %s24, 1
      %s450 = scalar_lea.vmem %s13, %s449
      %p451 = scmp.lt.s32.totalorder %s24, 1
      %s452 = scalar_select %p451, %s24, 1
      %s453 = smul.addr %s452, 8
      %s454 = scalar_lea.vmem %s0, %s453
      %p455 = scmp.lt.s32.totalorder %s24, 1
      %s456 = scalar_select %p455, %s24, 1
      %s457 = scalar_lea.vmem %s1, %s456
      %p458 = scmp.lt.s32.totalorder %s24, 1
      %s459 = scalar_select %p458, %s24, 1
      %s460 = smul.addr %s459, 8
      %s461 = scalar_lea.vmem %s2, %s460
      %p462 = scmp.lt.s32.totalorder %s24, 1
      %s463 = scalar_select %p462, %s24, 1
      %s464 = scalar_lea.vmem %s13, %s463
      %v465 = vld [vmem:[%s12] sm:$0xff]
      %v466 = vld [vmem:[%s12 + $0x8] sm:$0xff]
      %v467 = vld [vmem:[%s12 + $0x10] sm:$0xff]
      %v468 = vld [vmem:[%s454] sm:$0xff]
      %v469 = vld [vmem:[%s457] sm:$0x1]
      %v470 = vld [vmem:[%s3] sm:$0xff]
      %v471 = vld [vmem:[%s3 + $0x8] sm:$0xff]
      %v472 = vld [vmem:[%s3 + $0x10] sm:$0xff]
      %v473 = vld [vmem:[%s3 + $0x18] sm:$0xff]
      %v474 = vld [vmem:[%s3 + $0x20] sm:$0xff]
      %v475 = vld [vmem:[%s3 + $0x28] sm:$0xff]
      %v476 = vlaneseq
      %v477 = vshrl.u32 %v476, 7
      %v478 = vsub.s32 0, %v477
      %v479 = vrot.slane %v465, %v478
      %vm480 = vcmask 392192
      %v482 = vsel %vm480, %v468, 0
      %484 = vmatprep.subr.mxu0 0.0
      %485 = vmatpush1.msra.mxu0 %v470
      %486 = vmatprep.subr.mxu0 0.0
      %487 = vmatpush1.msra.mxu0 %v471
      %488 = vmatprep.subr.mxu0 0.0
      %489 = vmatpush1.msra.mxu0 %v472
      %490 = vmatprep.subr.mxu0 0.0
      %491 = vmatpush1.msra.mxu0 %v473
      %492 = vmatprep.subr.mxu0 0.0
      %493 = vmatpush1.msra.mxu0 %v474
      %494 = vmatprep.subr.mxu0 0.0
      %495 = vmatpush1.msra.mxu0 %v475
      %496 = vmatprep.subr.mxu0 0.0
      %497 = vmatpush1.msra.mxu0 0.0
      %498 = vmatprep.subr.mxu0 0.0
      %499 = vmatpush1.msra.mxu0 0.0
      %500 = vmatprep.subr.mxu0 0.0
      %501 = vmatpush1.msra.mxu0 0.0
      %502 = vmatprep.subr.mxu0 0.0
      %503 = vmatpush1.msra.mxu0 0.0
      %504 = vmatprep.subr.mxu0 0.0
      %505 = vmatpush1.msra.mxu0 0.0
      %506 = vmatprep.subr.mxu0 0.0
      %507 = vmatpush1.msra.mxu0 0.0
      %508 = vmatprep.subr.mxu0 0.0
      %509 = vmatpush1.msra.mxu0 0.0
      %510 = vmatprep.subr.mxu0 0.0
      %511 = vmatpush1.msra.mxu0 0.0
      %512 = vmatprep.subr.mxu0 0.0
      %513 = vmatpush1.msra.mxu0 0.0
      %514 = vmatprep.subr.mxu0 0.0
      %515 = vmatpush1.msra.mxu0 0.0
      %516 = vmatprep.subr.mxu0 0.0
      %517 = vmatpush1.msra.mxu0 0.0
      %518 = vmatprep.subr.mxu0 0.0
      %519 = vmatpush1.msra.mxu0 0.0
      %520 = vmatprep.subr.mxu0 0.0
      %521 = vmatpush1.msra.mxu0 0.0
      %522 = vmatprep.subr.mxu0 0.0
      %523 = vmatpush1.msra.mxu0 0.0
      %524 = vmatprep.subr.mxu0 0.0
      %525 = vmatpush1.msra.mxu0 0.0
      %526 = vmatprep.subr.mxu0 0.0
      %527 = vmatpush1.msra.mxu0 0.0
      %528 = vmatprep.subr.mxu0 0.0
      %529 = vmatpush1.msra.mxu0 0.0
      %530 = vmatprep.subr.mxu0 0.0
      %531 = vmatpush1.msra.mxu0 0.0
      %532 = vmatprep.subr.mxu0 0.0
      %533 = vmatpush1.msra.mxu0 0.0
      %534 = vmatprep.subr.mxu0 0.0
      %535 = vmatpush1.msra.mxu0 0.0
      %536 = vmatprep.subr.mxu0 0.0
      %537 = vmatpush1.msra.mxu0 0.0
      %538 = vmatprep.subr.mxu0 0.0
      %539 = vmatpush1.msra.mxu0 0.0
      %540 = vmatprep.subr.mxu0 0.0
      %541 = vmatpush1.msra.mxu0 0.0
      %542 = vmatprep.subr.mxu0 0.0
      %543 = vmatpush1.msra.mxu0 0.0
      %544 = vmatprep.subr.mxu0 0.0
      %545 = vmatpush1.msra.mxu0 0.0
      %546 = vmatprep.subr.mxu0 0.0
      %547 = vmatpush1.msra.mxu0 0.0
      %548 = vmatprep.mubr.f32.mxu0 0.0
      %549 = vmatmul.mubr.f32.gmra.mrb[0].mxu0 %v482
      %v550 = vpop.f32.mrb[0].mxu0
      %v551 = vadd.f32 %v479, %v550
      %v552 = vpop.f32.mrb[0].mxu0
      %553 = vdwg.mxu0
      %v554 = vld [vmem:[%s4] sm:$0xff]
      %v555 = vadd.f32 %v551, %v554
      %v556 = vld [vmem:[%s5] sm:$0xff]
      %v557 = vld [vmem:[%s5 + $0x8] sm:$0xff]
      %v558 = vld [vmem:[%s5 + $0x10] sm:$0xff]
      %v559 = vld [vmem:[%s5 + $0x18] sm:$0xff]
      %v560 = vld [vmem:[%s6] sm:$0x1]
      %v562 = vlaneseq
      %v563 = vshrl.u32 %v562, 7
      %v564 = vsub.s32 0, %v563
      %v565 = vrot.slane %v560, %v564
      %vm567 = vcmask 261120
      %v569 = vsel %vm567, %v555, 0
      %571 = vmatprep.subr.mxu0 0.0
      %572 = vmatpush1.msra.mxu0 %v556
      %573 = vmatprep.subr.mxu0 0.0
      %574 = vmatpush1.msra.mxu0 %v557
      %575 = vmatprep.subr.mxu0 0.0
      %576 = vmatpush1.msra.mxu0 %v558
      %577 = vmatprep.subr.mxu0 0.0
      %578 = vmatpush1.msra.mxu0 %v559
      %579 = vmatprep.subr.mxu0 0.0
      %580 = vmatpush1.msra.mxu0 0.0
      %581 = vmatprep.subr.mxu0 0.0
      %582 = vmatpush1.msra.mxu0 0.0
      %583 = vmatprep.subr.mxu0 0.0
      %584 = vmatpush1.msra.mxu0 0.0
      %585 = vmatprep.subr.mxu0 0.0
      %586 = vmatpush1.msra.mxu0 0.0
      %587 = vmatprep.subr.mxu0 0.0
      %588 = vmatpush1.msra.mxu0 0.0
      %589 = vmatprep.subr.mxu0 0.0
      %590 = vmatpush1.msra.mxu0 0.0
      %591 = vmatprep.subr.mxu0 0.0
      %592 = vmatpush1.msra.mxu0 0.0
      %593 = vmatprep.subr.mxu0 0.0
      %594 = vmatpush1.msra.mxu0 0.0
      %595 = vmatprep.subr.mxu0 0.0
      %596 = vmatpush1.msra.mxu0 0.0
      %597 = vmatprep.subr.mxu0 0.0
      %598 = vmatpush1.msra.mxu0 0.0
      %599 = vmatprep.subr.mxu0 0.0
      %600 = vmatpush1.msra.mxu0 0.0
      %601 = vmatprep.subr.mxu0 0.0
      %602 = vmatpush1.msra.mxu0 0.0
      %603 = vmatprep.subr.mxu0 0.0
      %604 = vmatpush1.msra.mxu0 0.0
      %605 = vmatprep.subr.mxu0 0.0
      %606 = vmatpush1.msra.mxu0 0.0
      %607 = vmatprep.subr.mxu0 0.0
      %608 = vmatpush1.msra.mxu0 0.0
      %609 = vmatprep.subr.mxu0 0.0
      %610 = vmatpush1.msra.mxu0 0.0
      %611 = vmatprep.subr.mxu0 0.0
      %612 = vmatpush1.msra.mxu0 0.0
      %613 = vmatprep.subr.mxu0 0.0
      %614 = vmatpush1.msra.mxu0 0.0
      %615 = vmatprep.subr.mxu0 0.0
      %616 = vmatpush1.msra.mxu0 0.0
      %617 = vmatprep.subr.mxu0 0.0
      %618 = vmatpush1.msra.mxu0 0.0
      %619 = vmatprep.subr.mxu0 0.0
      %620 = vmatpush1.msra.mxu0 0.0
      %621 = vmatprep.subr.mxu0 0.0
      %622 = vmatpush1.msra.mxu0 0.0
      %623 = vmatprep.subr.mxu0 0.0
      %624 = vmatpush1.msra.mxu0 0.0
      %625 = vmatprep.subr.mxu0 0.0
      %626 = vmatpush1.msra.mxu0 0.0
      %627 = vmatprep.subr.mxu0 0.0
      %628 = vmatpush1.msra.mxu0 0.0
      %629 = vmatprep.subr.mxu0 0.0
      %630 = vmatpush1.msra.mxu0 0.0
      %631 = vmatprep.subr.mxu0 0.0
      %632 = vmatpush1.msra.mxu0 0.0
      %633 = vmatprep.subr.mxu0 0.0
      %634 = vmatpush1.msra.mxu0 0.0
      %635 = vmatprep.mubr.f32.mxu0 0.0
      %636 = vmatmul.mubr.f32.gmra.mrb[0].mxu0 %v569
      %v637 = vpop.f32.mrb[0].mxu0
      %v638 = vadd.f32 %v565, %v637
      %v639 = vpop.f32.mrb[0].mxu0
      %640 = vdwg.mxu0
      %s641 = scalar_lea.vmem %s5, 128
      %v642 = vld [vmem:[%s641] sm:$0xff]
      %v643 = vld [vmem:[%s641 + $0x8] sm:$0xff]
      %v644 = vld [vmem:[%s641 + $0x10] sm:$0xff]
      %v645 = vld [vmem:[%s641 + $0x18] sm:$0xff]
      %s646 = scalar_lea.vmem %s6, 4
      %v647 = vld [vmem:[%s646] sm:$0x1]
      %v649 = vlaneseq
      %v650 = vshrl.u32 %v649, 7
      %v651 = vsub.s32 0, %v650
      %v652 = vrot.slane %v647, %v651
      %654 = vmatprep.subr.mxu0 0.0
      %655 = vmatpush1.msra.mxu0 %v642
      %656 = vmatprep.subr.mxu0 0.0
      %657 = vmatpush1.msra.mxu0 %v643
      %658 = vmatprep.subr.mxu0 0.0
      %659 = vmatpush1.msra.mxu0 %v644
      %660 = vmatprep.subr.mxu0 0.0
      %661 = vmatpush1.msra.mxu0 %v645
      %662 = vmatprep.subr.mxu0 0.0
      %663 = vmatpush1.msra.mxu0 0.0
      %664 = vmatprep.subr.mxu0 0.0
      %665 = vmatpush1.msra.mxu0 0.0
      %666 = vmatprep.subr.mxu0 0.0
      %667 = vmatpush1.msra.mxu0 0.0
      %668 = vmatprep.subr.mxu0 0.0
      %669 = vmatpush1.msra.mxu0 0.0
      %670 = vmatprep.subr.mxu0 0.0
      %671 = vmatpush1.msra.mxu0 0.0
      %672 = vmatprep.subr.mxu0 0.0
      %673 = vmatpush1.msra.mxu0 0.0
      %674 = vmatprep.subr.mxu0 0.0
      %675 = vmatpush1.msra.mxu0 0.0
      %676 = vmatprep.subr.mxu0 0.0
      %677 = vmatpush1.msra.mxu0 0.0
      %678 = vmatprep.subr.mxu0 0.0
      %679 = vmatpush1.msra.mxu0 0.0
      %680 = vmatprep.subr.mxu0 0.0
      %681 = vmatpush1.msra.mxu0 0.0
      %682 = vmatprep.subr.mxu0 0.0
      %683 = vmatpush1.msra.mxu0 0.0
      %684 = vmatprep.subr.mxu0 0.0
      %685 = vmatpush1.msra.mxu0 0.0
      %686 = vmatprep.subr.mxu0 0.0
      %687 = vmatpush1.msra.mxu0 0.0
      %688 = vmatprep.subr.mxu0 0.0
      %689 = vmatpush1.msra.mxu0 0.0
      %690 = vmatprep.subr.mxu0 0.0
      %691 = vmatpush1.msra.mxu0 0.0
      %692 = vmatprep.subr.mxu0 0.0
      %693 = vmatpush1.msra.mxu0 0.0
      %694 = vmatprep.subr.mxu0 0.0
      %695 = vmatpush1.msra.mxu0 0.0
      %696 = vmatprep.subr.mxu0 0.0
      %697 = vmatpush1.msra.mxu0 0.0
      %698 = vmatprep.subr.mxu0 0.0
      %699 = vmatpush1.msra.mxu0 0.0
      %700 = vmatprep.subr.mxu0 0.0
      %701 = vmatpush1.msra.mxu0 0.0
      %702 = vmatprep.subr.mxu0 0.0
      %703 = vmatpush1.msra.mxu0 0.0
      %704 = vmatprep.subr.mxu0 0.0
      %705 = vmatpush1.msra.mxu0 0.0
      %706 = vmatprep.subr.mxu0 0.0
      %707 = vmatpush1.msra.mxu0 0.0
      %708 = vmatprep.subr.mxu0 0.0
      %709 = vmatpush1.msra.mxu0 0.0
      %710 = vmatprep.subr.mxu0 0.0
      %711 = vmatpush1.msra.mxu0 0.0
      %712 = vmatprep.subr.mxu0 0.0
      %713 = vmatpush1.msra.mxu0 0.0
      %714 = vmatprep.subr.mxu0 0.0
      %715 = vmatpush1.msra.mxu0 0.0
      %716 = vmatprep.subr.mxu0 0.0
      %717 = vmatpush1.msra.mxu0 0.0
      %718 = vmatprep.mubr.f32.mxu0 0.0
      %719 = vmatmul.mubr.f32.gmra.mrb[0].mxu0 %v569
      %v720 = vpop.f32.mrb[0].mxu0
      %v721 = vadd.f32 %v652, %v720
      %v722 = vpop.f32.mrb[0].mxu0
      %723 = vdwg.mxu0
      %s724 = scalar_lea.vmem %s5, 256
      %v725 = vld [vmem:[%s724] sm:$0xff]
      %v726 = vld [vmem:[%s724 + $0x8] sm:$0xff]
      %v727 = vld [vmem:[%s724 + $0x10] sm:$0xff]
      %v728 = vld [vmem:[%s724 + $0x18] sm:$0xff]
      %s729 = scalar_lea.vmem %s6, 8
      %v730 = vld [vmem:[%s729] sm:$0x1]
      %v732 = vlaneseq
      %v733 = vshrl.u32 %v732, 7
      %v734 = vsub.s32 0, %v733
      %v735 = vrot.slane %v730, %v734
      %737 = vmatprep.subr.mxu0 0.0
      %738 = vmatpush1.msra.mxu0 %v725
      %739 = vmatprep.subr.mxu0 0.0
      %740 = vmatpush1.msra.mxu0 %v726
      %741 = vmatprep.subr.mxu0 0.0
      %742 = vmatpush1.msra.mxu0 %v727
      %743 = vmatprep.subr.mxu0 0.0
      %744 = vmatpush1.msra.mxu0 %v728
      %745 = vmatprep.subr.mxu0 0.0
      %746 = vmatpush1.msra.mxu0 0.0
      %747 = vmatprep.subr.mxu0 0.0
      %748 = vmatpush1.msra.mxu0 0.0
      %749 = vmatprep.subr.mxu0 0.0
      %750 = vmatpush1.msra.mxu0 0.0
      %751 = vmatprep.subr.mxu0 0.0
      %752 = vmatpush1.msra.mxu0 0.0
      %753 = vmatprep.subr.mxu0 0.0
      %754 = vmatpush1.msra.mxu0 0.0
      %755 = vmatprep.subr.mxu0 0.0
      %756 = vmatpush1.msra.mxu0 0.0
      %757 = vmatprep.subr.mxu0 0.0
      %758 = vmatpush1.msra.mxu0 0.0
      %759 = vmatprep.subr.mxu0 0.0
      %760 = vmatpush1.msra.mxu0 0.0
      %761 = vmatprep.subr.mxu0 0.0
      %762 = vmatpush1.msra.mxu0 0.0
      %763 = vmatprep.subr.mxu0 0.0
      %764 = vmatpush1.msra.mxu0 0.0
      %765 = vmatprep.subr.mxu0 0.0
      %766 = vmatpush1.msra.mxu0 0.0
      %767 = vmatprep.subr.mxu0 0.0
      %768 = vmatpush1.msra.mxu0 0.0
      %769 = vmatprep.subr.mxu0 0.0
      %770 = vmatpush1.msra.mxu0 0.0
      %771 = vmatprep.subr.mxu0 0.0
      %772 = vmatpush1.msra.mxu0 0.0
      %773 = vmatprep.subr.mxu0 0.0
      %774 = vmatpush1.msra.mxu0 0.0
      %775 = vmatprep.subr.mxu0 0.0
      %776 = vmatpush1.msra.mxu0 0.0
      %777 = vmatprep.subr.mxu0 0.0
      %778 = vmatpush1.msra.mxu0 0.0
      %779 = vmatprep.subr.mxu0 0.0
      %780 = vmatpush1.msra.mxu0 0.0
      %781 = vmatprep.subr.mxu0 0.0
      %782 = vmatpush1.msra.mxu0 0.0
      %783 = vmatprep.subr.mxu0 0.0
      %784 = vmatpush1.msra.mxu0 0.0
      %785 = vmatprep.subr.mxu0 0.0
      %786 = vmatpush1.msra.mxu0 0.0
      %787 = vmatprep.subr.mxu0 0.0
      %788 = vmatpush1.msra.mxu0 0.0
      %789 = vmatprep.subr.mxu0 0.0
      %790 = vmatpush1.msra.mxu0 0.0
      %791 = vmatprep.subr.mxu0 0.0
      %792 = vmatpush1.msra.mxu0 0.0
      %793 = vmatprep.subr.mxu0 0.0
      %794 = vmatpush1.msra.mxu0 0.0
      %795 = vmatprep.subr.mxu0 0.0
      %796 = vmatpush1.msra.mxu0 0.0
      %797 = vmatprep.subr.mxu0 0.0
      %798 = vmatpush1.msra.mxu0 0.0
      %799 = vmatprep.subr.mxu0 0.0
      %800 = vmatpush1.msra.mxu0 0.0
      %801 = vmatprep.mubr.f32.mxu0 0.0
      %802 = vmatmul.mubr.f32.gmra.mrb[0].mxu0 %v569
      %v803 = vpop.f32.mrb[0].mxu0
      %v804 = vadd.f32 %v735, %v803
      %v805 = vpop.f32.mrb[0].mxu0
      %806 = vdwg.mxu0
      %vm807 = vcmask 64512
      %v809 = vsel %vm807, %v638, 0
      %v812 = vsel %vm807, %v721, 0
      %814 = vmatprep.subr.mxu0 0.0
      %815 = vmatpush1.xpose.msra.mxu0 %v812
      %816 = vmatprep.subr.mxu0 0.0
      %817 = vmatpush1.xpose.msra.mxu0 0.0
      %818 = vmatprep.subr.mxu0 0.0
      %819 = vmatpush1.xpose.msra.mxu0 0.0
      %820 = vmatprep.subr.mxu0 0.0
      %821 = vmatpush1.xpose.msra.mxu0 0.0
      %822 = vmatprep.subr.mxu0 0.0
      %823 = vmatpush1.xpose.msra.mxu0 0.0
      %824 = vmatprep.subr.mxu0 0.0
      %825 = vmatpush1.xpose.msra.mxu0 0.0
      %826 = vmatprep.subr.mxu0 0.0
      %827 = vmatpush1.xpose.msra.mxu0 0.0
      %828 = vmatprep.subr.mxu0 0.0
      %829 = vmatpush1.xpose.msra.mxu0 0.0
      %830 = vmatprep.subr.mxu0 0.0
      %831 = vmatpush1.xpose.msra.mxu0 0.0
      %832 = vmatprep.subr.mxu0 0.0
      %833 = vmatpush1.xpose.msra.mxu0 0.0
      %834 = vmatprep.subr.mxu0 0.0
      %835 = vmatpush1.xpose.msra.mxu0 0.0
      %836 = vmatprep.subr.mxu0 0.0
      %837 = vmatpush1.xpose.msra.mxu0 0.0
      %838 = vmatprep.subr.mxu0 0.0
      %839 = vmatpush1.xpose.msra.mxu0 0.0
      %840 = vmatprep.subr.mxu0 0.0
      %841 = vmatpush1.xpose.msra.mxu0 0.0
      %842 = vmatprep.subr.mxu0 0.0
      %843 = vmatpush1.xpose.msra.mxu0 0.0
      %844 = vmatprep.subr.mxu0 0.0
      %845 = vmatpush1.xpose.msra.mxu0 0.0
      %846 = vmatprep.subr.mxu0 0.0
      %847 = vmatpush1.xpose.msra.mxu0 0.0
      %848 = vmatprep.subr.mxu0 0.0
      %849 = vmatpush1.xpose.msra.mxu0 0.0
      %850 = vmatprep.subr.mxu0 0.0
      %851 = vmatpush1.xpose.msra.mxu0 0.0
      %852 = vmatprep.subr.mxu0 0.0
      %853 = vmatpush1.xpose.msra.mxu0 0.0
      %854 = vmatprep.subr.mxu0 0.0
      %855 = vmatpush1.xpose.msra.mxu0 0.0
      %856 = vmatprep.subr.mxu0 0.0
      %857 = vmatpush1.xpose.msra.mxu0 0.0
      %858 = vmatprep.subr.mxu0 0.0
      %859 = vmatpush1.xpose.msra.mxu0 0.0
      %860 = vmatprep.subr.mxu0 0.0
      %861 = vmatpush1.xpose.msra.mxu0 0.0
      %862 = vmatprep.subr.mxu0 0.0
      %863 = vmatpush1.xpose.msra.mxu0 0.0
      %864 = vmatprep.subr.mxu0 0.0
      %865 = vmatpush1.xpose.msra.mxu0 0.0
      %866 = vmatprep.subr.mxu0 0.0
      %867 = vmatpush1.xpose.msra.mxu0 0.0
      %868 = vmatprep.subr.mxu0 0.0
      %869 = vmatpush1.xpose.msra.mxu0 0.0
      %870 = vmatprep.subr.mxu0 0.0
      %871 = vmatpush1.xpose.msra.mxu0 0.0
      %872 = vmatprep.subr.mxu0 0.0
      %873 = vmatpush1.xpose.msra.mxu0 0.0
      %874 = vmatprep.subr.mxu0 0.0
      %875 = vmatpush1.xpose.msra.mxu0 0.0
      %876 = vmatprep.subr.mxu0 0.0
      %877 = vmatpush1.xpose.msra.mxu0 0.0
      %878 = vmatprep.mubr.f32.mxu0 0.0
      %879 = vmatmul.mubr.f32.gmra.mrb[0].mxu0 %v809
      %v880 = vpop.f32.mrb[0].mxu0
      %v881 = vadd.f32 0.0, %v880
      %v882 = vpop.f32.mrb[0].mxu0
      %883 = vdwg.mxu0
      %v884 = vmul.f32 %v881, 0.35355338
      %v886 = vlaneseq
      %v887 = vshrl.u32 %v886, 7
      %v888 = vsub.s32 0, %v887
      %v889 = vrot.slane %v469, %v888
      %v891 = vadd.f32 %v884, %v889
      %v892 = vsel %vm807, %v891, -inf
      %893 = vmax.xlane.f32.xlu0 %v892
      %v894 = vpop.xlane.xlu0 %893
      %v895 = vsub.f32 %v891, %v894
      %v896 = vmul.f32 %v895, 1.442695
      %v897 = vpow.pop %v896
      %v898 = vsel %vm807, %v897, 0.0
      %899 = vadd.xlane.f32.xlu0 %v898
      %v900 = vpop.xlane.xlu0 %899
      %v901 = vrcp.pop %v900
      %v902 = vmul.f32 %v897, %v901
      %v904 = vsel %vm807, %v902, 0
      %906 = vmatprep.subr.mxu0 0.0
      %907 = vmatpush1.msra.mxu0 %v804
      %908 = vmatprep.subr.mxu0 0.0
      %909 = vmatpush1.msra.mxu0 0.0
      %910 = vmatprep.subr.mxu0 0.0
      %911 = vmatpush1.msra.mxu0 0.0
      %912 = vmatprep.subr.mxu0 0.0
      %913 = vmatpush1.msra.mxu0 0.0
      %914 = vmatprep.subr.mxu0 0.0
      %915 = vmatpush1.msra.mxu0 0.0
      %916 = vmatprep.subr.mxu0 0.0
      %917 = vmatpush1.msra.mxu0 0.0
      %918 = vmatprep.subr.mxu0 0.0
      %919 = vmatpush1.msra.mxu0 0.0
      %920 = vmatprep.subr.mxu0 0.0
      %921 = vmatpush1.msra.mxu0 0.0
      %922 = vmatprep.subr.mxu0 0.0
      %923 = vmatpush1.msra.mxu0 0.0
      %924 = vmatprep.subr.mxu0 0.0
      %925 = vmatpush1.msra.mxu0 0.0
      %926 = vmatprep.subr.mxu0 0.0
      %927 = vmatpush1.msra.mxu0 0.0
      %928 = vmatprep.subr.mxu0 0.0
      %929 = vmatpush1.msra.mxu0 0.0
      %930 = vmatprep.subr.mxu0 0.0
      %931 = vmatpush1.msra.mxu0 0.0
      %932 = vmatprep.subr.mxu0 0.0
      %933 = vmatpush1.msra.mxu0 0.0
      %934 = vmatprep.subr.mxu0 0.0
      %935 = vmatpush1.msra.mxu0 0.0
      %936 = vmatprep.subr.mxu0 0.0
      %937 = vmatpush1.msra.mxu0 0.0
      %938 = vmatprep.subr.mxu0 0.0
      %939 = vmatpush1.msra.mxu0 0.0
      %940 = vmatprep.subr.mxu0 0.0
      %941 = vmatpush1.msra.mxu0 0.0
      %942 = vmatprep.subr.mxu0 0.0
      %943 = vmatpush1.msra.mxu0 0.0
      %944 = vmatprep.subr.mxu0 0.0
      %945 = vmatpush1.msra.mxu0 0.0
      %946 = vmatprep.subr.mxu0 0.0
      %947 = vmatpush1.msra.mxu0 0.0
      %948 = vmatprep.subr.mxu0 0.0
      %949 = vmatpush1.msra.mxu0 0.0
      %950 = vmatprep.subr.mxu0 0.0
      %951 = vmatpush1.msra.mxu0 0.0
      %952 = vmatprep.subr.mxu0 0.0
      %953 = vmatpush1.msra.mxu0 0.0
      %954 = vmatprep.subr.mxu0 0.0
      %955 = vmatpush1.msra.mxu0 0.0
      %956 = vmatprep.subr.mxu0 0.0
      %957 = vmatpush1.msra.mxu0 0.0
      %958 = vmatprep.subr.mxu0 0.0
      %959 = vmatpush1.msra.mxu0 0.0
      %960 = vmatprep.subr.mxu0 0.0
      %961 = vmatpush1.msra.mxu0 0.0
      %962 = vmatprep.subr.mxu0 0.0
      %963 = vmatpush1.msra.mxu0 0.0
      %964 = vmatprep.subr.mxu0 0.0
      %965 = vmatpush1.msra.mxu0 0.0
      %966 = vmatprep.subr.mxu0 0.0
      %967 = vmatpush1.msra.mxu0 0.0
      %968 = vmatprep.subr.mxu0 0.0
      %969 = vmatpush1.msra.mxu0 0.0
      %970 = vmatprep.mubr.f32.mxu0 0.0
      %971 = vmatmul.mubr.f32.gmra.mrb[0].mxu0 %v904
      %v972 = vpop.f32.mrb[0].mxu0
      %v973 = vadd.f32 0.0, %v972
      %v974 = vpop.f32.mrb[0].mxu0
      %975 = vdwg.mxu0
      %s976 = scalar_lea.vmem %s5, 32
      %v977 = vld [vmem:[%s976] sm:$0xff]
      %v978 = vld [vmem:[%s976 + $0x8] sm:$0xff]
      %v979 = vld [vmem:[%s976 + $0x10] sm:$0xff]
      %v980 = vld [vmem:[%s976 + $0x18] sm:$0xff]
      %s981 = scalar_lea.vmem %s6, 1
      %v982 = vld [vmem:[%s981] sm:$0x1]
      %v984 = vlaneseq
      %v985 = vshrl.u32 %v984, 7
      %v986 = vsub.s32 0, %v985
      %v987 = vrot.slane %v982, %v986
      %989 = vmatprep.subr.mxu0 0.0
      %990 = vmatpush1.msra.mxu0 %v977
      %991 = vmatprep.subr.mxu0 0.0
      %992 = vmatpush1.msra.mxu0 %v978
      %993 = vmatprep.subr.mxu0 0.0
      %994 = vmatpush1.msra.mxu0 %v979
      %995 = vmatprep.subr.mxu0 0.0
      %996 = vmatpush1.msra.mxu0 %v980
      %997 = vmatprep.subr.mxu0 0.0
      %998 = vmatpush1.msra.mxu0 0.0
      %999 = vmatprep.subr.mxu0 0.0
      %1000 = vmatpush1.msra.mxu0 0.0
      %1001 = vmatprep.subr.mxu0 0.0
      %1002 = vmatpush1.msra.mxu0 0.0
      %1003 = vmatprep.subr.mxu0 0.0
      %1004 = vmatpush1.msra.mxu0 0.0
      %1005 = vmatprep.subr.mxu0 0.0
      %1006 = vmatpush1.msra.mxu0 0.0
      %1007 = vmatprep.subr.mxu0 0.0
      %1008 = vmatpush1.msra.mxu0 0.0
      %1009 = vmatprep.subr.mxu0 0.0
      %1010 = vmatpush1.msra.mxu0 0.0
      %1011 = vmatprep.subr.mxu0 0.0
      %1012 = vmatpush1.msra.mxu0 0.0
      %1013 = vmatprep.subr.mxu0 0.0
      %1014 = vmatpush1.msra.mxu0 0.0
      %1015 = vmatprep.subr.mxu0 0.0
      %1016 = vmatpush1.msra.mxu0 0.0
      %1017 = vmatprep.subr.mxu0 0.0
      %1018 = vmatpush1.msra.mxu0 0.0
      %1019 = vmatprep.subr.mxu0 0.0
      %1020 = vmatpush1.msra.mxu0 0.0
      %1021 = vmatprep.subr.mxu0 0.0
      %1022 = vmatpush1.msra.mxu0 0.0
      %1023 = vmatprep.subr.mxu0 0.0
      %1024 = vmatpush1.msra.mxu0 0.0
      %1025 = vmatprep.subr.mxu0 0.0
      %1026 = vmatpush1.msra.mxu0 0.0
      %1027 = vmatprep.subr.mxu0 0.0
      %1028 = vmatpush1.msra.mxu0 0.0
      %1029 = vmatprep.subr.mxu0 0.0
      %1030 = vmatpush1.msra.mxu0 0.0
      %1031 = vmatprep.subr.mxu0 0.0
      %1032 = vmatpush1.msra.mxu0 0.0
      %1033 = vmatprep.subr.mxu0 0.0
      %1034 = vmatpush1.msra.mxu0 0.0
      %1035 = vmatprep.subr.mxu0 0.0
      %1036 = vmatpush1.msra.mxu0 0.0
      %1037 = vmatprep.subr.mxu0 0.0
      %1038 = vmatpush1.msra.mxu0 0.0
      %1039 = vmatprep.subr.mxu0 0.0
      %1040 = vmatpush1.msra.mxu0 0.0
      %1041 = vmatprep.subr.mxu0 0.0
      %1042 = vmatpush1.msra.mxu0 0.0
      %1043 = vmatprep.subr.mxu0 0.0
      %1044 = vmatpush1.msra.mxu0 0.0
      %1045 = vmatprep.subr.mxu0 0.0
      %1046 = vmatpush1.msra.mxu0 0.0
      %1047 = vmatprep.subr.mxu0 0.0
      %1048 = vmatpush1.msra.mxu0 0.0
      %1049 = vmatprep.subr.mxu0 0.0
      %1050 = vmatpush1.msra.mxu0 0.0
      %1051 = vmatprep.subr.mxu0 0.0
      %1052 = vmatpush1.msra.mxu0 0.0
      %1053 = vmatprep.mubr.f32.mxu0 0.0
      %1054 = vmatmul.mubr.f32.gmra.mrb[0].mxu0 %v569
      %v1055 = vpop.f32.mrb[0].mxu0
      %v1056 = vadd.f32 %v987, %v1055
      %v1057 = vpop.f32.mrb[0].mxu0
      %1058 = vdwg.mxu0
      %s1059 = scalar_lea.vmem %s5, 160
      %v1060 = vld [vmem:[%s1059] sm:$0xff]
      %v1061 = vld [vmem:[%s1059 + $0x8] sm:$0xff]
      %v1062 = vld [vmem:[%s1059 + $0x10] sm:$0xff]
      %v1063 = vld [vmem:[%s1059 + $0x18] sm:$0xff]
      %s1064 = scalar_lea.vmem %s6, 5
      %v1065 = vld [vmem:[%s1064] sm:$0x1]
      %v1067 = vlaneseq
      %v1068 = vshrl.u32 %v1067, 7
      %v1069 = vsub.s32 0, %v1068
      %v1070 = vrot.slane %v1065, %v1069
      %1072 = vmatprep.subr.mxu0 0.0
      %1073 = vmatpush1.msra.mxu0 %v1060
      %1074 = vmatprep.subr.mxu0 0.0
      %1075 = vmatpush1.msra.mxu0 %v1061
      %1076 = vmatprep.subr.mxu0 0.0
      %1077 = vmatpush1.msra.mxu0 %v1062
      %1078 = vmatprep.subr.mxu0 0.0
      %1079 = vmatpush1.msra.mxu0 %v1063
      %1080 = vmatprep.subr.mxu0 0.0
      %1081 = vmatpush1.msra.mxu0 0.0
      %1082 = vmatprep.subr.mxu0 0.0
      %1083 = vmatpush1.msra.mxu0 0.0
      %1084 = vmatprep.subr.mxu0 0.0
      %1085 = vmatpush1.msra.mxu0 0.0
      %1086 = vmatprep.subr.mxu0 0.0
      %1087 = vmatpush1.msra.mxu0 0.0
      %1088 = vmatprep.subr.mxu0 0.0
      %1089 = vmatpush1.msra.mxu0 0.0
      %1090 = vmatprep.subr.mxu0 0.0
      %1091 = vmatpush1.msra.mxu0 0.0
      %1092 = vmatprep.subr.mxu0 0.0
      %1093 = vmatpush1.msra.mxu0 0.0
      %1094 = vmatprep.subr.mxu0 0.0
      %1095 = vmatpush1.msra.mxu0 0.0
      %1096 = vmatprep.subr.mxu0 0.0
      %1097 = vmatpush1.msra.mxu0 0.0
      %1098 = vmatprep.subr.mxu0 0.0
      %1099 = vmatpush1.msra.mxu0 0.0
      %1100 = vmatprep.subr.mxu0 0.0
      %1101 = vmatpush1.msra.mxu0 0.0
      %1102 = vmatprep.subr.mxu0 0.0
      %1103 = vmatpush1.msra.mxu0 0.0
      %1104 = vmatprep.subr.mxu0 0.0
      %1105 = vmatpush1.msra.mxu0 0.0
      %1106 = vmatprep.subr.mxu0 0.0
      %1107 = vmatpush1.msra.mxu0 0.0
      %1108 = vmatprep.subr.mxu0 0.0
      %1109 = vmatpush1.msra.mxu0 0.0
      %1110 = vmatprep.subr.mxu0 0.0
      %1111 = vmatpush1.msra.mxu0 0.0
      %1112 = vmatprep.subr.mxu0 0.0
      %1113 = vmatpush1.msra.mxu0 0.0
      %1114 = vmatprep.subr.mxu0 0.0
      %1115 = vmatpush1.msra.mxu0 0.0
      %1116 = vmatprep.subr.mxu0 0.0
      %1117 = vmatpush1.msra.mxu0 0.0
      %1118 = vmatprep.subr.mxu0 0.0
      %1119 = vmatpush1.msra.mxu0 0.0
      %1120 = vmatprep.subr.mxu0 0.0
      %1121 = vmatpush1.msra.mxu0 0.0
      %1122 = vmatprep.subr.mxu0 0.0
      %1123 = vmatpush1.msra.mxu0 0.0
      %1124 = vmatprep.subr.mxu0 0.0
      %1125 = vmatpush1.msra.mxu0 0.0
      %1126 = vmatprep.subr.mxu0 0.0
      %1127 = vmatpush1.msra.mxu0 0.0
      %1128 = vmatprep.subr.mxu0 0.0
      %1129 = vmatpush1.msra.mxu0 0.0
      %1130 = vmatprep.subr.mxu0 0.0
      %1131 = vmatpush1.msra.mxu0 0.0
      %1132 = vmatprep.subr.mxu0 0.0
      %1133 = vmatpush1.msra.mxu0 0.0
      %1134 = vmatprep.subr.mxu0 0.0
      %1135 = vmatpush1.msra.mxu0 0.0
      %1136 = vmatprep.mubr.f32.mxu0 0.0
      %1137 = vmatmul.mubr.f32.gmra.mrb[0].mxu0 %v569
      %v1138 = vpop.f32.mrb[0].mxu0
      %v1139 = vadd.f32 %v1070, %v1138
      %v1140 = vpop.f32.mrb[0].mxu0
      %1141 = vdwg.mxu0
      %s1142 = scalar_lea.vmem %s5, 288
      %v1143 = vld [vmem:[%s1142] sm:$0xff]
      %v1144 = vld [vmem:[%s1142 + $0x8] sm:$0xff]
      %v1145 = vld [vmem:[%s1142 + $0x10] sm:$0xff]
      %v1146 = vld [vmem:[%s1142 + $0x18] sm:$0xff]
      %s1147 = scalar_lea.vmem %s6, 9
      %v1148 = vld [vmem:[%s1147] sm:$0x1]
      %v1150 = vlaneseq
      %v1151 = vshrl.u32 %v1150, 7
      %v1152 = vsub.s32 0, %v1151
      %v1153 = vrot.slane %v1148, %v1152
      %1155 = vmatprep.subr.mxu0 0.0
      %1156 = vmatpush1.msra.mxu0 %v1143
      %1157 = vmatprep.subr.mxu0 0.0
      %1158 = vmatpush1.msra.mxu0 %v1144
      %1159 = vmatprep.subr.mxu0 0.0
      %1160 = vmatpush1.msra.mxu0 %v1145
      %1161 = vmatprep.subr.mxu0 0.0
      %1162 = vmatpush1.msra.mxu0 %v1146
      %1163 = vmatprep.subr.mxu0 0.0
      %1164 = vmatpush1.msra.mxu0 0.0
      %1165 = vmatprep.subr.mxu0 0.0
      %1166 = vmatpush1.msra.mxu0 0.0
      %1167 = vmatprep.subr.mxu0 0.0
      %1168 = vmatpush1.msra.mxu0 0.0
      %1169 = vmatprep.subr.mxu0 0.0
      %1170 = vmatpush1.msra.mxu0 0.0
      %1171 = vmatprep.subr.mxu0 0.0
      %1172 = vmatpush1.msra.mxu0 0.0
      %1173 = vmatprep.subr.mxu0 0.0
      %1174 = vmatpush1.msra.mxu0 0.0
      %1175 = vmatprep.subr.mxu0 0.0
      %1176 = vmatpush1.msra.mxu0 0.0
      %1177 = vmatprep.subr.mxu0 0.0
      %1178 = vmatpush1.msra.mxu0 0.0
      %1179 = vmatprep.subr.mxu0 0.0
      %1180 = vmatpush1.msra.mxu0 0.0
      %1181 = vmatprep.subr.mxu0 0.0
      %1182 = vmatpush1.msra.mxu0 0.0
      %1183 = vmatprep.subr.mxu0 0.0
      %1184 = vmatpush1.msra.mxu0 0.0
      %1185 = vmatprep.subr.mxu0 0.0
      %1186 = vmatpush1.msra.mxu0 0.0
      %1187 = vmatprep.subr.mxu0 0.0
      %1188 = vmatpush1.msra.mxu0 0.0
      %1189 = vmatprep.subr.mxu0 0.0
      %1190 = vmatpush1.msra.mxu0 0.0
      %1191 = vmatprep.subr.mxu0 0.0
      %1192 = vmatpush1.msra.mxu0 0.0
      %1193 = vmatprep.subr.mxu0 0.0
      %1194 = vmatpush1.msra.mxu0 0.0
      %1195 = vmatprep.subr.mxu0 0.0
      %1196 = vmatpush1.msra.mxu0 0.0
      %1197 = vmatprep.subr.mxu0 0.0
      %1198 = vmatpush1.msra.mxu0 0.0
      %1199 = vmatprep.subr.mxu0 0.0
      %1200 = vmatpush1.msra.mxu0 0.0
      %1201 = vmatprep.subr.mxu0 0.0
      %1202 = vmatpush1.msra.mxu0 0.0
      %1203 = vmatprep.subr.mxu0 0.0
      %1204 = vmatpush1.msra.mxu0 0.0
      %1205 = vmatprep.subr.mxu0 0.0
      %1206 = vmatpush1.msra.mxu0 0.0
      %1207 = vmatprep.subr.mxu0 0.0
      %1208 = vmatpush1.msra.mxu0 0.0
      %1209 = vmatprep.subr.mxu0 0.0
      %1210 = vmatpush1.msra.mxu0 0.0
      %1211 = vmatprep.subr.mxu0 0.0
      %1212 = vmatpush1.msra.mxu0 0.0
      %1213 = vmatprep.subr.mxu0 0.0
      %1214 = vmatpush1.msra.mxu0 0.0
      %1215 = vmatprep.subr.mxu0 0.0
      %1216 = vmatpush1.msra.mxu0 0.0
      %1217 = vmatprep.subr.mxu0 0.0
      %1218 = vmatpush1.msra.mxu0 0.0
      %1219 = vmatprep.mubr.f32.mxu0 0.0
      %1220 = vmatmul.mubr.f32.gmra.mrb[0].mxu0 %v569
      %v1221 = vpop.f32.mrb[0].mxu0
      %v1222 = vadd.f32 %v1153, %v1221
      %v1223 = vpop.f32.mrb[0].mxu0
      %1224 = vdwg.mxu0
      %v1226 = vsel %vm807, %v1056, 0
      %v1229 = vsel %vm807, %v1139, 0
      %1231 = vmatprep.subr.mxu0 0.0
      %1232 = vmatpush1.xpose.msra.mxu0 %v1229
      %1233 = vmatprep.subr.mxu0 0.0
      %1234 = vmatpush1.xpose.msra.mxu0 0.0
      %1235 = vmatprep.subr.mxu0 0.0
      %1236 = vmatpush1.xpose.msra.mxu0 0.0
      %1237 = vmatprep.subr.mxu0 0.0
      %1238 = vmatpush1.xpose.msra.mxu0 0.0
      %1239 = vmatprep.subr.mxu0 0.0
      %1240 = vmatpush1.xpose.msra.mxu0 0.0
      %1241 = vmatprep.subr.mxu0 0.0
      %1242 = vmatpush1.xpose.msra.mxu0 0.0
      %1243 = vmatprep.subr.mxu0 0.0
      %1244 = vmatpush1.xpose.msra.mxu0 0.0
      %1245 = vmatprep.subr.mxu0 0.0
      %1246 = vmatpush1.xpose.msra.mxu0 0.0
      %1247 = vmatprep.subr.mxu0 0.0
      %1248 = vmatpush1.xpose.msra.mxu0 0.0
      %1249 = vmatprep.subr.mxu0 0.0
      %1250 = vmatpush1.xpose.msra.mxu0 0.0
      %1251 = vmatprep.subr.mxu0 0.0
      %1252 = vmatpush1.xpose.msra.mxu0 0.0
      %1253 = vmatprep.subr.mxu0 0.0
      %1254 = vmatpush1.xpose.msra.mxu0 0.0
      %1255 = vmatprep.subr.mxu0 0.0
      %1256 = vmatpush1.xpose.msra.mxu0 0.0
      %1257 = vmatprep.subr.mxu0 0.0
      %1258 = vmatpush1.xpose.msra.mxu0 0.0
      %1259 = vmatprep.subr.mxu0 0.0
      %1260 = vmatpush1.xpose.msra.mxu0 0.0
      %1261 = vmatprep.subr.mxu0 0.0
      %1262 = vmatpush1.xpose.msra.mxu0 0.0
      %1263 = vmatprep.subr.mxu0 0.0
      %1264 = vmatpush1.xpose.msra.mxu0 0.0
      %1265 = vmatprep.subr.mxu0 0.0
      %1266 = vmatpush1.xpose.msra.mxu0 0.0
      %1267 = vmatprep.subr.mxu0 0.0
      %1268 = vmatpush1.xpose.msra.mxu0 0.0
      %1269 = vmatprep.subr.mxu0 0.0
      %1270 = vmatpush1.xpose.msra.mxu0 0.0
      %1271 = vmatprep.subr.mxu0 0.0
      %1272 = vmatpush1.xpose.msra.mxu0 0.0
      %1273 = vmatprep.subr.mxu0 0.0
      %1274 = vmatpush1.xpose.msra.mxu0 0.0
      %1275 = vmatprep.subr.mxu0 0.0
      %1276 = vmatpush1.xpose.msra.mxu0 0.0
      %1277 = vmatprep.subr.mxu0 0.0
      %1278 = vmatpush1.xpose.msra.mxu0 0.0
      %1279 = vmatprep.subr.mxu0 0.0
      %1280 = vmatpush1.xpose.msra.mxu0 0.0
      %1281 = vmatprep.subr.mxu0 0.0
      %1282 = vmatpush1.xpose.msra.mxu0 0.0
      %1283 = vmatprep.subr.mxu0 0.0
      %1284 = vmatpush1.xpose.msra.mxu0 0.0
      %1285 = vmatprep.subr.mxu0 0.0
      %1286 = vmatpush1.xpose.msra.mxu0 0.0
      %1287 = vmatprep.subr.mxu0 0.0
      %1288 = vmatpush1.xpose.msra.mxu0 0.0
      %1289 = vmatprep.subr.mxu0 0.0
      %1290 = vmatpush1.xpose.msra.mxu0 0.0
      %1291 = vmatprep.subr.mxu0 0.0
      %1292 = vmatpush1.xpose.msra.mxu0 0.0
      %1293 = vmatprep.subr.mxu0 0.0
      %1294 = vmatpush1.xpose.msra.mxu0 0.0
      %1295 = vmatprep.mubr.f32.mxu0 0.0
      %1296 = vmatmul.mubr.f32.gmra.mrb[0].mxu0 %v1226
      %v1297 = vpop.f32.mrb[0].mxu0
      %v1298 = vadd.f32 0.0, %v1297
      %v1299 = vpop.f32.mrb[0].mxu0
      %1300 = vdwg.mxu0
      %v1301 = vmul.f32 %v1298, 0.35355338
      %v1302 = vadd.f32 %v1301, %v889
      %v1303 = vsel %vm807, %v1302, -inf
      %1304 = vmax.xlane.f32.xlu0 %v1303
      %v1305 = vpop.xlane.xlu0 %1304
      %v1306 = vsub.f32 %v1302, %v1305
      %v1307 = vmul.f32 %v1306, 1.442695
      %v1308 = vpow.pop %v1307
      %v1309 = vsel %vm807, %v1308, 0.0
      %1310 = vadd.xlane.f32.xlu0 %v1309
      %v1311 = vpop.xlane.xlu0 %1310
      %v1312 = vrcp.pop %v1311
      %v1313 = vmul.f32 %v1308, %v1312
      %v1315 = vsel %vm807, %v1313, 0
      %1317 = vmatprep.subr.mxu0 0.0
      %1318 = vmatpush1.msra.mxu0 %v1222
      %1319 = vmatprep.subr.mxu0 0.0
      %1320 = vmatpush1.msra.mxu0 0.0
      %1321 = vmatprep.subr.mxu0 0.0
      %1322 = vmatpush1.msra.mxu0 0.0
      %1323 = vmatprep.subr.mxu0 0.0
      %1324 = vmatpush1.msra.mxu0 0.0
      %1325 = vmatprep.subr.mxu0 0.0
      %1326 = vmatpush1.msra.mxu0 0.0
      %1327 = vmatprep.subr.mxu0 0.0
      %1328 = vmatpush1.msra.mxu0 0.0
      %1329 = vmatprep.subr.mxu0 0.0
      %1330 = vmatpush1.msra.mxu0 0.0
      %1331 = vmatprep.subr.mxu0 0.0
      %1332 = vmatpush1.msra.mxu0 0.0
      %1333 = vmatprep.subr.mxu0 0.0
      %1334 = vmatpush1.msra.mxu0 0.0
      %1335 = vmatprep.subr.mxu0 0.0
      %1336 = vmatpush1.msra.mxu0 0.0
      %1337 = vmatprep.subr.mxu0 0.0
      %1338 = vmatpush1.msra.mxu0 0.0
      %1339 = vmatprep.subr.mxu0 0.0
      %1340 = vmatpush1.msra.mxu0 0.0
      %1341 = vmatprep.subr.mxu0 0.0
      %1342 = vmatpush1.msra.mxu0 0.0
      %1343 = vmatprep.subr.mxu0 0.0
      %1344 = vmatpush1.msra.mxu0 0.0
      %1345 = vmatprep.subr.mxu0 0.0
      %1346 = vmatpush1.msra.mxu0 0.0
      %1347 = vmatprep.subr.mxu0 0.0
      %1348 = vmatpush1.msra.mxu0 0.0
      %1349 = vmatprep.subr.mxu0 0.0
      %1350 = vmatpush1.msra.mxu0 0.0
      %1351 = vmatprep.subr.mxu0 0.0
      %1352 = vmatpush1.msra.mxu0 0.0
      %1353 = vmatprep.subr.mxu0 0.0
      %1354 = vmatpush1.msra.mxu0 0.0
      %1355 = vmatprep.subr.mxu0 0.0
      %1356 = vmatpush1.msra.mxu0 0.0
      %1357 = vmatprep.subr.mxu0 0.0
      %1358 = vmatpush1.msra.mxu0 0.0
      %1359 = vmatprep.subr.mxu0 0.0
      %1360 = vmatpush1.msra.mxu0 0.0
      %1361 = vmatprep.subr.mxu0 0.0
      %1362 = vmatpush1.msra.mxu0 0.0
      %1363 = vmatprep.subr.mxu0 0.0
      %1364 = vmatpush1.msra.mxu0 0.0
      %1365 = vmatprep.subr.mxu0 0.0
      %1366 = vmatpush1.msra.mxu0 0.0
      %1367 = vmatprep.subr.mxu0 0.0
      %1368 = vmatpush1.msra.mxu0 0.0
      %1369 = vmatprep.subr.mxu0 0.0
      %1370 = vmatpush1.msra.mxu0 0.0
      %1371 = vmatprep.subr.mxu0 0.0
      %1372 = vmatpush1.msra.mxu0 0.0
      %1373 = vmatprep.subr.mxu0 0.0
      %1374 = vmatpush1.msra.mxu0 0.0
      %1375 = vmatprep.subr.mxu0 0.0
      %1376 = vmatpush1.msra.mxu0 0.0
      %1377 = vmatprep.subr.mxu0 0.0
      %1378 = vmatpush1.msra.mxu0 0.0
      %1379 = vmatprep.subr.mxu0 0.0
      %1380 = vmatpush1.msra.mxu0 0.0
      %1381 = vmatprep.mubr.f32.mxu0 0.0
      %1382 = vmatmul.mubr.f32.gmra.mrb[0].mxu0 %v1315
      %v1383 = vpop.f32.mrb[0].mxu0
      %v1384 = vadd.f32 0.0, %v1383
      %v1385 = vpop.f32.mrb[0].mxu0
      %1386 = vdwg.mxu0
      %s1387 = scalar_lea.vmem %s5, 64
      %v1388 = vld [vmem:[%s1387] sm:$0xff]
      %v1389 = vld [vmem:[%s1387 + $0x8] sm:$0xff]
      %v1390 = vld [vmem:[%s1387 + $0x10] sm:$0xff]
      %v1391 = vld [vmem:[%s1387 + $0x18] sm:$0xff]
      %s1392 = scalar_lea.vmem %s6, 2
      %v1393 = vld [vmem:[%s1392] sm:$0x1]
      %v1395 = vlaneseq
      %v1396 = vshrl.u32 %v1395, 7
      %v1397 = vsub.s32 0, %v1396
      %v1398 = vrot.slane %v1393, %v1397
      %1400 = vmatprep.subr.mxu0 0.0
      %1401 = vmatpush1.msra.mxu0 %v1388
      %1402 = vmatprep.subr.mxu0 0.0
      %1403 = vmatpush1.msra.mxu0 %v1389
      %1404 = vmatprep.subr.mxu0 0.0
      %1405 = vmatpush1.msra.mxu0 %v1390
      %1406 = vmatprep.subr.mxu0 0.0
      %1407 = vmatpush1.msra.mxu0 %v1391
      %1408 = vmatprep.subr.mxu0 0.0
      %1409 = vmatpush1.msra.mxu0 0.0
      %1410 = vmatprep.subr.mxu0 0.0
      %1411 = vmatpush1.msra.mxu0 0.0
      %1412 = vmatprep.subr.mxu0 0.0
      %1413 = vmatpush1.msra.mxu0 0.0
      %1414 = vmatprep.subr.mxu0 0.0
      %1415 = vmatpush1.msra.mxu0 0.0
      %1416 = vmatprep.subr.mxu0 0.0
      %1417 = vmatpush1.msra.mxu0 0.0
      %1418 = vmatprep.subr.mxu0 0.0
      %1419 = vmatpush1.msra.mxu0 0.0
      %1420 = vmatprep.subr.mxu0 0.0
      %1421 = vmatpush1.msra.mxu0 0.0
      %1422 = vmatprep.subr.mxu0 0.0
      %1423 = vmatpush1.msra.mxu0 0.0
      %1424 = vmatprep.subr.mxu0 0.0
      %1425 = vmatpush1.msra.mxu0 0.0
      %1426 = vmatprep.subr.mxu0 0.0
      %1427 = vmatpush1.msra.mxu0 0.0
      %1428 = vmatprep.subr.mxu0 0.0
      %1429 = vmatpush1.msra.mxu0 0.0
      %1430 = vmatprep.subr.mxu0 0.0
      %1431 = vmatpush1.msra.mxu0 0.0
      %1432 = vmatprep.subr.mxu0 0.0
      %1433 = vmatpush1.msra.mxu0 0.0
      %1434 = vmatprep.subr.mxu0 0.0
      %1435 = vmatpush1.msra.mxu0 0.0
      %1436 = vmatprep.subr.mxu0 0.0
      %1437 = vmatpush1.msra.mxu0 0.0
      %1438 = vmatprep.subr.mxu0 0.0
      %1439 = vmatpush1.msra.mxu0 0.0
      %1440 = vmatprep.subr.mxu0 0.0
      %1441 = vmatpush1.msra.mxu0 0.0
      %1442 = vmatprep.subr.mxu0 0.0
      %1443 = vmatpush1.msra.mxu0 0.0
      %1444 = vmatprep.subr.mxu0 0.0
      %1445 = vmatpush1.msra.mxu0 0.0
      %1446 = vmatprep.subr.mxu0 0.0
      %1447 = vmatpush1.msra.mxu0 0.0
      %1448 = vmatprep.subr.mxu0 0.0
      %1449 = vmatpush1.msra.mxu0 0.0
      %1450 = vmatprep.subr.mxu0 0.0
      %1451 = vmatpush1.msra.mxu0 0.0
      %1452 = vmatprep.subr.mxu0 0.0
      %1453 = vmatpush1.msra.mxu0 0.0
      %1454 = vmatprep.subr.mxu0 0.0
      %1455 = vmatpush1.msra.mxu0 0.0
      %1456 = vmatprep.subr.mxu0 0.0
      %1457 = vmatpush1.msra.mxu0 0.0
      %1458 = vmatprep.subr.mxu0 0.0
      %1459 = vmatpush1.msra.mxu0 0.0
      %1460 = vmatprep.subr.mxu0 0.0
      %1461 = vmatpush1.msra.mxu0 0.0
      %1462 = vmatprep.subr.mxu0 0.0
      %1463 = vmatpush1.msra.mxu0 0.0
      %1464 = vmatprep.mubr.f32.mxu0 0.0
      %1465 = vmatmul.mubr.f32.gmra.mrb[0].mxu0 %v569
      %v1466 = vpop.f32.mrb[0].mxu0
      %v1467 = vadd.f32 %v1398, %v1466
      %v1468 = vpop.f32.mrb[0].mxu0
      %1469 = vdwg.mxu0
      %s1470 = scalar_lea.vmem %s5, 192
      %v1471 = vld [vmem:[%s1470] sm:$0xff]
      %v1472 = vld [vmem:[%s1470 + $0x8] sm:$0xff]
      %v1473 = vld [vmem:[%s1470 + $0x10] sm:$0xff]
      %v1474 = vld [vmem:[%s1470 + $0x18] sm:$0xff]
      %s1475 = scalar_lea.vmem %s6, 6
      %v1476 = vld [vmem:[%s1475] sm:$0x1]
      %v1478 = vlaneseq
      %v1479 = vshrl.u32 %v1478, 7
      %v1480 = vsub.s32 0, %v1479
      %v1481 = vrot.slane %v1476, %v1480
      %1483 = vmatprep.subr.mxu0 0.0
      %1484 = vmatpush1.msra.mxu0 %v1471
      %1485 = vmatprep.subr.mxu0 0.0
      %1486 = vmatpush1.msra.mxu0 %v1472
      %1487 = vmatprep.subr.mxu0 0.0
      %1488 = vmatpush1.msra.mxu0 %v1473
      %1489 = vmatprep.subr.mxu0 0.0
      %1490 = vmatpush1.msra.mxu0 %v1474
      %1491 = vmatprep.subr.mxu0 0.0
      %1492 = vmatpush1.msra.mxu0 0.0
      %1493 = vmatprep.subr.mxu0 0.0
      %1494 = vmatpush1.msra.mxu0 0.0
      %1495 = vmatprep.subr.mxu0 0.0
      %1496 = vmatpush1.msra.mxu0 0.0
      %1497 = vmatprep.subr.mxu0 0.0
      %1498 = vmatpush1.msra.mxu0 0.0
      %1499 = vmatprep.subr.mxu0 0.0
      %1500 = vmatpush1.msra.mxu0 0.0
      %1501 = vmatprep.subr.mxu0 0.0
      %1502 = vmatpush1.msra.mxu0 0.0
      %1503 = vmatprep.subr.mxu0 0.0
      %1504 = vmatpush1.msra.mxu0 0.0
      %1505 = vmatprep.subr.mxu0 0.0
      %1506 = vmatpush1.msra.mxu0 0.0
      %1507 = vmatprep.subr.mxu0 0.0
      %1508 = vmatpush1.msra.mxu0 0.0
      %1509 = vmatprep.subr.mxu0 0.0
      %1510 = vmatpush1.msra.mxu0 0.0
      %1511 = vmatprep.subr.mxu0 0.0
      %1512 = vmatpush1.msra.mxu0 0.0
      %1513 = vmatprep.subr.mxu0 0.0
      %1514 = vmatpush1.msra.mxu0 0.0
      %1515 = vmatprep.subr.mxu0 0.0
      %1516 = vmatpush1.msra.mxu0 0.0
      %1517 = vmatprep.subr.mxu0 0.0
      %1518 = vmatpush1.msra.mxu0 0.0
      %1519 = vmatprep.subr.mxu0 0.0
      %1520 = vmatpush1.msra.mxu0 0.0
      %1521 = vmatprep.subr.mxu0 0.0
      %1522 = vmatpush1.msra.mxu0 0.0
      %1523 = vmatprep.subr.mxu0 0.0
      %1524 = vmatpush1.msra.mxu0 0.0
      %1525 = vmatprep.subr.mxu0 0.0
      %1526 = vmatpush1.msra.mxu0 0.0
      %1527 = vmatprep.subr.mxu0 0.0
      %1528 = vmatpush1.msra.mxu0 0.0
      %1529 = vmatprep.subr.mxu0 0.0
      %1530 = vmatpush1.msra.mxu0 0.0
      %1531 = vmatprep.subr.mxu0 0.0
      %1532 = vmatpush1.msra.mxu0 0.0
      %1533 = vmatprep.subr.mxu0 0.0
      %1534 = vmatpush1.msra.mxu0 0.0
      %1535 = vmatprep.subr.mxu0 0.0
      %1536 = vmatpush1.msra.mxu0 0.0
      %1537 = vmatprep.subr.mxu0 0.0
      %1538 = vmatpush1.msra.mxu0 0.0
      %1539 = vmatprep.subr.mxu0 0.0
      %1540 = vmatpush1.msra.mxu0 0.0
      %1541 = vmatprep.subr.mxu0 0.0
      %1542 = vmatpush1.msra.mxu0 0.0
      %1543 = vmatprep.subr.mxu0 0.0
      %1544 = vmatpush1.msra.mxu0 0.0
      %1545 = vmatprep.subr.mxu0 0.0
      %1546 = vmatpush1.msra.mxu0 0.0
      %1547 = vmatprep.mubr.f32.mxu0 0.0
      %1548 = vmatmul.mubr.f32.gmra.mrb[0].mxu0 %v569
      %v1549 = vpop.f32.mrb[0].mxu0
      %v1550 = vadd.f32 %v1481, %v1549
      %v1551 = vpop.f32.mrb[0].mxu0
      %1552 = vdwg.mxu0
      %s1553 = scalar_lea.vmem %s5, 320
      %v1554 = vld [vmem:[%s1553] sm:$0xff]
      %v1555 = vld [vmem:[%s1553 + $0x8] sm:$0xff]
      %v1556 = vld [vmem:[%s1553 + $0x10] sm:$0xff]
      %v1557 = vld [vmem:[%s1553 + $0x18] sm:$0xff]
      %s1558 = scalar_lea.vmem %s6, 10
      %v1559 = vld [vmem:[%s1558] sm:$0x1]
      %v1561 = vlaneseq
      %v1562 = vshrl.u32 %v1561, 7
      %v1563 = vsub.s32 0, %v1562
      %v1564 = vrot.slane %v1559, %v1563
      %1566 = vmatprep.subr.mxu0 0.0
      %1567 = vmatpush1.msra.mxu0 %v1554
      %1568 = vmatprep.subr.mxu0 0.0
      %1569 = vmatpush1.msra.mxu0 %v1555
      %1570 = vmatprep.subr.mxu0 0.0
      %1571 = vmatpush1.msra.mxu0 %v1556
      %1572 = vmatprep.subr.mxu0 0.0
      %1573 = vmatpush1.msra.mxu0 %v1557
      %1574 = vmatprep.subr.mxu0 0.0
      %1575 = vmatpush1.msra.mxu0 0.0
      %1576 = vmatprep.subr.mxu0 0.0
      %1577 = vmatpush1.msra.mxu0 0.0
      %1578 = vmatprep.subr.mxu0 0.0
      %1579 = vmatpush1.msra.mxu0 0.0
      %1580 = vmatprep.subr.mxu0 0.0
      %1581 = vmatpush1.msra.mxu0 0.0
      %1582 = vmatprep.subr.mxu0 0.0
      %1583 = vmatpush1.msra.mxu0 0.0
      %1584 = vmatprep.subr.mxu0 0.0
      %1585 = vmatpush1.msra.mxu0 0.0
      %1586 = vmatprep.subr.mxu0 0.0
      %1587 = vmatpush1.msra.mxu0 0.0
      %1588 = vmatprep.subr.mxu0 0.0
      %1589 = vmatpush1.msra.mxu0 0.0
      %1590 = vmatprep.subr.mxu0 0.0
      %1591 = vmatpush1.msra.mxu0 0.0
      %1592 = vmatprep.subr.mxu0 0.0
      %1593 = vmatpush1.msra.mxu0 0.0
      %1594 = vmatprep.subr.mxu0 0.0
      %1595 = vmatpush1.msra.mxu0 0.0
      %1596 = vmatprep.subr.mxu0 0.0
      %1597 = vmatpush1.msra.mxu0 0.0
      %1598 = vmatprep.subr.mxu0 0.0
      %1599 = vmatpush1.msra.mxu0 0.0
      %1600 = vmatprep.subr.mxu0 0.0
      %1601 = vmatpush1.msra.mxu0 0.0
      %1602 = vmatprep.subr.mxu0 0.0
      %1603 = vmatpush1.msra.mxu0 0.0
      %1604 = vmatprep.subr.mxu0 0.0
      %1605 = vmatpush1.msra.mxu0 0.0
      %1606 = vmatprep.subr.mxu0 0.0
      %1607 = vmatpush1.msra.mxu0 0.0
      %1608 = vmatprep.subr.mxu0 0.0
      %1609 = vmatpush1.msra.mxu0 0.0
      %1610 = vmatprep.subr.mxu0 0.0
      %1611 = vmatpush1.msra.mxu0 0.0
      %1612 = vmatprep.subr.mxu0 0.0
      %1613 = vmatpush1.msra.mxu0 0.0
      %1614 = vmatprep.subr.mxu0 0.0
      %1615 = vmatpush1.msra.mxu0 0.0
      %1616 = vmatprep.subr.mxu0 0.0
      %1617 = vmatpush1.msra.mxu0 0.0
      %1618 = vmatprep.subr.mxu0 0.0
      %1619 = vmatpush1.msra.mxu0 0.0
      %1620 = vmatprep.subr.mxu0 0.0
      %1621 = vmatpush1.msra.mxu0 0.0
      %1622 = vmatprep.subr.mxu0 0.0
      %1623 = vmatpush1.msra.mxu0 0.0
      %1624 = vmatprep.subr.mxu0 0.0
      %1625 = vmatpush1.msra.mxu0 0.0
      %1626 = vmatprep.subr.mxu0 0.0
      %1627 = vmatpush1.msra.mxu0 0.0
      %1628 = vmatprep.subr.mxu0 0.0
      %1629 = vmatpush1.msra.mxu0 0.0
      %1630 = vmatprep.mubr.f32.mxu0 0.0
      %1631 = vmatmul.mubr.f32.gmra.mrb[0].mxu0 %v569
      %v1632 = vpop.f32.mrb[0].mxu0
      %v1633 = vadd.f32 %v1564, %v1632
      %v1634 = vpop.f32.mrb[0].mxu0
      %1635 = vdwg.mxu0
      %v1637 = vsel %vm807, %v1467, 0
      %v1640 = vsel %vm807, %v1550, 0
      %1642 = vmatprep.subr.mxu0 0.0
      %1643 = vmatpush1.xpose.msra.mxu0 %v1640
      %1644 = vmatprep.subr.mxu0 0.0
      %1645 = vmatpush1.xpose.msra.mxu0 0.0
      %1646 = vmatprep.subr.mxu0 0.0
      %1647 = vmatpush1.xpose.msra.mxu0 0.0
      %1648 = vmatprep.subr.mxu0 0.0
      %1649 = vmatpush1.xpose.msra.mxu0 0.0
      %1650 = vmatprep.subr.mxu0 0.0
      %1651 = vmatpush1.xpose.msra.mxu0 0.0
      %1652 = vmatprep.subr.mxu0 0.0
      %1653 = vmatpush1.xpose.msra.mxu0 0.0
      %1654 = vmatprep.subr.mxu0 0.0
      %1655 = vmatpush1.xpose.msra.mxu0 0.0
      %1656 = vmatprep.subr.mxu0 0.0
      %1657 = vmatpush1.xpose.msra.mxu0 0.0
      %1658 = vmatprep.subr.mxu0 0.0
      %1659 = vmatpush1.xpose.msra.mxu0 0.0
      %1660 = vmatprep.subr.mxu0 0.0
      %1661 = vmatpush1.xpose.msra.mxu0 0.0
      %1662 = vmatprep.subr.mxu0 0.0
      %1663 = vmatpush1.xpose.msra.mxu0 0.0
      %1664 = vmatprep.subr.mxu0 0.0
      %1665 = vmatpush1.xpose.msra.mxu0 0.0
      %1666 = vmatprep.subr.mxu0 0.0
      %1667 = vmatpush1.xpose.msra.mxu0 0.0
      %1668 = vmatprep.subr.mxu0 0.0
      %1669 = vmatpush1.xpose.msra.mxu0 0.0
      %1670 = vmatprep.subr.mxu0 0.0
      %1671 = vmatpush1.xpose.msra.mxu0 0.0
      %1672 = vmatprep.subr.mxu0 0.0
      %1673 = vmatpush1.xpose.msra.mxu0 0.0
      %1674 = vmatprep.subr.mxu0 0.0
      %1675 = vmatpush1.xpose.msra.mxu0 0.0
      %1676 = vmatprep.subr.mxu0 0.0
      %1677 = vmatpush1.xpose.msra.mxu0 0.0
      %1678 = vmatprep.subr.mxu0 0.0
      %1679 = vmatpush1.xpose.msra.mxu0 0.0
      %1680 = vmatprep.subr.mxu0 0.0
      %1681 = vmatpush1.xpose.msra.mxu0 0.0
      %1682 = vmatprep.subr.mxu0 0.0
      %1683 = vmatpush1.xpose.msra.mxu0 0.0
      %1684 = vmatprep.subr.mxu0 0.0
      %1685 = vmatpush1.xpose.msra.mxu0 0.0
      %1686 = vmatprep.subr.mxu0 0.0
      %1687 = vmatpush1.xpose.msra.mxu0 0.0
      %1688 = vmatprep.subr.mxu0 0.0
      %1689 = vmatpush1.xpose.msra.mxu0 0.0
      %1690 = vmatprep.subr.mxu0 0.0
      %1691 = vmatpush1.xpose.msra.mxu0 0.0
      %1692 = vmatprep.subr.mxu0 0.0
      %1693 = vmatpush1.xpose.msra.mxu0 0.0
      %1694 = vmatprep.subr.mxu0 0.0
      %1695 = vmatpush1.xpose.msra.mxu0 0.0
      %1696 = vmatprep.subr.mxu0 0.0
      %1697 = vmatpush1.xpose.msra.mxu0 0.0
      %1698 = vmatprep.subr.mxu0 0.0
      %1699 = vmatpush1.xpose.msra.mxu0 0.0
      %1700 = vmatprep.subr.mxu0 0.0
      %1701 = vmatpush1.xpose.msra.mxu0 0.0
      %1702 = vmatprep.subr.mxu0 0.0
      %1703 = vmatpush1.xpose.msra.mxu0 0.0
      %1704 = vmatprep.subr.mxu0 0.0
      %1705 = vmatpush1.xpose.msra.mxu0 0.0
      %1706 = vmatprep.mubr.f32.mxu0 0.0
      %1707 = vmatmul.mubr.f32.gmra.mrb[0].mxu0 %v1637
      %v1708 = vpop.f32.mrb[0].mxu0
      %v1709 = vadd.f32 0.0, %v1708
      %v1710 = vpop.f32.mrb[0].mxu0
      %1711 = vdwg.mxu0
      %v1712 = vmul.f32 %v1709, 0.35355338
      %v1713 = vadd.f32 %v1712, %v889
      %v1714 = vsel %vm807, %v1713, -inf
      %1715 = vmax.xlane.f32.xlu0 %v1714
      %v1716 = vpop.xlane.xlu0 %1715
      %v1717 = vsub.f32 %v1713, %v1716
      %v1718 = vmul.f32 %v1717, 1.442695
      %v1719 = vpow.pop %v1718
      %v1720 = vsel %vm807, %v1719, 0.0
      %1721 = vadd.xlane.f32.xlu0 %v1720
      %v1722 = vpop.xlane.xlu0 %1721
      %v1723 = vrcp.pop %v1722
      %v1724 = vmul.f32 %v1719, %v1723
      %v1726 = vsel %vm807, %v1724, 0
      %1728 = vmatprep.subr.mxu0 0.0
      %1729 = vmatpush1.msra.mxu0 %v1633
      %1730 = vmatprep.subr.mxu0 0.0
      %1731 = vmatpush1.msra.mxu0 0.0
      %1732 = vmatprep.subr.mxu0 0.0
      %1733 = vmatpush1.msra.mxu0 0.0
      %1734 = vmatprep.subr.mxu0 0.0
      %1735 = vmatpush1.msra.mxu0 0.0
      %1736 = vmatprep.subr.mxu0 0.0
      %1737 = vmatpush1.msra.mxu0 0.0
      %1738 = vmatprep.subr.mxu0 0.0
      %1739 = vmatpush1.msra.mxu0 0.0
      %1740 = vmatprep.subr.mxu0 0.0
      %1741 = vmatpush1.msra.mxu0 0.0
      %1742 = vmatprep.subr.mxu0 0.0
      %1743 = vmatpush1.msra.mxu0 0.0
      %1744 = vmatprep.subr.mxu0 0.0
      %1745 = vmatpush1.msra.mxu0 0.0
      %1746 = vmatprep.subr.mxu0 0.0
      %1747 = vmatpush1.msra.mxu0 0.0
      %1748 = vmatprep.subr.mxu0 0.0
      %1749 = vmatpush1.msra.mxu0 0.0
      %1750 = vmatprep.subr.mxu0 0.0
      %1751 = vmatpush1.msra.mxu0 0.0
      %1752 = vmatprep.subr.mxu0 0.0
      %1753 = vmatpush1.msra.mxu0 0.0
      %1754 = vmatprep.subr.mxu0 0.0
      %1755 = vmatpush1.msra.mxu0 0.0
      %1756 = vmatprep.subr.mxu0 0.0
      %1757 = vmatpush1.msra.mxu0 0.0
      %1758 = vmatprep.subr.mxu0 0.0
      %1759 = vmatpush1.msra.mxu0 0.0
      %1760 = vmatprep.subr.mxu0 0.0
      %1761 = vmatpush1.msra.mxu0 0.0
      %1762 = vmatprep.subr.mxu0 0.0
      %1763 = vmatpush1.msra.mxu0 0.0
      %1764 = vmatprep.subr.mxu0 0.0
      %1765 = vmatpush1.msra.mxu0 0.0
      %1766 = vmatprep.subr.mxu0 0.0
      %1767 = vmatpush1.msra.mxu0 0.0
      %1768 = vmatprep.subr.mxu0 0.0
      %1769 = vmatpush1.msra.mxu0 0.0
      %1770 = vmatprep.subr.mxu0 0.0
      %1771 = vmatpush1.msra.mxu0 0.0
      %1772 = vmatprep.subr.mxu0 0.0
      %1773 = vmatpush1.msra.mxu0 0.0
      %1774 = vmatprep.subr.mxu0 0.0
      %1775 = vmatpush1.msra.mxu0 0.0
      %1776 = vmatprep.subr.mxu0 0.0
      %1777 = vmatpush1.msra.mxu0 0.0
      %1778 = vmatprep.subr.mxu0 0.0
      %1779 = vmatpush1.msra.mxu0 0.0
      %1780 = vmatprep.subr.mxu0 0.0
      %1781 = vmatpush1.msra.mxu0 0.0
      %1782 = vmatprep.subr.mxu0 0.0
      %1783 = vmatpush1.msra.mxu0 0.0
      %1784 = vmatprep.subr.mxu0 0.0
      %1785 = vmatpush1.msra.mxu0 0.0
      %1786 = vmatprep.subr.mxu0 0.0
      %1787 = vmatpush1.msra.mxu0 0.0
      %1788 = vmatprep.subr.mxu0 0.0
      %1789 = vmatpush1.msra.mxu0 0.0
      %1790 = vmatprep.subr.mxu0 0.0
      %1791 = vmatpush1.msra.mxu0 0.0
      %1792 = vmatprep.mubr.f32.mxu0 0.0
      %1793 = vmatmul.mubr.f32.gmra.mrb[0].mxu0 %v1726
      %v1794 = vpop.f32.mrb[0].mxu0
      %v1795 = vadd.f32 0.0, %v1794
      %v1796 = vpop.f32.mrb[0].mxu0
      %1797 = vdwg.mxu0
      %s1798 = scalar_lea.vmem %s5, 96
      %v1799 = vld [vmem:[%s1798] sm:$0xff]
      %v1800 = vld [vmem:[%s1798 + $0x8] sm:$0xff]
      %v1801 = vld [vmem:[%s1798 + $0x10] sm:$0xff]
      %v1802 = vld [vmem:[%s1798 + $0x18] sm:$0xff]
      %s1803 = scalar_lea.vmem %s6, 3
      %v1804 = vld [vmem:[%s1803] sm:$0x1]
      %v1806 = vlaneseq
      %v1807 = vshrl.u32 %v1806, 7
      %v1808 = vsub.s32 0, %v1807
      %v1809 = vrot.slane %v1804, %v1808
      %1811 = vmatprep.subr.mxu0 0.0
      %1812 = vmatpush1.msra.mxu0 %v1799
      %1813 = vmatprep.subr.mxu0 0.0
      %1814 = vmatpush1.msra.mxu0 %v1800
      %1815 = vmatprep.subr.mxu0 0.0
      %1816 = vmatpush1.msra.mxu0 %v1801
      %1817 = vmatprep.subr.mxu0 0.0
      %1818 = vmatpush1.msra.mxu0 %v1802
      %1819 = vmatprep.subr.mxu0 0.0
      %1820 = vmatpush1.msra.mxu0 0.0
      %1821 = vmatprep.subr.mxu0 0.0
      %1822 = vmatpush1.msra.mxu0 0.0
      %1823 = vmatprep.subr.mxu0 0.0
      %1824 = vmatpush1.msra.mxu0 0.0
      %1825 = vmatprep.subr.mxu0 0.0
      %1826 = vmatpush1.msra.mxu0 0.0
      %1827 = vmatprep.subr.mxu0 0.0
      %1828 = vmatpush1.msra.mxu0 0.0
      %1829 = vmatprep.subr.mxu0 0.0
      %1830 = vmatpush1.msra.mxu0 0.0
      %1831 = vmatprep.subr.mxu0 0.0
      %1832 = vmatpush1.msra.mxu0 0.0
      %1833 = vmatprep.subr.mxu0 0.0
      %1834 = vmatpush1.msra.mxu0 0.0
      %1835 = vmatprep.subr.mxu0 0.0
      %1836 = vmatpush1.msra.mxu0 0.0
      %1837 = vmatprep.subr.mxu0 0.0
      %1838 = vmatpush1.msra.mxu0 0.0
      %1839 = vmatprep.subr.mxu0 0.0
      %1840 = vmatpush1.msra.mxu0 0.0
      %1841 = vmatprep.subr.mxu0 0.0
      %1842 = vmatpush1.msra.mxu0 0.0
      %1843 = vmatprep.subr.mxu0 0.0
      %1844 = vmatpush1.msra.mxu0 0.0
      %1845 = vmatprep.subr.mxu0 0.0
      %1846 = vmatpush1.msra.mxu0 0.0
      %1847 = vmatprep.subr.mxu0 0.0
      %1848 = vmatpush1.msra.mxu0 0.0
      %1849 = vmatprep.subr.mxu0 0.0
      %1850 = vmatpush1.msra.mxu0 0.0
      %1851 = vmatprep.subr.mxu0 0.0
      %1852 = vmatpush1.msra.mxu0 0.0
      %1853 = vmatprep.subr.mxu0 0.0
      %1854 = vmatpush1.msra.mxu0 0.0
      %1855 = vmatprep.subr.mxu0 0.0
      %1856 = vmatpush1.msra.mxu0 0.0
      %1857 = vmatprep.subr.mxu0 0.0
      %1858 = vmatpush1.msra.mxu0 0.0
      %1859 = vmatprep.subr.mxu0 0.0
      %1860 = vmatpush1.msra.mxu0 0.0
      %1861 = vmatprep.subr.mxu0 0.0
      %1862 = vmatpush1.msra.mxu0 0.0
      %1863 = vmatprep.subr.mxu0 0.0
      %1864 = vmatpush1.msra.mxu0 0.0
      %1865 = vmatprep.subr.mxu0 0.0
      %1866 = vmatpush1.msra.mxu0 0.0
      %1867 = vmatprep.subr.mxu0 0.0
      %1868 = vmatpush1.msra.mxu0 0.0
      %1869 = vmatprep.subr.mxu0 0.0
      %1870 = vmatpush1.msra.mxu0 0.0
      %1871 = vmatprep.subr.mxu0 0.0
      %1872 = vmatpush1.msra.mxu0 0.0
      %1873 = vmatprep.subr.mxu0 0.0
      %1874 = vmatpush1.msra.mxu0 0.0
      %1875 = vmatprep.mubr.f32.mxu0 0.0
      %1876 = vmatmul.mubr.f32.gmra.mrb[0].mxu0 %v569
      %v1877 = vpop.f32.mrb[0].mxu0
      %v1878 = vadd.f32 %v1809, %v1877
      %v1879 = vpop.f32.mrb[0].mxu0
      %1880 = vdwg.mxu0
      %s1881 = scalar_lea.vmem %s5, 224
      %v1882 = vld [vmem:[%s1881] sm:$0xff]
      %v1883 = vld [vmem:[%s1881 + $0x8] sm:$0xff]
      %v1884 = vld [vmem:[%s1881 + $0x10] sm:$0xff]
      %v1885 = vld [vmem:[%s1881 + $0x18] sm:$0xff]
      %s1886 = scalar_lea.vmem %s6, 7
      %v1887 = vld [vmem:[%s1886] sm:$0x1]
      %v1889 = vlaneseq
      %v1890 = vshrl.u32 %v1889, 7
      %v1891 = vsub.s32 0, %v1890
      %v1892 = vrot.slane %v1887, %v1891
      %1894 = vmatprep.subr.mxu0 0.0
      %1895 = vmatpush1.msra.mxu0 %v1882
      %1896 = vmatprep.subr.mxu0 0.0
      %1897 = vmatpush1.msra.mxu0 %v1883
      %1898 = vmatprep.subr.mxu0 0.0
      %1899 = vmatpush1.msra.mxu0 %v1884
      %1900 = vmatprep.subr.mxu0 0.0
      %1901 = vmatpush1.msra.mxu0 %v1885
      %1902 = vmatprep.subr.mxu0 0.0
      %1903 = vmatpush1.msra.mxu0 0.0
      %1904 = vmatprep.subr.mxu0 0.0
      %1905 = vmatpush1.msra.mxu0 0.0
      %1906 = vmatprep.subr.mxu0 0.0
      %1907 = vmatpush1.msra.mxu0 0.0
      %1908 = vmatprep.subr.mxu0 0.0
      %1909 = vmatpush1.msra.mxu0 0.0
      %1910 = vmatprep.subr.mxu0 0.0
      %1911 = vmatpush1.msra.mxu0 0.0
      %1912 = vmatprep.subr.mxu0 0.0
      %1913 = vmatpush1.msra.mxu0 0.0
      %1914 = vmatprep.subr.mxu0 0.0
      %1915 = vmatpush1.msra.mxu0 0.0
      %1916 = vmatprep.subr.mxu0 0.0
      %1917 = vmatpush1.msra.mxu0 0.0
      %1918 = vmatprep.subr.mxu0 0.0
      %1919 = vmatpush1.msra.mxu0 0.0
      %1920 = vmatprep.subr.mxu0 0.0
      %1921 = vmatpush1.msra.mxu0 0.0
      %1922 = vmatprep.subr.mxu0 0.0
      %1923 = vmatpush1.msra.mxu0 0.0
      %1924 = vmatprep.subr.mxu0 0.0
      %1925 = vmatpush1.msra.mxu0 0.0
      %1926 = vmatprep.subr.mxu0 0.0
      %1927 = vmatpush1.msra.mxu0 0.0
      %1928 = vmatprep.subr.mxu0 0.0
      %1929 = vmatpush1.msra.mxu0 0.0
      %1930 = vmatprep.subr.mxu0 0.0
      %1931 = vmatpush1.msra.mxu0 0.0
      %1932 = vmatprep.subr.mxu0 0.0
      %1933 = vmatpush1.msra.mxu0 0.0
      %1934 = vmatprep.subr.mxu0 0.0
      %1935 = vmatpush1.msra.mxu0 0.0
      %1936 = vmatprep.subr.mxu0 0.0
      %1937 = vmatpush1.msra.mxu0 0.0
      %1938 = vmatprep.subr.mxu0 0.0
      %1939 = vmatpush1.msra.mxu0 0.0
      %1940 = vmatprep.subr.mxu0 0.0
      %1941 = vmatpush1.msra.mxu0 0.0
      %1942 = vmatprep.subr.mxu0 0.0
      %1943 = vmatpush1.msra.mxu0 0.0
      %1944 = vmatprep.subr.mxu0 0.0
      %1945 = vmatpush1.msra.mxu0 0.0
      %1946 = vmatprep.subr.mxu0 0.0
      %1947 = vmatpush1.msra.mxu0 0.0
      %1948 = vmatprep.subr.mxu0 0.0
      %1949 = vmatpush1.msra.mxu0 0.0
      %1950 = vmatprep.subr.mxu0 0.0
      %1951 = vmatpush1.msra.mxu0 0.0
      %1952 = vmatprep.subr.mxu0 0.0
      %1953 = vmatpush1.msra.mxu0 0.0
      %1954 = vmatprep.subr.mxu0 0.0
      %1955 = vmatpush1.msra.mxu0 0.0
      %1956 = vmatprep.subr.mxu0 0.0
      %1957 = vmatpush1.msra.mxu0 0.0
      %1958 = vmatprep.mubr.f32.mxu0 0.0
      %1959 = vmatmul.mubr.f32.gmra.mrb[0].mxu0 %v569
      %v1960 = vpop.f32.mrb[0].mxu0
      %v1961 = vadd.f32 %v1892, %v1960
      %v1962 = vpop.f32.mrb[0].mxu0
      %1963 = vdwg.mxu0
      %s1964 = scalar_lea.vmem %s5, 352
      %v1965 = vld [vmem:[%s1964] sm:$0xff]
      %v1966 = vld [vmem:[%s1964 + $0x8] sm:$0xff]
      %v1967 = vld [vmem:[%s1964 + $0x10] sm:$0xff]
      %v1968 = vld [vmem:[%s1964 + $0x18] sm:$0xff]
      %s1969 = scalar_lea.vmem %s6, 11
      %v1970 = vld [vmem:[%s1969] sm:$0x1]
      %v1972 = vlaneseq
      %v1973 = vshrl.u32 %v1972, 7
      %v1974 = vsub.s32 0, %v1973
      %v1975 = vrot.slane %v1970, %v1974
      %1977 = vmatprep.subr.mxu0 0.0
      %1978 = vmatpush1.msra.mxu0 %v1965
      %1979 = vmatprep.subr.mxu0 0.0
      %1980 = vmatpush1.msra.mxu0 %v1966
      %1981 = vmatprep.subr.mxu0 0.0
      %1982 = vmatpush1.msra.mxu0 %v1967
      %1983 = vmatprep.subr.mxu0 0.0
      %1984 = vmatpush1.msra.mxu0 %v1968
      %1985 = vmatprep.subr.mxu0 0.0
      %1986 = vmatpush1.msra.mxu0 0.0
      %1987 = vmatprep.subr.mxu0 0.0
      %1988 = vmatpush1.msra.mxu0 0.0
      %1989 = vmatprep.subr.mxu0 0.0
      %1990 = vmatpush1.msra.mxu0 0.0
      %1991 = vmatprep.subr.mxu0 0.0
      %1992 = vmatpush1.msra.mxu0 0.0
      %1993 = vmatprep.subr.mxu0 0.0
      %1994 = vmatpush1.msra.mxu0 0.0
      %1995 = vmatprep.subr.mxu0 0.0
      %1996 = vmatpush1.msra.mxu0 0.0
      %1997 = vmatprep.subr.mxu0 0.0
      %1998 = vmatpush1.msra.mxu0 0.0
      %1999 = vmatprep.subr.mxu0 0.0
      %2000 = vmatpush1.msra.mxu0 0.0
      %2001 = vmatprep.subr.mxu0 0.0
      %2002 = vmatpush1.msra.mxu0 0.0
      %2003 = vmatprep.subr.mxu0 0.0
      %2004 = vmatpush1.msra.mxu0 0.0
      %2005 = vmatprep.subr.mxu0 0.0
      %2006 = vmatpush1.msra.mxu0 0.0
      %2007 = vmatprep.subr.mxu0 0.0
      %2008 = vmatpush1.msra.mxu0 0.0
      %2009 = vmatprep.subr.mxu0 0.0
      %2010 = vmatpush1.msra.mxu0 0.0
      %2011 = vmatprep.subr.mxu0 0.0
      %2012 = vmatpush1.msra.mxu0 0.0
      %2013 = vmatprep.subr.mxu0 0.0
      %2014 = vmatpush1.msra.mxu0 0.0
      %2015 = vmatprep.subr.mxu0 0.0
      %2016 = vmatpush1.msra.mxu0 0.0
      %2017 = vmatprep.subr.mxu0 0.0
      %2018 = vmatpush1.msra.mxu0 0.0
      %2019 = vmatprep.subr.mxu0 0.0
      %2020 = vmatpush1.msra.mxu0 0.0
      %2021 = vmatprep.subr.mxu0 0.0
      %2022 = vmatpush1.msra.mxu0 0.0
      %2023 = vmatprep.subr.mxu0 0.0
      %2024 = vmatpush1.msra.mxu0 0.0
      %2025 = vmatprep.subr.mxu0 0.0
      %2026 = vmatpush1.msra.mxu0 0.0
      %2027 = vmatprep.subr.mxu0 0.0
      %2028 = vmatpush1.msra.mxu0 0.0
      %2029 = vmatprep.subr.mxu0 0.0
      %2030 = vmatpush1.msra.mxu0 0.0
      %2031 = vmatprep.subr.mxu0 0.0
      %2032 = vmatpush1.msra.mxu0 0.0
      %2033 = vmatprep.subr.mxu0 0.0
      %2034 = vmatpush1.msra.mxu0 0.0
      %2035 = vmatprep.subr.mxu0 0.0
      %2036 = vmatpush1.msra.mxu0 0.0
      %2037 = vmatprep.subr.mxu0 0.0
      %2038 = vmatpush1.msra.mxu0 0.0
      %2039 = vmatprep.subr.mxu0 0.0
      %2040 = vmatpush1.msra.mxu0 0.0
      %2041 = vmatprep.mubr.f32.mxu0 0.0
      %2042 = vmatmul.mubr.f32.gmra.mrb[0].mxu0 %v569
      %v2043 = vpop.f32.mrb[0].mxu0
      %v2044 = vadd.f32 %v1975, %v2043
      %v2045 = vpop.f32.mrb[0].mxu0
      %2046 = vdwg.mxu0
      %v2048 = vsel %vm807, %v1878, 0
      %v2051 = vsel %vm807, %v1961, 0
      %2053 = vmatprep.subr.mxu0 0.0
      %2054 = vmatpush1.xpose.msra.mxu0 %v2051
      %2055 = vmatprep.subr.mxu0 0.0
      %2056 = vmatpush1.xpose.msra.mxu0 0.0
      %2057 = vmatprep.subr.mxu0 0.0
      %2058 = vmatpush1.xpose.msra.mxu0 0.0
      %2059 = vmatprep.subr.mxu0 0.0
      %2060 = vmatpush1.xpose.msra.mxu0 0.0
      %2061 = vmatprep.subr.mxu0 0.0
      %2062 = vmatpush1.xpose.msra.mxu0 0.0
      %2063 = vmatprep.subr.mxu0 0.0
      %2064 = vmatpush1.xpose.msra.mxu0 0.0
      %2065 = vmatprep.subr.mxu0 0.0
      %2066 = vmatpush1.xpose.msra.mxu0 0.0
      %2067 = vmatprep.subr.mxu0 0.0
      %2068 = vmatpush1.xpose.msra.mxu0 0.0
      %2069 = vmatprep.subr.mxu0 0.0
      %2070 = vmatpush1.xpose.msra.mxu0 0.0
      %2071 = vmatprep.subr.mxu0 0.0
      %2072 = vmatpush1.xpose.msra.mxu0 0.0
      %2073 = vmatprep.subr.mxu0 0.0
      %2074 = vmatpush1.xpose.msra.mxu0 0.0
      %2075 = vmatprep.subr.mxu0 0.0
      %2076 = vmatpush1.xpose.msra.mxu0 0.0
      %2077 = vmatprep.subr.mxu0 0.0
      %2078 = vmatpush1.xpose.msra.mxu0 0.0
      %2079 = vmatprep.subr.mxu0 0.0
      %2080 = vmatpush1.xpose.msra.mxu0 0.0
      %2081 = vmatprep.subr.mxu0 0.0
      %2082 = vmatpush1.xpose.msra.mxu0 0.0
      %2083 = vmatprep.subr.mxu0 0.0
      %2084 = vmatpush1.xpose.msra.mxu0 0.0
      %2085 = vmatprep.subr.mxu0 0.0
      %2086 = vmatpush1.xpose.msra.mxu0 0.0
      %2087 = vmatprep.subr.mxu0 0.0
      %2088 = vmatpush1.xpose.msra.mxu0 0.0
      %2089 = vmatprep.subr.mxu0 0.0
      %2090 = vmatpush1.xpose.msra.mxu0 0.0
      %2091 = vmatprep.subr.mxu0 0.0
      %2092 = vmatpush1.xpose.msra.mxu0 0.0
      %2093 = vmatprep.subr.mxu0 0.0
      %2094 = vmatpush1.xpose.msra.mxu0 0.0
      %2095 = vmatprep.subr.mxu0 0.0
      %2096 = vmatpush1.xpose.msra.mxu0 0.0
      %2097 = vmatprep.subr.mxu0 0.0
      %2098 = vmatpush1.xpose.msra.mxu0 0.0
      %2099 = vmatprep.subr.mxu0 0.0
      %2100 = vmatpush1.xpose.msra.mxu0 0.0
      %2101 = vmatprep.subr.mxu0 0.0
      %2102 = vmatpush1.xpose.msra.mxu0 0.0
      %2103 = vmatprep.subr.mxu0 0.0
      %2104 = vmatpush1.xpose.msra.mxu0 0.0
      %2105 = vmatprep.subr.mxu0 0.0
      %2106 = vmatpush1.xpose.msra.mxu0 0.0
      %2107 = vmatprep.subr.mxu0 0.0
      %2108 = vmatpush1.xpose.msra.mxu0 0.0
      %2109 = vmatprep.subr.mxu0 0.0
      %2110 = vmatpush1.xpose.msra.mxu0 0.0
      %2111 = vmatprep.subr.mxu0 0.0
      %2112 = vmatpush1.xpose.msra.mxu0 0.0
      %2113 = vmatprep.subr.mxu0 0.0
      %2114 = vmatpush1.xpose.msra.mxu0 0.0
      %2115 = vmatprep.subr.mxu0 0.0
      %2116 = vmatpush1.xpose.msra.mxu0 0.0
      %2117 = vmatprep.mubr.f32.mxu0 0.0
      %2118 = vmatmul.mubr.f32.gmra.mrb[0].mxu0 %v2048
      %v2119 = vpop.f32.mrb[0].mxu0
      %v2120 = vadd.f32 0.0, %v2119
      %v2121 = vpop.f32.mrb[0].mxu0
      %2122 = vdwg.mxu0
      %v2123 = vmul.f32 %v2120, 0.35355338
      %v2124 = vadd.f32 %v2123, %v889
      %v2125 = vsel %vm807, %v2124, -inf
      %2126 = vmax.xlane.f32.xlu0 %v2125
      %v2127 = vpop.xlane.xlu0 %2126
      %v2128 = vsub.f32 %v2124, %v2127
      %v2129 = vmul.f32 %v2128, 1.442695
      %v2130 = vpow.pop %v2129
      %v2131 = vsel %vm807, %v2130, 0.0
      %2132 = vadd.xlane.f32.xlu0 %v2131
      %v2133 = vpop.xlane.xlu0 %2132
      %v2134 = vrcp.pop %v2133
      %v2135 = vmul.f32 %v2130, %v2134
      %v2137 = vsel %vm807, %v2135, 0
      %2139 = vmatprep.subr.mxu0 0.0
      %2140 = vmatpush1.msra.mxu0 %v2044
      %2141 = vmatprep.subr.mxu0 0.0
      %2142 = vmatpush1.msra.mxu0 0.0
      %2143 = vmatprep.subr.mxu0 0.0
      %2144 = vmatpush1.msra.mxu0 0.0
      %2145 = vmatprep.subr.mxu0 0.0
      %2146 = vmatpush1.msra.mxu0 0.0
      %2147 = vmatprep.subr.mxu0 0.0
      %2148 = vmatpush1.msra.mxu0 0.0
      %2149 = vmatprep.subr.mxu0 0.0
      %2150 = vmatpush1.msra.mxu0 0.0
      %2151 = vmatprep.subr.mxu0 0.0
      %2152 = vmatpush1.msra.mxu0 0.0
      %2153 = vmatprep.subr.mxu0 0.0
      %2154 = vmatpush1.msra.mxu0 0.0
      %2155 = vmatprep.subr.mxu0 0.0
      %2156 = vmatpush1.msra.mxu0 0.0
      %2157 = vmatprep.subr.mxu0 0.0
      %2158 = vmatpush1.msra.mxu0 0.0
      %2159 = vmatprep.subr.mxu0 0.0
      %2160 = vmatpush1.msra.mxu0 0.0
      %2161 = vmatprep.subr.mxu0 0.0
      %2162 = vmatpush1.msra.mxu0 0.0
      %2163 = vmatprep.subr.mxu0 0.0
      %2164 = vmatpush1.msra.mxu0 0.0
      %2165 = vmatprep.subr.mxu0 0.0
      %2166 = vmatpush1.msra.mxu0 0.0
      %2167 = vmatprep.subr.mxu0 0.0
      %2168 = vmatpush1.msra.mxu0 0.0
      %2169 = vmatprep.subr.mxu0 0.0
      %2170 = vmatpush1.msra.mxu0 0.0
      %2171 = vmatprep.subr.mxu0 0.0
      %2172 = vmatpush1.msra.mxu0 0.0
      %2173 = vmatprep.subr.mxu0 0.0
      %2174 = vmatpush1.msra.mxu0 0.0
      %2175 = vmatprep.subr.mxu0 0.0
      %2176 = vmatpush1.msra.mxu0 0.0
      %2177 = vmatprep.subr.mxu0 0.0
      %2178 = vmatpush1.msra.mxu0 0.0
      %2179 = vmatprep.subr.mxu0 0.0
      %2180 = vmatpush1.msra.mxu0 0.0
      %2181 = vmatprep.subr.mxu0 0.0
      %2182 = vmatpush1.msra.mxu0 0.0
      %2183 = vmatprep.subr.mxu0 0.0
      %2184 = vmatpush1.msra.mxu0 0.0
      %2185 = vmatprep.subr.mxu0 0.0
      %2186 = vmatpush1.msra.mxu0 0.0
      %2187 = vmatprep.subr.mxu0 0.0
      %2188 = vmatpush1.msra.mxu0 0.0
      %2189 = vmatprep.subr.mxu0 0.0
      %2190 = vmatpush1.msra.mxu0 0.0
      %2191 = vmatprep.subr.mxu0 0.0
      %2192 = vmatpush1.msra.mxu0 0.0
      %2193 = vmatprep.subr.mxu0 0.0
      %2194 = vmatpush1.msra.mxu0 0.0
      %2195 = vmatprep.subr.mxu0 0.0
      %2196 = vmatpush1.msra.mxu0 0.0
      %2197 = vmatprep.subr.mxu0 0.0
      %2198 = vmatpush1.msra.mxu0 0.0
      %2199 = vmatprep.subr.mxu0 0.0
      %2200 = vmatpush1.msra.mxu0 0.0
      %2201 = vmatprep.subr.mxu0 0.0
      %2202 = vmatpush1.msra.mxu0 0.0
      %2203 = vmatprep.mubr.f32.mxu0 0.0
      %2204 = vmatmul.mubr.f32.gmra.mrb[0].mxu0 %v2137
      %v2205 = vpop.f32.mrb[0].mxu0
      %v2206 = vadd.f32 0.0, %v2205
      %v2207 = vpop.f32.mrb[0].mxu0
      %2208 = vdwg.mxu0
      %2210 = vrot.lane.b32.xlu0 %v1384, 8
      %v2211 = vpop.permute.xlu0 %2210
      %2214 = vrot.lane.b32.xlu0 %v1795, 16
      %v2215 = vpop.permute.xlu0 %2214
      %2218 = vrot.lane.b32.xlu0 %v2206, 24
      %v2219 = vpop.permute.xlu0 %2218
      %v2221 = vsel %vm807, %v973, %v2211
      %vm2222 = vcmask 130048
      %v2223 = vsel %vm2222, %v2221, %v2215
      %vm2224 = vcmask 195584
      %v2225 = vsel %vm2224, %v2223, %v2219
      %v2226 = vld [vmem:[%s7] sm:$0xff]
      %v2227 = vld [vmem:[%s7 + $0x8] sm:$0xff]
      %v2228 = vld [vmem:[%s7 + $0x10] sm:$0xff]
      %v2229 = vld [vmem:[%s7 + $0x18] sm:$0xff]
      %v2230 = vlaneseq
      %v2231 = vshrl.u32 %v2230, 7
      %v2232 = vsub.s32 5, %v2231
      %v2233 = vrot.slane %v465, %v2232
      %v2235 = vsel %vm567, %v2225, 0
      %2237 = vmatprep.subr.mxu0 0.0
      %2238 = vmatpush1.msra.mxu0 %v2226
      %2239 = vmatprep.subr.mxu0 0.0
      %2240 = vmatpush1.msra.mxu0 %v2227
      %2241 = vmatprep.subr.mxu0 0.0
      %2242 = vmatpush1.msra.mxu0 %v2228
      %2243 = vmatprep.subr.mxu0 0.0
      %2244 = vmatpush1.msra.mxu0 %v2229
      %2245 = vmatprep.subr.mxu0 0.0
      %2246 = vmatpush1.msra.mxu0 0.0
      %2247 = vmatprep.subr.mxu0 0.0
      %2248 = vmatpush1.msra.mxu0 0.0
      %2249 = vmatprep.subr.mxu0 0.0
      %2250 = vmatpush1.msra.mxu0 0.0
      %2251 = vmatprep.subr.mxu0 0.0
      %2252 = vmatpush1.msra.mxu0 0.0
      %2253 = vmatprep.subr.mxu0 0.0
      %2254 = vmatpush1.msra.mxu0 0.0
      %2255 = vmatprep.subr.mxu0 0.0
      %2256 = vmatpush1.msra.mxu0 0.0
      %2257 = vmatprep.subr.mxu0 0.0
      %2258 = vmatpush1.msra.mxu0 0.0
      %2259 = vmatprep.subr.mxu0 0.0
      %2260 = vmatpush1.msra.mxu0 0.0
      %2261 = vmatprep.subr.mxu0 0.0
      %2262 = vmatpush1.msra.mxu0 0.0
      %2263 = vmatprep.subr.mxu0 0.0
      %2264 = vmatpush1.msra.mxu0 0.0
      %2265 = vmatprep.subr.mxu0 0.0
      %2266 = vmatpush1.msra.mxu0 0.0
      %2267 = vmatprep.subr.mxu0 0.0
      %2268 = vmatpush1.msra.mxu0 0.0
      %2269 = vmatprep.subr.mxu0 0.0
      %2270 = vmatpush1.msra.mxu0 0.0
      %2271 = vmatprep.subr.mxu0 0.0
      %2272 = vmatpush1.msra.mxu0 0.0
      %2273 = vmatprep.subr.mxu0 0.0
      %2274 = vmatpush1.msra.mxu0 0.0
      %2275 = vmatprep.subr.mxu0 0.0
      %2276 = vmatpush1.msra.mxu0 0.0
      %2277 = vmatprep.subr.mxu0 0.0
      %2278 = vmatpush1.msra.mxu0 0.0
      %2279 = vmatprep.subr.mxu0 0.0
      %2280 = vmatpush1.msra.mxu0 0.0
      %2281 = vmatprep.subr.mxu0 0.0
      %2282 = vmatpush1.msra.mxu0 0.0
      %2283 = vmatprep.subr.mxu0 0.0
      %2284 = vmatpush1.msra.mxu0 0.0
      %2285 = vmatprep.subr.mxu0 0.0
      %2286 = vmatpush1.msra.mxu0 0.0
      %2287 = vmatprep.subr.mxu0 0.0
      %2288 = vmatpush1.msra.mxu0 0.0
      %2289 = vmatprep.subr.mxu0 0.0
      %2290 = vmatpush1.msra.mxu0 0.0
      %2291 = vmatprep.subr.mxu0 0.0
      %2292 = vmatpush1.msra.mxu0 0.0
      %2293 = vmatprep.subr.mxu0 0.0
      %2294 = vmatpush1.msra.mxu0 0.0
      %2295 = vmatprep.subr.mxu0 0.0
      %2296 = vmatpush1.msra.mxu0 0.0
      %2297 = vmatprep.subr.mxu0 0.0
      %2298 = vmatpush1.msra.mxu0 0.0
      %2299 = vmatprep.subr.mxu0 0.0
      %2300 = vmatpush1.msra.mxu0 0.0
      %2301 = vmatprep.mubr.f32.mxu0 0.0
      %2302 = vmatmul.mubr.f32.gmra.mrb[0].mxu0 %v2235
      %v2303 = vpop.f32.mrb[0].mxu0
      %v2304 = vadd.f32 %v2233, %v2303
      %v2305 = vpop.f32.mrb[0].mxu0
      %2306 = vdwg.mxu0
      %v2307 = vadd.f32 %v555, %v2304
      %v2308 = vsel %vm567, %v2307, 0.0
      %2309 = vadd.xlane.f32.xlu0 %v2308
      %v2310 = vpop.xlane.xlu0 %2309
      %v2311 = vrcp.pop 32.0
      %v2312 = vmul.f32 %v2310, %v2311
      %v2313 = vsub.f32 %v2307, %v2312
      %v2314 = vmul.f32 %v2313, %v2313
      %v2315 = vsel %vm567, %v2314, 0.0
      %2316 = vadd.xlane.f32.xlu0 %v2315
      %v2317 = vpop.xlane.xlu0 %2316
      %v2318 = vmul.f32 %v2317, %v2311
      %v2319 = vadd.f32 %v2318, 1e-05
      %v2320 = vrsqrt.pop %v2319
      %v2321 = vmul.f32 %v2313, %v2320
      %v2322 = vlaneseq
      %v2323 = vshrl.u32 %v2322, 7
      %v2324 = vsub.s32 6, %v2323
      %v2325 = vrot.slane %v465, %v2324
      %v2326 = vmul.f32 %v2321, %v2325
      %v2327 = vlaneseq
      %v2328 = vshrl.u32 %v2327, 7
      %v2329 = vsub.s32 7, %v2328
      %v2330 = vrot.slane %v465, %v2329
      %v2331 = vadd.f32 %v2326, %v2330
      %v2332 = vld [vmem:[%s8] sm:$0xff]
      %v2333 = vld [vmem:[%s8 + $0x8] sm:$0xff]
      %v2334 = vld [vmem:[%s8 + $0x10] sm:$0xff]
      %v2335 = vld [vmem:[%s8 + $0x18] sm:$0xff]
      %v2336 = vlaneseq
      %v2337 = vshrl.u32 %v2336, 7
      %v2338 = vsub.s32 0, %v2337
      %v2339 = vrot.slane %v466, %v2338
      %v2341 = vsel %vm567, %v2331, 0
      %2343 = vmatprep.subr.mxu0 0.0
      %2344 = vmatpush1.msra.mxu0 %v2332
      %2345 = vmatprep.subr.mxu0 0.0
      %2346 = vmatpush1.msra.mxu0 %v2333
      %2347 = vmatprep.subr.mxu0 0.0
      %2348 = vmatpush1.msra.mxu0 %v2334
      %2349 = vmatprep.subr.mxu0 0.0
      %2350 = vmatpush1.msra.mxu0 %v2335
      %2351 = vmatprep.subr.mxu0 0.0
      %2352 = vmatpush1.msra.mxu0 0.0
      %2353 = vmatprep.subr.mxu0 0.0
      %2354 = vmatpush1.msra.mxu0 0.0
      %2355 = vmatprep.subr.mxu0 0.0
      %2356 = vmatpush1.msra.mxu0 0.0
      %2357 = vmatprep.subr.mxu0 0.0
      %2358 = vmatpush1.msra.mxu0 0.0
      %2359 = vmatprep.subr.mxu0 0.0
      %2360 = vmatpush1.msra.mxu0 0.0
      %2361 = vmatprep.subr.mxu0 0.0
      %2362 = vmatpush1.msra.mxu0 0.0
      %2363 = vmatprep.subr.mxu0 0.0
      %2364 = vmatpush1.msra.mxu0 0.0
      %2365 = vmatprep.subr.mxu0 0.0
      %2366 = vmatpush1.msra.mxu0 0.0
      %2367 = vmatprep.subr.mxu0 0.0
      %2368 = vmatpush1.msra.mxu0 0.0
      %2369 = vmatprep.subr.mxu0 0.0
      %2370 = vmatpush1.msra.mxu0 0.0
      %2371 = vmatprep.subr.mxu0 0.0
      %2372 = vmatpush1.msra.mxu0 0.0
      %2373 = vmatprep.subr.mxu0 0.0
      %2374 = vmatpush1.msra.mxu0 0.0
      %2375 = vmatprep.subr.mxu0 0.0
      %2376 = vmatpush1.msra.mxu0 0.0
      %2377 = vmatprep.subr.mxu0 0.0
      %2378 = vmatpush1.msra.mxu0 0.0
      %2379 = vmatprep.subr.mxu0 0.0
      %2380 = vmatpush1.msra.mxu0 0.0
      %2381 = vmatprep.subr.mxu0 0.0
      %2382 = vmatpush1.msra.mxu0 0.0
      %2383 = vmatprep.subr.mxu0 0.0
      %2384 = vmatpush1.msra.mxu0 0.0
      %2385 = vmatprep.subr.mxu0 0.0
      %2386 = vmatpush1.msra.mxu0 0.0
      %2387 = vmatprep.subr.mxu0 0.0
      %2388 = vmatpush1.msra.mxu0 0.0
      %2389 = vmatprep.subr.mxu0 0.0
      %2390 = vmatpush1.msra.mxu0 0.0
      %2391 = vmatprep.subr.mxu0 0.0
      %2392 = vmatpush1.msra.mxu0 0.0
      %2393 = vmatprep.subr.mxu0 0.0
      %2394 = vmatpush1.msra.mxu0 0.0
      %2395 = vmatprep.subr.mxu0 0.0
      %2396 = vmatpush1.msra.mxu0 0.0
      %2397 = vmatprep.subr.mxu0 0.0
      %2398 = vmatpush1.msra.mxu0 0.0
      %2399 = vmatprep.subr.mxu0 0.0
      %2400 = vmatpush1.msra.mxu0 0.0
      %2401 = vmatprep.subr.mxu0 0.0
      %2402 = vmatpush1.msra.mxu0 0.0
      %2403 = vmatprep.subr.mxu0 0.0
      %2404 = vmatpush1.msra.mxu0 0.0
      %2405 = vmatprep.subr.mxu0 0.0
      %2406 = vmatpush1.msra.mxu0 0.0
      %2407 = vmatprep.mubr.f32.mxu0 0.0
      %2408 = vmatmul.mubr.f32.gmra.mrb[0].mxu0 %v2341
      %v2409 = vpop.f32.mrb[0].mxu0
      %v2410 = vadd.f32 %v2339, %v2409
      %v2411 = vpop.f32.mrb[0].mxu0
      %2412 = vdwg.mxu0
      %v2413 = vmax.f32 %v2410, 0.0
      %v2414 = vld [vmem:[%s9] sm:$0xff]
      %v2415 = vld [vmem:[%s9 + $0x8] sm:$0xff]
      %v2416 = vld [vmem:[%s9 + $0x10] sm:$0xff]
      %v2417 = vld [vmem:[%s9 + $0x18] sm:$0xff]
      %v2418 = vld [vmem:[%s9 + $0x20] sm:$0xff]
      %v2419 = vld [vmem:[%s9 + $0x28] sm:$0xff]
      %v2420 = vld [vmem:[%s9 + $0x30] sm:$0xff]
      %v2421 = vld [vmem:[%s9 + $0x38] sm:$0xff]
      %v2422 = vld [vmem:[%s9 + $0x40] sm:$0xff]
      %v2423 = vld [vmem:[%s9 + $0x48] sm:$0xff]
      %v2424 = vld [vmem:[%s9 + $0x50] sm:$0xff]
      %v2425 = vld [vmem:[%s9 + $0x58] sm:$0xff]
      %v2426 = vld [vmem:[%s9 + $0x60] sm:$0xff]
      %v2427 = vld [vmem:[%s9 + $0x68] sm:$0xff]
      %v2428 = vld [vmem:[%s9 + $0x70] sm:$0xff]
      %v2429 = vld [vmem:[%s9 + $0x78] sm:$0xff]
      %v2430 = vlaneseq
      %v2431 = vshrl.u32 %v2430, 7
      %v2432 = vsub.s32 1, %v2431
      %v2433 = vrot.slane %v466, %v2432
      %2434 = vmatprep.subr.mxu0 0.0
      %2435 = vmatpush1.msra.mxu0 %v2414
      %2436 = vmatprep.subr.mxu0 0.0
      %2437 = vmatpush1.msra.mxu0 %v2415
      %2438 = vmatprep.subr.mxu0 0.0
      %2439 = vmatpush1.msra.mxu0 %v2416
      %2440 = vmatprep.subr.mxu0 0.0
      %2441 = vmatpush1.msra.mxu0 %v2417
      %2442 = vmatprep.subr.mxu0 0.0
      %2443 = vmatpush1.msra.mxu0 %v2418
      %2444 = vmatprep.subr.mxu0 0.0
      %2445 = vmatpush1.msra.mxu0 %v2419
      %2446 = vmatprep.subr.mxu0 0.0
      %2447 = vmatpush1.msra.mxu0 %v2420
      %2448 = vmatprep.subr.mxu0 0.0
      %2449 = vmatpush1.msra.mxu0 %v2421
      %2450 = vmatprep.subr.mxu0 0.0
      %2451 = vmatpush1.msra.mxu0 %v2422
      %2452 = vmatprep.subr.mxu0 0.0
      %2453 = vmatpush1.msra.mxu0 %v2423
      %2454 = vmatprep.subr.mxu0 0.0
      %2455 = vmatpush1.msra.mxu0 %v2424
      %2456 = vmatprep.subr.mxu0 0.0
      %2457 = vmatpush1.msra.mxu0 %v2425
      %2458 = vmatprep.subr.mxu0 0.0
      %2459 = vmatpush1.msra.mxu0 %v2426
      %2460 = vmatprep.subr.mxu0 0.0
      %2461 = vmatpush1.msra.mxu0 %v2427
      %2462 = vmatprep.subr.mxu0 0.0
      %2463 = vmatpush1.msra.mxu0 %v2428
      %2464 = vmatprep.subr.mxu0 0.0
      %2465 = vmatpush1.msra.mxu0 %v2429
      %2466 = vmatprep.subr.mxu0 0.0
      %2467 = vmatpush1.msra.mxu0 0.0
      %2468 = vmatprep.subr.mxu0 0.0
      %2469 = vmatpush1.msra.mxu0 0.0
      %2470 = vmatprep.subr.mxu0 0.0
      %2471 = vmatpush1.msra.mxu0 0.0
      %2472 = vmatprep.subr.mxu0 0.0
      %2473 = vmatpush1.msra.mxu0 0.0
      %2474 = vmatprep.subr.mxu0 0.0
      %2475 = vmatpush1.msra.mxu0 0.0
      %2476 = vmatprep.subr.mxu0 0.0
      %2477 = vmatpush1.msra.mxu0 0.0
      %2478 = vmatprep.subr.mxu0 0.0
      %2479 = vmatpush1.msra.mxu0 0.0
      %2480 = vmatprep.subr.mxu0 0.0
      %2481 = vmatpush1.msra.mxu0 0.0
      %2482 = vmatprep.subr.mxu0 0.0
      %2483 = vmatpush1.msra.mxu0 0.0
      %2484 = vmatprep.subr.mxu0 0.0
      %2485 = vmatpush1.msra.mxu0 0.0
      %2486 = vmatprep.subr.mxu0 0.0
      %2487 = vmatpush1.msra.mxu0 0.0
      %2488 = vmatprep.subr.mxu0 0.0
      %2489 = vmatpush1.msra.mxu0 0.0
      %2490 = vmatprep.subr.mxu0 0.0
      %2491 = vmatpush1.msra.mxu0 0.0
      %2492 = vmatprep.subr.mxu0 0.0
      %2493 = vmatpush1.msra.mxu0 0.0
      %2494 = vmatprep.subr.mxu0 0.0
      %2495 = vmatpush1.msra.mxu0 0.0
      %2496 = vmatprep.subr.mxu0 0.0
      %2497 = vmatpush1.msra.mxu0 0.0
      %2498 = vmatprep.mubr.f32.mxu0 0.0
      %2499 = vmatmul.mubr.f32.gmra.mrb[0].mxu0 %v2413
      %v2500 = vpop.f32.mrb[0].mxu0
      %v2501 = vadd.f32 %v2433, %v2500
      %v2502 = vpop.f32.mrb[0].mxu0
      %2503 = vdwg.mxu0
      %v2504 = vadd.f32 %v2331, %v2501
      %v2505 = vsel %vm567, %v2504, 0.0
      %2506 = vadd.xlane.f32.xlu0 %v2505
      %v2507 = vpop.xlane.xlu0 %2506
      %v2508 = vmul.f32 %v2507, %v2311
      %v2509 = vsub.f32 %v2504, %v2508
      %v2510 = vmul.f32 %v2509, %v2509
      %v2511 = vsel %vm567, %v2510, 0.0
      %2512 = vadd.xlane.f32.xlu0 %v2511
      %v2513 = vpop.xlane.xlu0 %2512
      %v2514 = vmul.f32 %v2513, %v2311
      %v2515 = vadd.f32 %v2514, 1e-05
      %v2516 = vrsqrt.pop %v2515
      %v2517 = vmul.f32 %v2509, %v2516
      %v2518 = vlaneseq
      %v2519 = vshrl.u32 %v2518, 7
      %v2520 = vsub.s32 2, %v2519
      %v2521 = vrot.slane %v466, %v2520
      %v2522 = vmul.f32 %v2517, %v2521
      %v2523 = vlaneseq
      %v2524 = vshrl.u32 %v2523, 7
      %v2525 = vsub.s32 3, %v2524
      %v2526 = vrot.slane %v466, %v2525
      %v2527 = vadd.f32 %v2522, %v2526
      %s2528 = scalar_lea.vmem %s5, 384
      %v2529 = vld [vmem:[%s2528] sm:$0xff]
      %v2530 = vld [vmem:[%s2528 + $0x8] sm:$0xff]
      %v2531 = vld [vmem:[%s2528 + $0x10] sm:$0xff]
      %v2532 = vld [vmem:[%s2528 + $0x18] sm:$0xff]
      %s2533 = scalar_lea.vmem %s6, 12
      %v2534 = vld [vmem:[%s2533] sm:$0x1]
      %v2536 = vlaneseq
      %v2537 = vshrl.u32 %v2536, 7
      %v2538 = vsub.s32 0, %v2537
      %v2539 = vrot.slane %v2534, %v2538
      %v2542 = vsel %vm567, %v2527, 0
      %2544 = vmatprep.subr.mxu0 0.0
      %2545 = vmatpush1.msra.mxu0 %v2529
      %2546 = vmatprep.subr.mxu0 0.0
      %2547 = vmatpush1.msra.mxu0 %v2530
      %2548 = vmatprep.subr.mxu0 0.0
      %2549 = vmatpush1.msra.mxu0 %v2531
      %2550 = vmatprep.subr.mxu0 0.0
      %2551 = vmatpush1.msra.mxu0 %v2532
      %2552 = vmatprep.subr.mxu0 0.0
      %2553 = vmatpush1.msra.mxu0 0.0
      %2554 = vmatprep.subr.mxu0 0.0
      %2555 = vmatpush1.msra.mxu0 0.0
      %2556 = vmatprep.subr.mxu0 0.0
      %2557 = vmatpush1.msra.mxu0 0.0
      %2558 = vmatprep.subr.mxu0 0.0
      %2559 = vmatpush1.msra.mxu0 0.0
      %2560 = vmatprep.subr.mxu0 0.0
      %2561 = vmatpush1.msra.mxu0 0.0
      %2562 = vmatprep.subr.mxu0 0.0
      %2563 = vmatpush1.msra.mxu0 0.0
      %2564 = vmatprep.subr.mxu0 0.0
      %2565 = vmatpush1.msra.mxu0 0.0
      %2566 = vmatprep.subr.mxu0 0.0
      %2567 = vmatpush1.msra.mxu0 0.0
      %2568 = vmatprep.subr.mxu0 0.0
      %2569 = vmatpush1.msra.mxu0 0.0
      %2570 = vmatprep.subr.mxu0 0.0
      %2571 = vmatpush1.msra.mxu0 0.0
      %2572 = vmatprep.subr.mxu0 0.0
      %2573 = vmatpush1.msra.mxu0 0.0
      %2574 = vmatprep.subr.mxu0 0.0
      %2575 = vmatpush1.msra.mxu0 0.0
      %2576 = vmatprep.subr.mxu0 0.0
      %2577 = vmatpush1.msra.mxu0 0.0
      %2578 = vmatprep.subr.mxu0 0.0
      %2579 = vmatpush1.msra.mxu0 0.0
      %2580 = vmatprep.subr.mxu0 0.0
      %2581 = vmatpush1.msra.mxu0 0.0
      %2582 = vmatprep.subr.mxu0 0.0
      %2583 = vmatpush1.msra.mxu0 0.0
      %2584 = vmatprep.subr.mxu0 0.0
      %2585 = vmatpush1.msra.mxu0 0.0
      %2586 = vmatprep.subr.mxu0 0.0
      %2587 = vmatpush1.msra.mxu0 0.0
      %2588 = vmatprep.subr.mxu0 0.0
      %2589 = vmatpush1.msra.mxu0 0.0
      %2590 = vmatprep.subr.mxu0 0.0
      %2591 = vmatpush1.msra.mxu0 0.0
      %2592 = vmatprep.subr.mxu0 0.0
      %2593 = vmatpush1.msra.mxu0 0.0
      %2594 = vmatprep.subr.mxu0 0.0
      %2595 = vmatpush1.msra.mxu0 0.0
      %2596 = vmatprep.subr.mxu0 0.0
      %2597 = vmatpush1.msra.mxu0 0.0
      %2598 = vmatprep.subr.mxu0 0.0
      %2599 = vmatpush1.msra.mxu0 0.0
      %2600 = vmatprep.subr.mxu0 0.0
      %2601 = vmatpush1.msra.mxu0 0.0
      %2602 = vmatprep.subr.mxu0 0.0
      %2603 = vmatpush1.msra.mxu0 0.0
      %2604 = vmatprep.subr.mxu0 0.0
      %2605 = vmatpush1.msra.mxu0 0.0
      %2606 = vmatprep.subr.mxu0 0.0
      %2607 = vmatpush1.msra.mxu0 0.0
      %2608 = vmatprep.mubr.f32.mxu0 0.0
      %2609 = vmatmul.mubr.f32.gmra.mrb[0].mxu0 %v2542
      %v2610 = vpop.f32.mrb[0].mxu0
      %v2611 = vadd.f32 %v2539, %v2610
      %v2612 = vpop.f32.mrb[0].mxu0
      %2613 = vdwg.mxu0
      %s2614 = scalar_lea.vmem %s5, 512
      %v2615 = vld [vmem:[%s2614] sm:$0xff]
      %v2616 = vld [vmem:[%s2614 + $0x8] sm:$0xff]
      %v2617 = vld [vmem:[%s2614 + $0x10] sm:$0xff]
      %v2618 = vld [vmem:[%s2614 + $0x18] sm:$0xff]
      %s2619 = scalar_lea.vmem %s6, 16
      %v2620 = vld [vmem:[%s2619] sm:$0x1]
      %v2622 = vlaneseq
      %v2623 = vshrl.u32 %v2622, 7
      %v2624 = vsub.s32 0, %v2623
      %v2625 = vrot.slane %v2620, %v2624
      %2627 = vmatprep.subr.mxu0 0.0
      %2628 = vmatpush1.msra.mxu0 %v2615
      %2629 = vmatprep.subr.mxu0 0.0
      %2630 = vmatpush1.msra.mxu0 %v2616
      %2631 = vmatprep.subr.mxu0 0.0
      %2632 = vmatpush1.msra.mxu0 %v2617
      %2633 = vmatprep.subr.mxu0 0.0
      %2634 = vmatpush1.msra.mxu0 %v2618
      %2635 = vmatprep.subr.mxu0 0.0
      %2636 = vmatpush1.msra.mxu0 0.0
      %2637 = vmatprep.subr.mxu0 0.0
      %2638 = vmatpush1.msra.mxu0 0.0
      %2639 = vmatprep.subr.mxu0 0.0
      %2640 = vmatpush1.msra.mxu0 0.0
      %2641 = vmatprep.subr.mxu0 0.0
      %2642 = vmatpush1.msra.mxu0 0.0
      %2643 = vmatprep.subr.mxu0 0.0
      %2644 = vmatpush1.msra.mxu0 0.0
      %2645 = vmatprep.subr.mxu0 0.0
      %2646 = vmatpush1.msra.mxu0 0.0
      %2647 = vmatprep.subr.mxu0 0.0
      %2648 = vmatpush1.msra.mxu0 0.0
      %2649 = vmatprep.subr.mxu0 0.0
      %2650 = vmatpush1.msra.mxu0 0.0
      %2651 = vmatprep.subr.mxu0 0.0
      %2652 = vmatpush1.msra.mxu0 0.0
      %2653 = vmatprep.subr.mxu0 0.0
      %2654 = vmatpush1.msra.mxu0 0.0
      %2655 = vmatprep.subr.mxu0 0.0
      %2656 = vmatpush1.msra.mxu0 0.0
      %2657 = vmatprep.subr.mxu0 0.0
      %2658 = vmatpush1.msra.mxu0 0.0
      %2659 = vmatprep.subr.mxu0 0.0
      %2660 = vmatpush1.msra.mxu0 0.0
      %2661 = vmatprep.subr.mxu0 0.0
      %2662 = vmatpush1.msra.mxu0 0.0
      %2663 = vmatprep.subr.mxu0 0.0
      %2664 = vmatpush1.msra.mxu0 0.0
      %2665 = vmatprep.subr.mxu0 0.0
      %2666 = vmatpush1.msra.mxu0 0.0
      %2667 = vmatprep.subr.mxu0 0.0
      %2668 = vmatpush1.msra.mxu0 0.0
      %2669 = vmatprep.subr.mxu0 0.0
      %2670 = vmatpush1.msra.mxu0 0.0
      %2671 = vmatprep.subr.mxu0 0.0
      %2672 = vmatpush1.msra.mxu0 0.0
      %2673 = vmatprep.subr.mxu0 0.0
      %2674 = vmatpush1.msra.mxu0 0.0
      %2675 = vmatprep.subr.mxu0 0.0
      %2676 = vmatpush1.msra.mxu0 0.0
      %2677 = vmatprep.subr.mxu0 0.0
      %2678 = vmatpush1.msra.mxu0 0.0
      %2679 = vmatprep.subr.mxu0 0.0
      %2680 = vmatpush1.msra.mxu0 0.0
      %2681 = vmatprep.subr.mxu0 0.0
      %2682 = vmatpush1.msra.mxu0 0.0
      %2683 = vmatprep.subr.mxu0 0.0
      %2684 = vmatpush1.msra.mxu0 0.0
      %2685 = vmatprep.subr.mxu0 0.0
      %2686 = vmatpush1.msra.mxu0 0.0
      %2687 = vmatprep.subr.mxu0 0.0
      %2688 = vmatpush1.msra.mxu0 0.0
      %2689 = vmatprep.subr.mxu0 0.0
      %2690 = vmatpush1.msra.mxu0 0.0
      %2691 = vmatprep.mubr.f32.mxu0 0.0
      %2692 = vmatmul.mubr.f32.gmra.mrb[0].mxu0 %v2542
      %v2693 = vpop.f32.mrb[0].mxu0
      %v2694 = vadd.f32 %v2625, %v2693
      %v2695 = vpop.f32.mrb[0].mxu0
      %2696 = vdwg.mxu0
      %s2697 = scalar_lea.vmem %s5, 640
      %v2698 = vld [vmem:[%s2697] sm:$0xff]
      %v2699 = vld [vmem:[%s2697 + $0x8] sm:$0xff]
      %v2700 = vld [vmem:[%s2697 + $0x10] sm:$0xff]
      %v2701 = vld [vmem:[%s2697 + $0x18] sm:$0xff]
      %s2702 = scalar_lea.vmem %s6, 20
      %v2703 = vld [vmem:[%s2702] sm:$0x1]
      %v2705 = vlaneseq
      %v2706 = vshrl.u32 %v2705, 7
      %v2707 = vsub.s32 0, %v2706
      %v2708 = vrot.slane %v2703, %v2707
      %2710 = vmatprep.subr.mxu0 0.0
      %2711 = vmatpush1.msra.mxu0 %v2698
      %2712 = vmatprep.subr.mxu0 0.0
      %2713 = vmatpush1.msra.mxu0 %v2699
      %2714 = vmatprep.subr.mxu0 0.0
      %2715 = vmatpush1.msra.mxu0 %v2700
      %2716 = vmatprep.subr.mxu0 0.0
      %2717 = vmatpush1.msra.mxu0 %v2701
      %2718 = vmatprep.subr.mxu0 0.0
      %2719 = vmatpush1.msra.mxu0 0.0
      %2720 = vmatprep.subr.mxu0 0.0
      %2721 = vmatpush1.msra.mxu0 0.0
      %2722 = vmatprep.subr.mxu0 0.0
      %2723 = vmatpush1.msra.mxu0 0.0
      %2724 = vmatprep.subr.mxu0 0.0
      %2725 = vmatpush1.msra.mxu0 0.0
      %2726 = vmatprep.subr.mxu0 0.0
      %2727 = vmatpush1.msra.mxu0 0.0
      %2728 = vmatprep.subr.mxu0 0.0
      %2729 = vmatpush1.msra.mxu0 0.0
      %2730 = vmatprep.subr.mxu0 0.0
      %2731 = vmatpush1.msra.mxu0 0.0
      %2732 = vmatprep.subr.mxu0 0.0
      %2733 = vmatpush1.msra.mxu0 0.0
      %2734 = vmatprep.subr.mxu0 0.0
      %2735 = vmatpush1.msra.mxu0 0.0
      %2736 = vmatprep.subr.mxu0 0.0
      %2737 = vmatpush1.msra.mxu0 0.0
      %2738 = vmatprep.subr.mxu0 0.0
      %2739 = vmatpush1.msra.mxu0 0.0
      %2740 = vmatprep.subr.mxu0 0.0
      %2741 = vmatpush1.msra.mxu0 0.0
      %2742 = vmatprep.subr.mxu0 0.0
      %2743 = vmatpush1.msra.mxu0 0.0
      %2744 = vmatprep.subr.mxu0 0.0
      %2745 = vmatpush1.msra.mxu0 0.0
      %2746 = vmatprep.subr.mxu0 0.0
      %2747 = vmatpush1.msra.mxu0 0.0
      %2748 = vmatprep.subr.mxu0 0.0
      %2749 = vmatpush1.msra.mxu0 0.0
      %2750 = vmatprep.subr.mxu0 0.0
      %2751 = vmatpush1.msra.mxu0 0.0
      %2752 = vmatprep.subr.mxu0 0.0
      %2753 = vmatpush1.msra.mxu0 0.0
      %2754 = vmatprep.subr.mxu0 0.0
      %2755 = vmatpush1.msra.mxu0 0.0
      %2756 = vmatprep.subr.mxu0 0.0
      %2757 = vmatpush1.msra.mxu0 0.0
      %2758 = vmatprep.subr.mxu0 0.0
      %2759 = vmatpush1.msra.mxu0 0.0
      %2760 = vmatprep.subr.mxu0 0.0
      %2761 = vmatpush1.msra.mxu0 0.0
      %2762 = vmatprep.subr.mxu0 0.0
      %2763 = vmatpush1.msra.mxu0 0.0
      %2764 = vmatprep.subr.mxu0 0.0
      %2765 = vmatpush1.msra.mxu0 0.0
      %2766 = vmatprep.subr.mxu0 0.0
      %2767 = vmatpush1.msra.mxu0 0.0
      %2768 = vmatprep.subr.mxu0 0.0
      %2769 = vmatpush1.msra.mxu0 0.0
      %2770 = vmatprep.subr.mxu0 0.0
      %2771 = vmatpush1.msra.mxu0 0.0
      %2772 = vmatprep.subr.mxu0 0.0
      %2773 = vmatpush1.msra.mxu0 0.0
      %2774 = vmatprep.mubr.f32.mxu0 0.0
      %2775 = vmatmul.mubr.f32.gmra.mrb[0].mxu0 %v2542
      %v2776 = vpop.f32.mrb[0].mxu0
      %v2777 = vadd.f32 %v2708, %v2776
      %v2778 = vpop.f32.mrb[0].mxu0
      %2779 = vdwg.mxu0
      %v2781 = vsel %vm807, %v2611, 0
      %v2784 = vsel %vm807, %v2694, 0
      %2786 = vmatprep.subr.mxu0 0.0
      %2787 = vmatpush1.xpose.msra.mxu0 %v2784
      %2788 = vmatprep.subr.mxu0 0.0
      %2789 = vmatpush1.xpose.msra.mxu0 0.0
      %2790 = vmatprep.subr.mxu0 0.0
      %2791 = vmatpush1.xpose.msra.mxu0 0.0
      %2792 = vmatprep.subr.mxu0 0.0
      %2793 = vmatpush1.xpose.msra.mxu0 0.0
      %2794 = vmatprep.subr.mxu0 0.0
      %2795 = vmatpush1.xpose.msra.mxu0 0.0
      %2796 = vmatprep.subr.mxu0 0.0
      %2797 = vmatpush1.xpose.msra.mxu0 0.0
      %2798 = vmatprep.subr.mxu0 0.0
      %2799 = vmatpush1.xpose.msra.mxu0 0.0
      %2800 = vmatprep.subr.mxu0 0.0
      %2801 = vmatpush1.xpose.msra.mxu0 0.0
      %2802 = vmatprep.subr.mxu0 0.0
      %2803 = vmatpush1.xpose.msra.mxu0 0.0
      %2804 = vmatprep.subr.mxu0 0.0
      %2805 = vmatpush1.xpose.msra.mxu0 0.0
      %2806 = vmatprep.subr.mxu0 0.0
      %2807 = vmatpush1.xpose.msra.mxu0 0.0
      %2808 = vmatprep.subr.mxu0 0.0
      %2809 = vmatpush1.xpose.msra.mxu0 0.0
      %2810 = vmatprep.subr.mxu0 0.0
      %2811 = vmatpush1.xpose.msra.mxu0 0.0
      %2812 = vmatprep.subr.mxu0 0.0
      %2813 = vmatpush1.xpose.msra.mxu0 0.0
      %2814 = vmatprep.subr.mxu0 0.0
      %2815 = vmatpush1.xpose.msra.mxu0 0.0
      %2816 = vmatprep.subr.mxu0 0.0
      %2817 = vmatpush1.xpose.msra.mxu0 0.0
      %2818 = vmatprep.subr.mxu0 0.0
      %2819 = vmatpush1.xpose.msra.mxu0 0.0
      %2820 = vmatprep.subr.mxu0 0.0
      %2821 = vmatpush1.xpose.msra.mxu0 0.0
      %2822 = vmatprep.subr.mxu0 0.0
      %2823 = vmatpush1.xpose.msra.mxu0 0.0
      %2824 = vmatprep.subr.mxu0 0.0
      %2825 = vmatpush1.xpose.msra.mxu0 0.0
      %2826 = vmatprep.subr.mxu0 0.0
      %2827 = vmatpush1.xpose.msra.mxu0 0.0
      %2828 = vmatprep.subr.mxu0 0.0
      %2829 = vmatpush1.xpose.msra.mxu0 0.0
      %2830 = vmatprep.subr.mxu0 0.0
      %2831 = vmatpush1.xpose.msra.mxu0 0.0
      %2832 = vmatprep.subr.mxu0 0.0
      %2833 = vmatpush1.xpose.msra.mxu0 0.0
      %2834 = vmatprep.subr.mxu0 0.0
      %2835 = vmatpush1.xpose.msra.mxu0 0.0
      %2836 = vmatprep.subr.mxu0 0.0
      %2837 = vmatpush1.xpose.msra.mxu0 0.0
      %2838 = vmatprep.subr.mxu0 0.0
      %2839 = vmatpush1.xpose.msra.mxu0 0.0
      %2840 = vmatprep.subr.mxu0 0.0
      %2841 = vmatpush1.xpose.msra.mxu0 0.0
      %2842 = vmatprep.subr.mxu0 0.0
      %2843 = vmatpush1.xpose.msra.mxu0 0.0
      %2844 = vmatprep.subr.mxu0 0.0
      %2845 = vmatpush1.xpose.msra.mxu0 0.0
      %2846 = vmatprep.subr.mxu0 0.0
      %2847 = vmatpush1.xpose.msra.mxu0 0.0
      %2848 = vmatprep.subr.mxu0 0.0
      %2849 = vmatpush1.xpose.msra.mxu0 0.0
      %2850 = vmatprep.mubr.f32.mxu0 0.0
      %2851 = vmatmul.mubr.f32.gmra.mrb[0].mxu0 %v2781
      %v2852 = vpop.f32.mrb[0].mxu0
      %v2853 = vadd.f32 0.0, %v2852
      %v2854 = vpop.f32.mrb[0].mxu0
      %2855 = vdwg.mxu0
      %v2856 = vmul.f32 %v2853, 0.35355338
      %v2857 = vadd.f32 %v2856, %v889
      %v2858 = vsel %vm807, %v2857, -inf
      %2859 = vmax.xlane.f32.xlu0 %v2858
      %v2860 = vpop.xlane.xlu0 %2859
      %v2861 = vsub.f32 %v2857, %v2860
      %v2862 = vmul.f32 %v2861, 1.442695
      %v2863 = vpow.pop %v2862
      %v2864 = vsel %vm807, %v2863, 0.0
      %2865 = vadd.xlane.f32.xlu0 %v2864
      %v2866 = vpop.xlane.xlu0 %2865
      %v2867 = vrcp.pop %v2866
      %v2868 = vmul.f32 %v2863, %v2867
      %v2870 = vsel %vm807, %v2868, 0
      %2872 = vmatprep.subr.mxu0 0.0
      %2873 = vmatpush1.msra.mxu0 %v2777
      %2874 = vmatprep.subr.mxu0 0.0
      %2875 = vmatpush1.msra.mxu0 0.0
      %2876 = vmatprep.subr.mxu0 0.0
      %2877 = vmatpush1.msra.mxu0 0.0
      %2878 = vmatprep.subr.mxu0 0.0
      %2879 = vmatpush1.msra.mxu0 0.0
      %2880 = vmatprep.subr.mxu0 0.0
      %2881 = vmatpush1.msra.mxu0 0.0
      %2882 = vmatprep.subr.mxu0 0.0
      %2883 = vmatpush1.msra.mxu0 0.0
      %2884 = vmatprep.subr.mxu0 0.0
      %2885 = vmatpush1.msra.mxu0 0.0
      %2886 = vmatprep.subr.mxu0 0.0
      %2887 = vmatpush1.msra.mxu0 0.0
      %2888 = vmatprep.subr.mxu0 0.0
      %2889 = vmatpush1.msra.mxu0 0.0
      %2890 = vmatprep.subr.mxu0 0.0
      %2891 = vmatpush1.msra.mxu0 0.0
      %2892 = vmatprep.subr.mxu0 0.0
      %2893 = vmatpush1.msra.mxu0 0.0
      %2894 = vmatprep.subr.mxu0 0.0
      %2895 = vmatpush1.msra.mxu0 0.0
      %2896 = vmatprep.subr.mxu0 0.0
      %2897 = vmatpush1.msra.mxu0 0.0
      %2898 = vmatprep.subr.mxu0 0.0
      %2899 = vmatpush1.msra.mxu0 0.0
      %2900 = vmatprep.subr.mxu0 0.0
      %2901 = vmatpush1.msra.mxu0 0.0
      %2902 = vmatprep.subr.mxu0 0.0
      %2903 = vmatpush1.msra.mxu0 0.0
      %2904 = vmatprep.subr.mxu0 0.0
      %2905 = vmatpush1.msra.mxu0 0.0
      %2906 = vmatprep.subr.mxu0 0.0
      %2907 = vmatpush1.msra.mxu0 0.0
      %2908 = vmatprep.subr.mxu0 0.0
      %2909 = vmatpush1.msra.mxu0 0.0
      %2910 = vmatprep.subr.mxu0 0.0
      %2911 = vmatpush1.msra.mxu0 0.0
      %2912 = vmatprep.subr.mxu0 0.0
      %2913 = vmatpush1.msra.mxu0 0.0
      %2914 = vmatprep.subr.mxu0 0.0
      %2915 = vmatpush1.msra.mxu0 0.0
      %2916 = vmatprep.subr.mxu0 0.0
      %2917 = vmatpush1.msra.mxu0 0.0
      %2918 = vmatprep.subr.mxu0 0.0
      %2919 = vmatpush1.msra.mxu0 0.0
      %2920 = vmatprep.subr.mxu0 0.0
      %2921 = vmatpush1.msra.mxu0 0.0
      %2922 = vmatprep.subr.mxu0 0.0
      %2923 = vmatpush1.msra.mxu0 0.0
      %2924 = vmatprep.subr.mxu0 0.0
      %2925 = vmatpush1.msra.mxu0 0.0
      %2926 = vmatprep.subr.mxu0 0.0
      %2927 = vmatpush1.msra.mxu0 0.0
      %2928 = vmatprep.subr.mxu0 0.0
      %2929 = vmatpush1.msra.mxu0 0.0
      %2930 = vmatprep.subr.mxu0 0.0
      %2931 = vmatpush1.msra.mxu0 0.0
      %2932 = vmatprep.subr.mxu0 0.0
      %2933 = vmatpush1.msra.mxu0 0.0
      %2934 = vmatprep.subr.mxu0 0.0
      %2935 = vmatpush1.msra.mxu0 0.0
      %2936 = vmatprep.mubr.f32.mxu0 0.0
      %2937 = vmatmul.mubr.f32.gmra.mrb[0].mxu0 %v2870
      %v2938 = vpop.f32.mrb[0].mxu0
      %v2939 = vadd.f32 0.0, %v2938
      %v2940 = vpop.f32.mrb[0].mxu0
      %2941 = vdwg.mxu0
      %s2942 = scalar_lea.vmem %s5, 416
      %v2943 = vld [vmem:[%s2942] sm:$0xff]
      %v2944 = vld [vmem:[%s2942 + $0x8] sm:$0xff]
      %v2945 = vld [vmem:[%s2942 + $0x10] sm:$0xff]
      %v2946 = vld [vmem:[%s2942 + $0x18] sm:$0xff]
      %s2947 = scalar_lea.vmem %s6, 13
      %v2948 = vld [vmem:[%s2947] sm:$0x1]
      %v2950 = vlaneseq
      %v2951 = vshrl.u32 %v2950, 7
      %v2952 = vsub.s32 0, %v2951
      %v2953 = vrot.slane %v2948, %v2952
      %2955 = vmatprep.subr.mxu0 0.0
      %2956 = vmatpush1.msra.mxu0 %v2943
      %2957 = vmatprep.subr.mxu0 0.0
      %2958 = vmatpush1.msra.mxu0 %v2944
      %2959 = vmatprep.subr.mxu0 0.0
      %2960 = vmatpush1.msra.mxu0 %v2945
      %2961 = vmatprep.subr.mxu0 0.0
      %2962 = vmatpush1.msra.mxu0 %v2946
      %2963 = vmatprep.subr.mxu0 0.0
      %2964 = vmatpush1.msra.mxu0 0.0
      %2965 = vmatprep.subr.mxu0 0.0
      %2966 = vmatpush1.msra.mxu0 0.0
      %2967 = vmatprep.subr.mxu0 0.0
      %2968 = vmatpush1.msra.mxu0 0.0
      %2969 = vmatprep.subr.mxu0 0.0
      %2970 = vmatpush1.msra.mxu0 0.0
      %2971 = vmatprep.subr.mxu0 0.0
      %2972 = vmatpush1.msra.mxu0 0.0
      %2973 = vmatprep.subr.mxu0 0.0
      %2974 = vmatpush1.msra.mxu0 0.0
      %2975 = vmatprep.subr.mxu0 0.0
      %2976 = vmatpush1.msra.mxu0 0.0
      %2977 = vmatprep.subr.mxu0 0.0
      %2978 = vmatpush1.msra.mxu0 0.0
      %2979 = vmatprep.subr.mxu0 0.0
      %2980 = vmatpush1.msra.mxu0 0.0
      %2981 = vmatprep.subr.mxu0 0.0
      %2982 = vmatpush1.msra.mxu0 0.0
      %2983 = vmatprep.subr.mxu0 0.0
      %2984 = vmatpush1.msra.mxu0 0.0
      %2985 = vmatprep.subr.mxu0 0.0
      %2986 = vmatpush1.msra.mxu0 0.0
      %2987 = vmatprep.subr.mxu0 0.0
      %2988 = vmatpush1.msra.mxu0 0.0
      %2989 = vmatprep.subr.mxu0 0.0
      %2990 = vmatpush1.msra.mxu0 0.0
      %2991 = vmatprep.subr.mxu0 0.0
      %2992 = vmatpush1.msra.mxu0 0.0
      %2993 = vmatprep.subr.mxu0 0.0
      %2994 = vmatpush1.msra.mxu0 0.0
      %2995 = vmatprep.subr.mxu0 0.0
      %2996 = vmatpush1.msra.mxu0 0.0
      %2997 = vmatprep.subr.mxu0 0.0
      %2998 = vmatpush1.msra.mxu0 0.0
      %2999 = vmatprep.subr.mxu0 0.0
      %3000 = vmatpush1.msra.mxu0 0.0
      %3001 = vmatprep.subr.mxu0 0.0
      %3002 = vmatpush1.msra.mxu0 0.0
      %3003 = vmatprep.subr.mxu0 0.0
      %3004 = vmatpush1.msra.mxu0 0.0
      %3005 = vmatprep.subr.mxu0 0.0
      %3006 = vmatpush1.msra.mxu0 0.0
      %3007 = vmatprep.subr.mxu0 0.0
      %3008 = vmatpush1.msra.mxu0 0.0
      %3009 = vmatprep.subr.mxu0 0.0
      %3010 = vmatpush1.msra.mxu0 0.0
      %3011 = vmatprep.subr.mxu0 0.0
      %3012 = vmatpush1.msra.mxu0 0.0
      %3013 = vmatprep.subr.mxu0 0.0
      %3014 = vmatpush1.msra.mxu0 0.0
      %3015 = vmatprep.subr.mxu0 0.0
      %3016 = vmatpush1.msra.mxu0 0.0
      %3017 = vmatprep.subr.mxu0 0.0
      %3018 = vmatpush1.msra.mxu0 0.0
      %3019 = vmatprep.mubr.f32.mxu0 0.0
      %3020 = vmatmul.mubr.f32.gmra.mrb[0].mxu0 %v2542
      %v3021 = vpop.f32.mrb[0].mxu0
      %v3022 = vadd.f32 %v2953, %v3021
      %v3023 = vpop.f32.mrb[0].mxu0
      %3024 = vdwg.mxu0
      %s3025 = scalar_lea.vmem %s5, 544
      %v3026 = vld [vmem:[%s3025] sm:$0xff]
      %v3027 = vld [vmem:[%s3025 + $0x8] sm:$0xff]
      %v3028 = vld [vmem:[%s3025 + $0x10] sm:$0xff]
      %v3029 = vld [vmem:[%s3025 + $0x18] sm:$0xff]
      %s3030 = scalar_lea.vmem %s6, 17
      %v3031 = vld [vmem:[%s3030] sm:$0x1]
      %v3033 = vlaneseq
      %v3034 = vshrl.u32 %v3033, 7
      %v3035 = vsub.s32 0, %v3034
      %v3036 = vrot.slane %v3031, %v3035
      %3038 = vmatprep.subr.mxu0 0.0
      %3039 = vmatpush1.msra.mxu0 %v3026
      %3040 = vmatprep.subr.mxu0 0.0
      %3041 = vmatpush1.msra.mxu0 %v3027
      %3042 = vmatprep.subr.mxu0 0.0
      %3043 = vmatpush1.msra.mxu0 %v3028
      %3044 = vmatprep.subr.mxu0 0.0
      %3045 = vmatpush1.msra.mxu0 %v3029
      %3046 = vmatprep.subr.mxu0 0.0
      %3047 = vmatpush1.msra.mxu0 0.0
      %3048 = vmatprep.subr.mxu0 0.0
      %3049 = vmatpush1.msra.mxu0 0.0
      %3050 = vmatprep.subr.mxu0 0.0
      %3051 = vmatpush1.msra.mxu0 0.0
      %3052 = vmatprep.subr.mxu0 0.0
      %3053 = vmatpush1.msra.mxu0 0.0
      %3054 = vmatprep.subr.mxu0 0.0
      %3055 = vmatpush1.msra.mxu0 0.0
      %3056 = vmatprep.subr.mxu0 0.0
      %3057 = vmatpush1.msra.mxu0 0.0
      %3058 = vmatprep.subr.mxu0 0.0
      %3059 = vmatpush1.msra.mxu0 0.0
      %3060 = vmatprep.subr.mxu0 0.0
      %3061 = vmatpush1.msra.mxu0 0.0
      %3062 = vmatprep.subr.mxu0 0.0
      %3063 = vmatpush1.msra.mxu0 0.0
      %3064 = vmatprep.subr.mxu0 0.0
      %3065 = vmatpush1.msra.mxu0 0.0
      %3066 = vmatprep.subr.mxu0 0.0
      %3067 = vmatpush1.msra.mxu0 0.0
      %3068 = vmatprep.subr.mxu0 0.0
      %3069 = vmatpush1.msra.mxu0 0.0
      %3070 = vmatprep.subr.mxu0 0.0
      %3071 = vmatpush1.msra.mxu0 0.0
      %3072 = vmatprep.subr.mxu0 0.0
      %3073 = vmatpush1.msra.mxu0 0.0
      %3074 = vmatprep.subr.mxu0 0.0
      %3075 = vmatpush1.msra.mxu0 0.0
      %3076 = vmatprep.subr.mxu0 0.0
      %3077 = vmatpush1.msra.mxu0 0.0
      %3078 = vmatprep.subr.mxu0 0.0
      %3079 = vmatpush1.msra.mxu0 0.0
      %3080 = vmatprep.subr.mxu0 0.0
      %3081 = vmatpush1.msra.mxu0 0.0
      %3082 = vmatprep.subr.mxu0 0.0
      %3083 = vmatpush1.msra.mxu0 0.0
      %3084 = vmatprep.subr.mxu0 0.0
      %3085 = vmatpush1.msra.mxu0 0.0
      %3086 = vmatprep.subr.mxu0 0.0
      %3087 = vmatpush1.msra.mxu0 0.0
      %3088 = vmatprep.subr.mxu0 0.0
      %3089 = vmatpush1.msra.mxu0 0.0
      %3090 = vmatprep.subr.mxu0 0.0
      %3091 = vmatpush1.msra.mxu0 0.0
      %3092 = vmatprep.subr.mxu0 0.0
      %3093 = vmatpush1.msra.mxu0 0.0
      %3094 = vmatprep.subr.mxu0 0.0
      %3095 = vmatpush1.msra.mxu0 0.0
      %3096 = vmatprep.subr.mxu0 0.0
      %3097 = vmatpush1.msra.mxu0 0.0
      %3098 = vmatprep.subr.mxu0 0.0
      %3099 = vmatpush1.msra.mxu0 0.0
      %3100 = vmatprep.subr.mxu0 0.0
      %3101 = vmatpush1.msra.mxu0 0.0
      %3102 = vmatprep.mubr.f32.mxu0 0.0
      %3103 = vmatmul.mubr.f32.gmra.mrb[0].mxu0 %v2542
      %v3104 = vpop.f32.mrb[0].mxu0
      %v3105 = vadd.f32 %v3036, %v3104
      %v3106 = vpop.f32.mrb[0].mxu0
      %3107 = vdwg.mxu0
      %s3108 = scalar_lea.vmem %s5, 672
      %v3109 = vld [vmem:[%s3108] sm:$0xff]
      %v3110 = vld [vmem:[%s3108 + $0x8] sm:$0xff]
      %v3111 = vld [vmem:[%s3108 + $0x10] sm:$0xff]
      %v3112 = vld [vmem:[%s3108 + $0x18] sm:$0xff]
      %s3113 = scalar_lea.vmem %s6, 21
      %v3114 = vld [vmem:[%s3113] sm:$0x1]
      %v3116 = vlaneseq
      %v3117 = vshrl.u32 %v3116, 7
      %v3118 = vsub.s32 0, %v3117
      %v3119 = vrot.slane %v3114, %v3118
      %3121 = vmatprep.subr.mxu0 0.0
      %3122 = vmatpush1.msra.mxu0 %v3109
      %3123 = vmatprep.subr.mxu0 0.0
      %3124 = vmatpush1.msra.mxu0 %v3110
      %3125 = vmatprep.subr.mxu0 0.0
      %3126 = vmatpush1.msra.mxu0 %v3111
      %3127 = vmatprep.subr.mxu0 0.0
      %3128 = vmatpush1.msra.mxu0 %v3112
      %3129 = vmatprep.subr.mxu0 0.0
      %3130 = vmatpush1.msra.mxu0 0.0
      %3131 = vmatprep.subr.mxu0 0.0
      %3132 = vmatpush1.msra.mxu0 0.0
      %3133 = vmatprep.subr.mxu0 0.0
      %3134 = vmatpush1.msra.mxu0 0.0
      %3135 = vmatprep.subr.mxu0 0.0
      %3136 = vmatpush1.msra.mxu0 0.0
      %3137 = vmatprep.subr.mxu0 0.0
      %3138 = vmatpush1.msra.mxu0 0.0
      %3139 = vmatprep.subr.mxu0 0.0
      %3140 = vmatpush1.msra.mxu0 0.0
      %3141 = vmatprep.subr.mxu0 0.0
      %3142 = vmatpush1.msra.mxu0 0.0
      %3143 = vmatprep.subr.mxu0 0.0
      %3144 = vmatpush1.msra.mxu0 0.0
      %3145 = vmatprep.subr.mxu0 0.0
      %3146 = vmatpush1.msra.mxu0 0.0
      %3147 = vmatprep.subr.mxu0 0.0
      %3148 = vmatpush1.msra.mxu0 0.0
      %3149 = vmatprep.subr.mxu0 0.0
      %3150 = vmatpush1.msra.mxu0 0.0
      %3151 = vmatprep.subr.mxu0 0.0
      %3152 = vmatpush1.msra.mxu0 0.0
      %3153 = vmatprep.subr.mxu0 0.0
      %3154 = vmatpush1.msra.mxu0 0.0
      %3155 = vmatprep.subr.mxu0 0.0
      %3156 = vmatpush1.msra.mxu0 0.0
      %3157 = vmatprep.subr.mxu0 0.0
      %3158 = vmatpush1.msra.mxu0 0.0
      %3159 = vmatprep.subr.mxu0 0.0
      %3160 = vmatpush1.msra.mxu0 0.0
      %3161 = vmatprep.subr.mxu0 0.0
      %3162 = vmatpush1.msra.mxu0 0.0
      %3163 = vmatprep.subr.mxu0 0.0
      %3164 = vmatpush1.msra.mxu0 0.0
      %3165 = vmatprep.subr.mxu0 0.0
      %3166 = vmatpush1.msra.mxu0 0.0
      %3167 = vmatprep.subr.mxu0 0.0
      %3168 = vmatpush1.msra.mxu0 0.0
      %3169 = vmatprep.subr.mxu0 0.0
      %3170 = vmatpush1.msra.mxu0 0.0
      %3171 = vmatprep.subr.mxu0 0.0
      %3172 = vmatpush1.msra.mxu0 0.0
      %3173 = vmatprep.subr.mxu0 0.0
      %3174 = vmatpush1.msra.mxu0 0.0
      %3175 = vmatprep.subr.mxu0 0.0
      %3176 = vmatpush1.msra.mxu0 0.0
      %3177 = vmatprep.subr.mxu0 0.0
      %3178 = vmatpush1.msra.mxu0 0.0
      %3179 = vmatprep.subr.mxu0 0.0
      %3180 = vmatpush1.msra.mxu0 0.0
      %3181 = vmatprep.subr.mxu0 0.0
      %3182 = vmatpush1.msra.mxu0 0.0
      %3183 = vmatprep.subr.mxu0 0.0
      %3184 = vmatpush1.msra.mxu0 0.0
      %3185 = vmatprep.mubr.f32.mxu0 0.0
      %3186 = vmatmul.mubr.f32.gmra.mrb[0].mxu0 %v2542
      %v3187 = vpop.f32.mrb[0].mxu0
      %v3188 = vadd.f32 %v3119, %v3187
      %v3189 = vpop.f32.mrb[0].mxu0
      %3190 = vdwg.mxu0
      %v3192 = vsel %vm807, %v3022, 0
      %v3195 = vsel %vm807, %v3105, 0
      %3197 = vmatprep.subr.mxu0 0.0
      %3198 = vmatpush1.xpose.msra.mxu0 %v3195
      %3199 = vmatprep.subr.mxu0 0.0
      %3200 = vmatpush1.xpose.msra.mxu0 0.0
      %3201 = vmatprep.subr.mxu0 0.0
      %3202 = vmatpush1.xpose.msra.mxu0 0.0
      %3203 = vmatprep.subr.mxu0 0.0
      %3204 = vmatpush1.xpose.msra.mxu0 0.0
      %3205 = vmatprep.subr.mxu0 0.0
      %3206 = vmatpush1.xpose.msra.mxu0 0.0
      %3207 = vmatprep.subr.mxu0 0.0
      %3208 = vmatpush1.xpose.msra.mxu0 0.0
      %3209 = vmatprep.subr.mxu0 0.0
      %3210 = vmatpush1.xpose.msra.mxu0 0.0
      %3211 = vmatprep.subr.mxu0 0.0
      %3212 = vmatpush1.xpose.msra.mxu0 0.0
      %3213 = vmatprep.subr.mxu0 0.0
      %3214 = vmatpush1.xpose.msra.mxu0 0.0
      %3215 = vmatprep.subr.mxu0 0.0
      %3216 = vmatpush1.xpose.msra.mxu0 0.0
      %3217 = vmatprep.subr.mxu0 0.0
      %3218 = vmatpush1.xpose.msra.mxu0 0.0
      %3219 = vmatprep.subr.mxu0 0.0
      %3220 = vmatpush1.xpose.msra.mxu0 0.0
      %3221 = vmatprep.subr.mxu0 0.0
      %3222 = vmatpush1.xpose.msra.mxu0 0.0
      %3223 = vmatprep.subr.mxu0 0.0
      %3224 = vmatpush1.xpose.msra.mxu0 0.0
      %3225 = vmatprep.subr.mxu0 0.0
      %3226 = vmatpush1.xpose.msra.mxu0 0.0
      %3227 = vmatprep.subr.mxu0 0.0
      %3228 = vmatpush1.xpose.msra.mxu0 0.0
      %3229 = vmatprep.subr.mxu0 0.0
      %3230 = vmatpush1.xpose.msra.mxu0 0.0
      %3231 = vmatprep.subr.mxu0 0.0
      %3232 = vmatpush1.xpose.msra.mxu0 0.0
      %3233 = vmatprep.subr.mxu0 0.0
      %3234 = vmatpush1.xpose.msra.mxu0 0.0
      %3235 = vmatprep.subr.mxu0 0.0
      %3236 = vmatpush1.xpose.msra.mxu0 0.0
      %3237 = vmatprep.subr.mxu0 0.0
      %3238 = vmatpush1.xpose.msra.mxu0 0.0
      %3239 = vmatprep.subr.mxu0 0.0
      %3240 = vmatpush1.xpose.msra.mxu0 0.0
      %3241 = vmatprep.subr.mxu0 0.0
      %3242 = vmatpush1.xpose.msra.mxu0 0.0
      %3243 = vmatprep.subr.mxu0 0.0
      %3244 = vmatpush1.xpose.msra.mxu0 0.0
      %3245 = vmatprep.subr.mxu0 0.0
      %3246 = vmatpush1.xpose.msra.mxu0 0.0
      %3247 = vmatprep.subr.mxu0 0.0
      %3248 = vmatpush1.xpose.msra.mxu0 0.0
      %3249 = vmatprep.subr.mxu0 0.0
      %3250 = vmatpush1.xpose.msra.mxu0 0.0
      %3251 = vmatprep.subr.mxu0 0.0
      %3252 = vmatpush1.xpose.msra.mxu0 0.0
      %3253 = vmatprep.subr.mxu0 0.0
      %3254 = vmatpush1.xpose.msra.mxu0 0.0
      %3255 = vmatprep.subr.mxu0 0.0
      %3256 = vmatpush1.xpose.msra.mxu0 0.0
      %3257 = vmatprep.subr.mxu0 0.0
      %3258 = vmatpush1.xpose.msra.mxu0 0.0
      %3259 = vmatprep.subr.mxu0 0.0
      %3260 = vmatpush1.xpose.msra.mxu0 0.0
      %3261 = vmatprep.mubr.f32.mxu0 0.0
      %3262 = vmatmul.mubr.f32.gmra.mrb[0].mxu0 %v3192
      %v3263 = vpop.f32.mrb[0].mxu0
      %v3264 = vadd.f32 0.0, %v3263
      %v3265 = vpop.f32.mrb[0].mxu0
      %3266 = vdwg.mxu0
      %v3267 = vmul.f32 %v3264, 0.35355338
      %v3268 = vadd.f32 %v3267, %v889
      %v3269 = vsel %vm807, %v3268, -inf
      %3270 = vmax.xlane.f32.xlu0 %v3269
      %v3271 = vpop.xlane.xlu0 %3270
      %v3272 = vsub.f32 %v3268, %v3271
      %v3273 = vmul.f32 %v3272, 1.442695
      %v3274 = vpow.pop %v3273
      %v3275 = vsel %vm807, %v3274, 0.0
      %3276 = vadd.xlane.f32.xlu0 %v3275
      %v3277 = vpop.xlane.xlu0 %3276
      %v3278 = vrcp.pop %v3277
      %v3279 = vmul.f32 %v3274, %v3278
      %v3281 = vsel %vm807, %v3279, 0
      %3283 = vmatprep.subr.mxu0 0.0
      %3284 = vmatpush1.msra.mxu0 %v3188
      %3285 = vmatprep.subr.mxu0 0.0
      %3286 = vmatpush1.msra.mxu0 0.0
      %3287 = vmatprep.subr.mxu0 0.0
      %3288 = vmatpush1.msra.mxu0 0.0
      %3289 = vmatprep.subr.mxu0 0.0
      %3290 = vmatpush1.msra.mxu0 0.0
      %3291 = vmatprep.subr.mxu0 0.0
      %3292 = vmatpush1.msra.mxu0 0.0
      %3293 = vmatprep.subr.mxu0 0.0
      %3294 = vmatpush1.msra.mxu0 0.0
      %3295 = vmatprep.subr.mxu0 0.0
      %3296 = vmatpush1.msra.mxu0 0.0
      %3297 = vmatprep.subr.mxu0 0.0
      %3298 = vmatpush1.msra.mxu0 0.0
      %3299 = vmatprep.subr.mxu0 0.0
      %3300 = vmatpush1.msra.mxu0 0.0
      %3301 = vmatprep.subr.mxu0 0.0
      %3302 = vmatpush1.msra.mxu0 0.0
      %3303 = vmatprep.subr.mxu0 0.0
      %3304 = vmatpush1.msra.mxu0 0.0
      %3305 = vmatprep.subr.mxu0 0.0
      %3306 = vmatpush1.msra.mxu0 0.0
      %3307 = vmatprep.subr.mxu0 0.0
      %3308 = vmatpush1.msra.mxu0 0.0
      %3309 = vmatprep.subr.mxu0 0.0
      %3310 = vmatpush1.msra.mxu0 0.0
      %3311 = vmatprep.subr.mxu0 0.0
      %3312 = vmatpush1.msra.mxu0 0.0
      %3313 = vmatprep.subr.mxu0 0.0
      %3314 = vmatpush1.msra.mxu0 0.0
      %3315 = vmatprep.subr.mxu0 0.0
      %3316 = vmatpush1.msra.mxu0 0.0
      %3317 = vmatprep.subr.mxu0 0.0
      %3318 = vmatpush1.msra.mxu0 0.0
      %3319 = vmatprep.subr.mxu0 0.0
      %3320 = vmatpush1.msra.mxu0 0.0
      %3321 = vmatprep.subr.mxu0 0.0
      %3322 = vmatpush1.msra.mxu0 0.0
      %3323 = vmatprep.subr.mxu0 0.0
      %3324 = vmatpush1.msra.mxu0 0.0
      %3325 = vmatprep.subr.mxu0 0.0
      %3326 = vmatpush1.msra.mxu0 0.0
      %3327 = vmatprep.subr.mxu0 0.0
      %3328 = vmatpush1.msra.mxu0 0.0
      %3329 = vmatprep.subr.mxu0 0.0
      %3330 = vmatpush1.msra.mxu0 0.0
      %3331 = vmatprep.subr.mxu0 0.0
      %3332 = vmatpush1.msra.mxu0 0.0
      %3333 = vmatprep.subr.mxu0 0.0
      %3334 = vmatpush1.msra.mxu0 0.0
      %3335 = vmatprep.subr.mxu0 0.0
      %3336 = vmatpush1.msra.mxu0 0.0
      %3337 = vmatprep.subr.mxu0 0.0
      %3338 = vmatpush1.msra.mxu0 0.0
      %3339 = vmatprep.subr.mxu0 0.0
      %3340 = vmatpush1.msra.mxu0 0.0
      %3341 = vmatprep.subr.mxu0 0.0
      %3342 = vmatpush1.msra.mxu0 0.0
      %3343 = vmatprep.subr.mxu0 0.0
      %3344 = vmatpush1.msra.mxu0 0.0
      %3345 = vmatprep.subr.mxu0 0.0
      %3346 = vmatpush1.msra.mxu0 0.0
      %3347 = vmatprep.mubr.f32.mxu0 0.0
      %3348 = vmatmul.mubr.f32.gmra.mrb[0].mxu0 %v3281
      %v3349 = vpop.f32.mrb[0].mxu0
      %v3350 = vadd.f32 0.0, %v3349
      %v3351 = vpop.f32.mrb[0].mxu0
      %3352 = vdwg.mxu0
      %s3353 = scalar_lea.vmem %s5, 448
      %v3354 = vld [vmem:[%s3353] sm:$0xff]
      %v3355 = vld [vmem:[%s3353 + $0x8] sm:$0xff]
      %v3356 = vld [vmem:[%s3353 + $0x10] sm:$0xff]
      %v3357 = vld [vmem:[%s3353 + $0x18] sm:$0xff]
      %s3358 = scalar_lea.vmem %s6, 14
      %v3359 = vld [vmem:[%s3358] sm:$0x1]
      %v3361 = vlaneseq
      %v3362 = vshrl.u32 %v3361, 7
      %v3363 = vsub.s32 0, %v3362
      %v3364 = vrot.slane %v3359, %v3363
      %3366 = vmatprep.subr.mxu0 0.0
      %3367 = vmatpush1.msra.mxu0 %v3354
      %3368 = vmatprep.subr.mxu0 0.0
      %3369 = vmatpush1.msra.mxu0 %v3355
      %3370 = vmatprep.subr.mxu0 0.0
      %3371 = vmatpush1.msra.mxu0 %v3356
      %3372 = vmatprep.subr.mxu0 0.0
      %3373 = vmatpush1.msra.mxu0 %v3357
      %3374 = vmatprep.subr.mxu0 0.0
      %3375 = vmatpush1.msra.mxu0 0.0
      %3376 = vmatprep.subr.mxu0 0.0
      %3377 = vmatpush1.msra.mxu0 0.0
      %3378 = vmatprep.subr.mxu0 0.0
      %3379 = vmatpush1.msra.mxu0 0.0
      %3380 = vmatprep.subr.mxu0 0.0
      %3381 = vmatpush1.msra.mxu0 0.0
      %3382 = vmatprep.subr.mxu0 0.0
      %3383 = vmatpush1.msra.mxu0 0.0
      %3384 = vmatprep.subr.mxu0 0.0
      %3385 = vmatpush1.msra.mxu0 0.0
      %3386 = vmatprep.subr.mxu0 0.0
      %3387 = vmatpush1.msra.mxu0 0.0
      %3388 = vmatprep.subr.mxu0 0.0
      %3389 = vmatpush1.msra.mxu0 0.0
      %3390 = vmatprep.subr.mxu0 0.0
      %3391 = vmatpush1.msra.mxu0 0.0
      %3392 = vmatprep.subr.mxu0 0.0
      %3393 = vmatpush1.msra.mxu0 0.0
      %3394 = vmatprep.subr.mxu0 0.0
      %3395 = vmatpush1.msra.mxu0 0.0
      %3396 = vmatprep.subr.mxu0 0.0
      %3397 = vmatpush1.msra.mxu0 0.0
      %3398 = vmatprep.subr.mxu0 0.0
      %3399 = vmatpush1.msra.mxu0 0.0
      %3400 = vmatprep.subr.mxu0 0.0
      %3401 = vmatpush1.msra.mxu0 0.0
      %3402 = vmatprep.subr.mxu0 0.0
      %3403 = vmatpush1.msra.mxu0 0.0
      %3404 = vmatprep.subr.mxu0 0.0
      %3405 = vmatpush1.msra.mxu0 0.0
      %3406 = vmatprep.subr.mxu0 0.0
      %3407 = vmatpush1.msra.mxu0 0.0
      %3408 = vmatprep.subr.mxu0 0.0
      %3409 = vmatpush1.msra.mxu0 0.0
      %3410 = vmatprep.subr.mxu0 0.0
      %3411 = vmatpush1.msra.mxu0 0.0
      %3412 = vmatprep.subr.mxu0 0.0
      %3413 = vmatpush1.msra.mxu0 0.0
      %3414 = vmatprep.subr.mxu0 0.0
      %3415 = vmatpush1.msra.mxu0 0.0
      %3416 = vmatprep.subr.mxu0 0.0
      %3417 = vmatpush1.msra.mxu0 0.0
      %3418 = vmatprep.subr.mxu0 0.0
      %3419 = vmatpush1.msra.mxu0 0.0
      %3420 = vmatprep.subr.mxu0 0.0
      %3421 = vmatpush1.msra.mxu0 0.0
      %3422 = vmatprep.subr.mxu0 0.0
      %3423 = vmatpush1.msra.mxu0 0.0
      %3424 = vmatprep.subr.mxu0 0.0
      %3425 = vmatpush1.msra.mxu0 0.0
      %3426 = vmatprep.subr.mxu0 0.0
      %3427 = vmatpush1.msra.mxu0 0.0
      %3428 = vmatprep.subr.mxu0 0.0
      %3429 = vmatpush1.msra.mxu0 0.0
      %3430 = vmatprep.mubr.f32.mxu0 0.0
      %3431 = vmatmul.mubr.f32.gmra.mrb[0].mxu0 %v2542
      %v3432 = vpop.f32.mrb[0].mxu0
      %v3433 = vadd.f32 %v3364, %v3432
      %v3434 = vpop.f32.mrb[0].mxu0
      %3435 = vdwg.mxu0
      %s3436 = scalar_lea.vmem %s5, 576
      %v3437 = vld [vmem:[%s3436] sm:$0xff]
      %v3438 = vld [vmem:[%s3436 + $0x8] sm:$0xff]
      %v3439 = vld [vmem:[%s3436 + $0x10] sm:$0xff]
      %v3440 = vld [vmem:[%s3436 + $0x18] sm:$0xff]
      %s3441 = scalar_lea.vmem %s6, 18
      %v3442 = vld [vmem:[%s3441] sm:$0x1]
      %v3444 = vlaneseq
      %v3445 = vshrl.u32 %v3444, 7
      %v3446 = vsub.s32 0, %v3445
      %v3447 = vrot.slane %v3442, %v3446
      %3449 = vmatprep.subr.mxu0 0.0
      %3450 = vmatpush1.msra.mxu0 %v3437
      %3451 = vmatprep.subr.mxu0 0.0
      %3452 = vmatpush1.msra.mxu0 %v3438
      %3453 = vmatprep.subr.mxu0 0.0
      %3454 = vmatpush1.msra.mxu0 %v3439
      %3455 = vmatprep.subr.mxu0 0.0
      %3456 = vmatpush1.msra.mxu0 %v3440
      %3457 = vmatprep.subr.mxu0 0.0
      %3458 = vmatpush1.msra.mxu0 0.0
      %3459 = vmatprep.subr.mxu0 0.0
      %3460 = vmatpush1.msra.mxu0 0.0
      %3461 = vmatprep.subr.mxu0 0.0
      %3462 = vmatpush1.msra.mxu0 0.0
      %3463 = vmatprep.subr.mxu0 0.0
      %3464 = vmatpush1.msra.mxu0 0.0
      %3465 = vmatprep.subr.mxu0 0.0
      %3466 = vmatpush1.msra.mxu0 0.0
      %3467 = vmatprep.subr.mxu0 0.0
      %3468 = vmatpush1.msra.mxu0 0.0
      %3469 = vmatprep.subr.mxu0 0.0
      %3470 = vmatpush1.msra.mxu0 0.0
      %3471 = vmatprep.subr.mxu0 0.0
      %3472 = vmatpush1.msra.mxu0 0.0
      %3473 = vmatprep.subr.mxu0 0.0
      %3474 = vmatpush1.msra.mxu0 0.0
      %3475 = vmatprep.subr.mxu0 0.0
      %3476 = vmatpush1.msra.mxu0 0.0
      %3477 = vmatprep.subr.mxu0 0.0
      %3478 = vmatpush1.msra.mxu0 0.0
      %3479 = vmatprep.subr.mxu0 0.0
      %3480 = vmatpush1.msra.mxu0 0.0
      %3481 = vmatprep.subr.mxu0 0.0
      %3482 = vmatpush1.msra.mxu0 0.0
      %3483 = vmatprep.subr.mxu0 0.0
      %3484 = vmatpush1.msra.mxu0 0.0
      %3485 = vmatprep.subr.mxu0 0.0
      %3486 = vmatpush1.msra.mxu0 0.0
      %3487 = vmatprep.subr.mxu0 0.0
      %3488 = vmatpush1.msra.mxu0 0.0
      %3489 = vmatprep.subr.mxu0 0.0
      %3490 = vmatpush1.msra.mxu0 0.0
      %3491 = vmatprep.subr.mxu0 0.0
      %3492 = vmatpush1.msra.mxu0 0.0
      %3493 = vmatprep.subr.mxu0 0.0
      %3494 = vmatpush1.msra.mxu0 0.0
      %3495 = vmatprep.subr.mxu0 0.0
      %3496 = vmatpush1.msra.mxu0 0.0
      %3497 = vmatprep.subr.mxu0 0.0
      %3498 = vmatpush1.msra.mxu0 0.0
      %3499 = vmatprep.subr.mxu0 0.0
      %3500 = vmatpush1.msra.mxu0 0.0
      %3501 = vmatprep.subr.mxu0 0.0
      %3502 = vmatpush1.msra.mxu0 0.0
      %3503 = vmatprep.subr.mxu0 0.0
      %3504 = vmatpush1.msra.mxu0 0.0
      %3505 = vmatprep.subr.mxu0 0.0
      %3506 = vmatpush1.msra.mxu0 0.0
      %3507 = vmatprep.subr.mxu0 0.0
      %3508 = vmatpush1.msra.mxu0 0.0
      %3509 = vmatprep.subr.mxu0 0.0
      %3510 = vmatpush1.msra.mxu0 0.0
      %3511 = vmatprep.subr.mxu0 0.0
      %3512 = vmatpush1.msra.mxu0 0.0
      %3513 = vmatprep.mubr.f32.mxu0 0.0
      %3514 = vmatmul.mubr.f32.gmra.mrb[0].mxu0 %v2542
      %v3515 = vpop.f32.mrb[0].mxu0
      %v3516 = vadd.f32 %v3447, %v3515
      %v3517 = vpop.f32.mrb[0].mxu0
      %3518 = vdwg.mxu0
      %s3519 = scalar_lea.vmem %s5, 704
      %v3520 = vld [vmem:[%s3519] sm:$0xff]
      %v3521 = vld [vmem:[%s3519 + $0x8] sm:$0xff]
      %v3522 = vld [vmem:[%s3519 + $0x10] sm:$0xff]
      %v3523 = vld [vmem:[%s3519 + $0x18] sm:$0xff]
      %s3524 = scalar_lea.vmem %s6, 22
      %v3525 = vld [vmem:[%s3524] sm:$0x1]
      %v3527 = vlaneseq
      %v3528 = vshrl.u32 %v3527, 7
      %v3529 = vsub.s32 0, %v3528
      %v3530 = vrot.slane %v3525, %v3529
      %3532 = vmatprep.subr.mxu0 0.0
      %3533 = vmatpush1.msra.mxu0 %v3520
      %3534 = vmatprep.subr.mxu0 0.0
      %3535 = vmatpush1.msra.mxu0 %v3521
      %3536 = vmatprep.subr.mxu0 0.0
      %3537 = vmatpush1.msra.mxu0 %v3522
      %3538 = vmatprep.subr.mxu0 0.0
      %3539 = vmatpush1.msra.mxu0 %v3523
      %3540 = vmatprep.subr.mxu0 0.0
      %3541 = vmatpush1.msra.mxu0 0.0
      %3542 = vmatprep.subr.mxu0 0.0
      %3543 = vmatpush1.msra.mxu0 0.0
      %3544 = vmatprep.subr.mxu0 0.0
      %3545 = vmatpush1.msra.mxu0 0.0
      %3546 = vmatprep.subr.mxu0 0.0
      %3547 = vmatpush1.msra.mxu0 0.0
      %3548 = vmatprep.subr.mxu0 0.0
      %3549 = vmatpush1.msra.mxu0 0.0
      %3550 = vmatprep.subr.mxu0 0.0
      %3551 = vmatpush1.msra.mxu0 0.0
      %3552 = vmatprep.subr.mxu0 0.0
      %3553 = vmatpush1.msra.mxu0 0.0
      %3554 = vmatprep.subr.mxu0 0.0
      %3555 = vmatpush1.msra.mxu0 0.0
      %3556 = vmatprep.subr.mxu0 0.0
      %3557 = vmatpush1.msra.mxu0 0.0
      %3558 = vmatprep.subr.mxu0 0.0
      %3559 = vmatpush1.msra.mxu0 0.0
      %3560 = vmatprep.subr.mxu0 0.0
      %3561 = vmatpush1.msra.mxu0 0.0
      %3562 = vmatprep.subr.mxu0 0.0
      %3563 = vmatpush1.msra.mxu0 0.0
      %3564 = vmatprep.subr.mxu0 0.0
      %3565 = vmatpush1.msra.mxu0 0.0
      %3566 = vmatprep.subr.mxu0 0.0
      %3567 = vmatpush1.msra.mxu0 0.0
      %3568 = vmatprep.subr.mxu0 0.0
      %3569 = vmatpush1.msra.mxu0 0.0
      %3570 = vmatprep.subr.mxu0 0.0
      %3571 = vmatpush1.msra.mxu0 0.0
      %3572 = vmatprep.subr.mxu0 0.0
      %3573 = vmatpush1.msra.mxu0 0.0
      %3574 = vmatprep.subr.mxu0 0.0
      %3575 = vmatpush1.msra.mxu0 0.0
      %3576 = vmatprep.subr.mxu0 0.0
      %3577 = vmatpush1.msra.mxu0 0.0
      %3578 = vmatprep.subr.mxu0 0.0
      %3579 = vmatpush1.msra.mxu0 0.0
      %3580 = vmatprep.subr.mxu0 0.0
      %3581 = vmatpush1.msra.mxu0 0.0
      %3582 = vmatprep.subr.mxu0 0.0
      %3583 = vmatpush1.msra.mxu0 0.0
      %3584 = vmatprep.subr.mxu0 0.0
      %3585 = vmatpush1.msra.mxu0 0.0
      %3586 = vmatprep.subr.mxu0 0.0
      %3587 = vmatpush1.msra.mxu0 0.0
      %3588 = vmatprep.subr.mxu0 0.0
      %3589 = vmatpush1.msra.mxu0 0.0
      %3590 = vmatprep.subr.mxu0 0.0
      %3591 = vmatpush1.msra.mxu0 0.0
      %3592 = vmatprep.subr.mxu0 0.0
      %3593 = vmatpush1.msra.mxu0 0.0
      %3594 = vmatprep.subr.mxu0 0.0
      %3595 = vmatpush1.msra.mxu0 0.0
      %3596 = vmatprep.mubr.f32.mxu0 0.0
      %3597 = vmatmul.mubr.f32.gmra.mrb[0].mxu0 %v2542
      %v3598 = vpop.f32.mrb[0].mxu0
      %v3599 = vadd.f32 %v3530, %v3598
      %v3600 = vpop.f32.mrb[0].mxu0
      %3601 = vdwg.mxu0
      %v3603 = vsel %vm807, %v3433, 0
      %v3606 = vsel %vm807, %v3516, 0
      %3608 = vmatprep.subr.mxu0 0.0
      %3609 = vmatpush1.xpose.msra.mxu0 %v3606
      %3610 = vmatprep.subr.mxu0 0.0
      %3611 = vmatpush1.xpose.msra.mxu0 0.0
      %3612 = vmatprep.subr.mxu0 0.0
      %3613 = vmatpush1.xpose.msra.mxu0 0.0
      %3614 = vmatprep.subr.mxu0 0.0
      %3615 = vmatpush1.xpose.msra.mxu0 0.0
      %3616 = vmatprep.subr.mxu0 0.0
      %3617 = vmatpush1.xpose.msra.mxu0 0.0
      %3618 = vmatprep.subr.mxu0 0.0
      %3619 = vmatpush1.xpose.msra.mxu0 0.0
      %3620 = vmatprep.subr.mxu0 0.0
      %3621 = vmatpush1.xpose.msra.mxu0 0.0
      %3622 = vmatprep.subr.mxu0 0.0
      %3623 = vmatpush1.xpose.msra.mxu0 0.0
      %3624 = vmatprep.subr.mxu0 0.0
      %3625 = vmatpush1.xpose.msra.mxu0 0.0
      %3626 = vmatprep.subr.mxu0 0.0
      %3627 = vmatpush1.xpose.msra.mxu0 0.0
      %3628 = vmatprep.subr.mxu0 0.0
      %3629 = vmatpush1.xpose.msra.mxu0 0.0
      %3630 = vmatprep.subr.mxu0 0.0
      %3631 = vmatpush1.xpose.msra.mxu0 0.0
      %3632 = vmatprep.subr.mxu0 0.0
      %3633 = vmatpush1.xpose.msra.mxu0 0.0
      %3634 = vmatprep.subr.mxu0 0.0
      %3635 = vmatpush1.xpose.msra.mxu0 0.0
      %3636 = vmatprep.subr.mxu0 0.0
      %3637 = vmatpush1.xpose.msra.mxu0 0.0
      %3638 = vmatprep.subr.mxu0 0.0
      %3639 = vmatpush1.xpose.msra.mxu0 0.0
      %3640 = vmatprep.subr.mxu0 0.0
      %3641 = vmatpush1.xpose.msra.mxu0 0.0
      %3642 = vmatprep.subr.mxu0 0.0
      %3643 = vmatpush1.xpose.msra.mxu0 0.0
      %3644 = vmatprep.subr.mxu0 0.0
      %3645 = vmatpush1.xpose.msra.mxu0 0.0
      %3646 = vmatprep.subr.mxu0 0.0
      %3647 = vmatpush1.xpose.msra.mxu0 0.0
      %3648 = vmatprep.subr.mxu0 0.0
      %3649 = vmatpush1.xpose.msra.mxu0 0.0
      %3650 = vmatprep.subr.mxu0 0.0
      %3651 = vmatpush1.xpose.msra.mxu0 0.0
      %3652 = vmatprep.subr.mxu0 0.0
      %3653 = vmatpush1.xpose.msra.mxu0 0.0
      %3654 = vmatprep.subr.mxu0 0.0
      %3655 = vmatpush1.xpose.msra.mxu0 0.0
      %3656 = vmatprep.subr.mxu0 0.0
      %3657 = vmatpush1.xpose.msra.mxu0 0.0
      %3658 = vmatprep.subr.mxu0 0.0
      %3659 = vmatpush1.xpose.msra.mxu0 0.0
      %3660 = vmatprep.subr.mxu0 0.0
      %3661 = vmatpush1.xpose.msra.mxu0 0.0
      %3662 = vmatprep.subr.mxu0 0.0
      %3663 = vmatpush1.xpose.msra.mxu0 0.0
      %3664 = vmatprep.subr.mxu0 0.0
      %3665 = vmatpush1.xpose.msra.mxu0 0.0
      %3666 = vmatprep.subr.mxu0 0.0
      %3667 = vmatpush1.xpose.msra.mxu0 0.0
      %3668 = vmatprep.subr.mxu0 0.0
      %3669 = vmatpush1.xpose.msra.mxu0 0.0
      %3670 = vmatprep.subr.mxu0 0.0
      %3671 = vmatpush1.xpose.msra.mxu0 0.0
      %3672 = vmatprep.mubr.f32.mxu0 0.0
      %3673 = vmatmul.mubr.f32.gmra.mrb[0].mxu0 %v3603
      %v3674 = vpop.f32.mrb[0].mxu0
      %v3675 = vadd.f32 0.0, %v3674
      %v3676 = vpop.f32.mrb[0].mxu0
      %3677 = vdwg.mxu0
      %v3678 = vmul.f32 %v3675, 0.35355338
      %v3679 = vadd.f32 %v3678, %v889
      %v3680 = vsel %vm807, %v3679, -inf
      %3681 = vmax.xlane.f32.xlu0 %v3680
      %v3682 = vpop.xlane.xlu0 %3681
      %v3683 = vsub.f32 %v3679, %v3682
      %v3684 = vmul.f32 %v3683, 1.442695
      %v3685 = vpow.pop %v3684
      %v3686 = vsel %vm807, %v3685, 0.0
      %3687 = vadd.xlane.f32.xlu0 %v3686
      %v3688 = vpop.xlane.xlu0 %3687
      %v3689 = vrcp.pop %v3688
      %v3690 = vmul.f32 %v3685, %v3689
      %v3692 = vsel %vm807, %v3690, 0
      %3694 = vmatprep.subr.mxu0 0.0
      %3695 = vmatpush1.msra.mxu0 %v3599
      %3696 = vmatprep.subr.mxu0 0.0
      %3697 = vmatpush1.msra.mxu0 0.0
      %3698 = vmatprep.subr.mxu0 0.0
      %3699 = vmatpush1.msra.mxu0 0.0
      %3700 = vmatprep.subr.mxu0 0.0
      %3701 = vmatpush1.msra.mxu0 0.0
      %3702 = vmatprep.subr.mxu0 0.0
      %3703 = vmatpush1.msra.mxu0 0.0
      %3704 = vmatprep.subr.mxu0 0.0
      %3705 = vmatpush1.msra.mxu0 0.0
      %3706 = vmatprep.subr.mxu0 0.0
      %3707 = vmatpush1.msra.mxu0 0.0
      %3708 = vmatprep.subr.mxu0 0.0
      %3709 = vmatpush1.msra.mxu0 0.0
      %3710 = vmatprep.subr.mxu0 0.0
      %3711 = vmatpush1.msra.mxu0 0.0
      %3712 = vmatprep.subr.mxu0 0.0
      %3713 = vmatpush1.msra.mxu0 0.0
      %3714 = vmatprep.subr.mxu0 0.0
      %3715 = vmatpush1.msra.mxu0 0.0
      %3716 = vmatprep.subr.mxu0 0.0
      %3717 = vmatpush1.msra.mxu0 0.0
      %3718 = vmatprep.subr.mxu0 0.0
      %3719 = vmatpush1.msra.mxu0 0.0
      %3720 = vmatprep.subr.mxu0 0.0
      %3721 = vmatpush1.msra.mxu0 0.0
      %3722 = vmatprep.subr.mxu0 0.0
      %3723 = vmatpush1.msra.mxu0 0.0
      %3724 = vmatprep.subr.mxu0 0.0
      %3725 = vmatpush1.msra.mxu0 0.0
      %3726 = vmatprep.subr.mxu0 0.0
      %3727 = vmatpush1.msra.mxu0 0.0
      %3728 = vmatprep.subr.mxu0 0.0
      %3729 = vmatpush1.msra.mxu0 0.0
      %3730 = vmatprep.subr.mxu0 0.0
      %3731 = vmatpush1.msra.mxu0 0.0
      %3732 = vmatprep.subr.mxu0 0.0
      %3733 = vmatpush1.msra.mxu0 0.0
      %3734 = vmatprep.subr.mxu0 0.0
      %3735 = vmatpush1.msra.mxu0 0.0
      %3736 = vmatprep.subr.mxu0 0.0
      %3737 = vmatpush1.msra.mxu0 0.0
      %3738 = vmatprep.subr.mxu0 0.0
      %3739 = vmatpush1.msra.mxu0 0.0
      %3740 = vmatprep.subr.mxu0 0.0
      %3741 = vmatpush1.msra.mxu0 0.0
      %3742 = vmatprep.subr.mxu0 0.0
      %3743 = vmatpush1.msra.mxu0 0.0
      %3744 = vmatprep.subr.mxu0 0.0
      %3745 = vmatpush1.msra.mxu0 0.0
      %3746 = vmatprep.subr.mxu0 0.0
      %3747 = vmatpush1.msra.mxu0 0.0
      %3748 = vmatprep.subr.mxu0 0.0
      %3749 = vmatpush1.msra.mxu0 0.0
      %3750 = vmatprep.subr.mxu0 0.0
      %3751 = vmatpush1.msra.mxu0 0.0
      %3752 = vmatprep.subr.mxu0 0.0
      %3753 = vmatpush1.msra.mxu0 0.0
      %3754 = vmatprep.subr.mxu0 0.0
      %3755 = vmatpush1.msra.mxu0 0.0
      %3756 = vmatprep.subr.mxu0 0.0
      %3757 = vmatpush1.msra.mxu0 0.0
      %3758 = vmatprep.mubr.f32.mxu0 0.0
      %3759 = vmatmul.mubr.f32.gmra.mrb[0].mxu0 %v3692
      %v3760 = vpop.f32.mrb[0].mxu0
      %v3761 = vadd.f32 0.0, %v3760
      %v3762 = vpop.f32.mrb[0].mxu0
      %3763 = vdwg.mxu0
      %s3764 = scalar_lea.vmem %s5, 480
      %v3765 = vld [vmem:[%s3764] sm:$0xff]
      %v3766 = vld [vmem:[%s3764 + $0x8] sm:$0xff]
      %v3767 = vld [vmem:[%s3764 + $0x10] sm:$0xff]
      %v3768 = vld [vmem:[%s3764 + $0x18] sm:$0xff]
      %s3769 = scalar_lea.vmem %s6, 15
      %v3770 = vld [vmem:[%s3769] sm:$0x1]
      %v3772 = vlaneseq
      %v3773 = vshrl.u32 %v3772, 7
      %v3774 = vsub.s32 0, %v3773
      %v3775 = vrot.slane %v3770, %v3774
      %3777 = vmatprep.subr.mxu0 0.0
      %3778 = vmatpush1.msra.mxu0 %v3765
      %3779 = vmatprep.subr.mxu0 0.0
      %3780 = vmatpush1.msra.mxu0 %v3766
      %3781 = vmatprep.subr.mxu0 0.0
      %3782 = vmatpush1.msra.mxu0 %v3767
      %3783 = vmatprep.subr.mxu0 0.0
      %3784 = vmatpush1.msra.mxu0 %v3768
      %3785 = vmatprep.subr.mxu0 0.0
      %3786 = vmatpush1.msra.mxu0 0.0
      %3787 = vmatprep.subr.mxu0 0.0
      %3788 = vmatpush1.msra.mxu0 0.0
      %3789 = vmatprep.subr.mxu0 0.0
      %3790 = vmatpush1.msra.mxu0 0.0
      %3791 = vmatprep.subr.mxu0 0.0
      %3792 = vmatpush1.msra.mxu0 0.0
      %3793 = vmatprep.subr.mxu0 0.0
      %3794 = vmatpush1.msra.mxu0 0.0
      %3795 = vmatprep.subr.mxu0 0.0
      %3796 = vmatpush1.msra.mxu0 0.0
      %3797 = vmatprep.subr.mxu0 0.0
      %3798 = vmatpush1.msra.mxu0 0.0
      %3799 = vmatprep.subr.mxu0 0.0
      %3800 = vmatpush1.msra.mxu0 0.0
      %3801 = vmatprep.subr.mxu0 0.0
      %3802 = vmatpush1.msra.mxu0 0.0
      %3803 = vmatprep.subr.mxu0 0.0
      %3804 = vmatpush1.msra.mxu0 0.0
      %3805 = vmatprep.subr.mxu0 0.0
      %3806 = vmatpush1.msra.mxu0 0.0
      %3807 = vmatprep.subr.mxu0 0.0
      %3808 = vmatpush1.msra.mxu0 0.0
      %3809 = vmatprep.subr.mxu0 0.0
      %3810 = vmatpush1.msra.mxu0 0.0
      %3811 = vmatprep.subr.mxu0 0.0
      %3812 = vmatpush1.msra.mxu0 0.0
      %3813 = vmatprep.subr.mxu0 0.0
      %3814 = vmatpush1.msra.mxu0 0.0
      %3815 = vmatprep.subr.mxu0 0.0
      %3816 = vmatpush1.msra.mxu0 0.0
      %3817 = vmatprep.subr.mxu0 0.0
      %3818 = vmatpush1.msra.mxu0 0.0
      %3819 = vmatprep.subr.mxu0 0.0
      %3820 = vmatpush1.msra.mxu0 0.0
      %3821 = vmatprep.subr.mxu0 0.0
      %3822 = vmatpush1.msra.mxu0 0.0
      %3823 = vmatprep.subr.mxu0 0.0
      %3824 = vmatpush1.msra.mxu0 0.0
      %3825 = vmatprep.subr.mxu0 0.0
      %3826 = vmatpush1.msra.mxu0 0.0
      %3827 = vmatprep.subr.mxu0 0.0
      %3828 = vmatpush1.msra.mxu0 0.0
      %3829 = vmatprep.subr.mxu0 0.0
      %3830 = vmatpush1.msra.mxu0 0.0
      %3831 = vmatprep.subr.mxu0 0.0
      %3832 = vmatpush1.msra.mxu0 0.0
      %3833 = vmatprep.subr.mxu0 0.0
      %3834 = vmatpush1.msra.mxu0 0.0
      %3835 = vmatprep.subr.mxu0 0.0
      %3836 = vmatpush1.msra.mxu0 0.0
      %3837 = vmatprep.subr.mxu0 0.0
      %3838 = vmatpush1.msra.mxu0 0.0
      %3839 = vmatprep.subr.mxu0 0.0
      %3840 = vmatpush1.msra.mxu0 0.0
      %3841 = vmatprep.mubr.f32.mxu0 0.0
      %3842 = vmatmul.mubr.f32.gmra.mrb[0].mxu0 %v2542
      %v3843 = vpop.f32.mrb[0].mxu0
      %v3844 = vadd.f32 %v3775, %v3843
      %v3845 = vpop.f32.mrb[0].mxu0
      %3846 = vdwg.mxu0
      %s3847 = scalar_lea.vmem %s5, 608
      %v3848 = vld [vmem:[%s3847] sm:$0xff]
      %v3849 = vld [vmem:[%s3847 + $0x8] sm:$0xff]
      %v3850 = vld [vmem:[%s3847 + $0x10] sm:$0xff]
      %v3851 = vld [vmem:[%s3847 + $0x18] sm:$0xff]
      %s3852 = scalar_lea.vmem %s6, 19
      %v3853 = vld [vmem:[%s3852] sm:$0x1]
      %v3855 = vlaneseq
      %v3856 = vshrl.u32 %v3855, 7
      %v3857 = vsub.s32 0, %v3856
      %v3858 = vrot.slane %v3853, %v3857
      %3860 = vmatprep.subr.mxu0 0.0
      %3861 = vmatpush1.msra.mxu0 %v3848
      %3862 = vmatprep.subr.mxu0 0.0
      %3863 = vmatpush1.msra.mxu0 %v3849
      %3864 = vmatprep.subr.mxu0 0.0
      %3865 = vmatpush1.msra.mxu0 %v3850
      %3866 = vmatprep.subr.mxu0 0.0
      %3867 = vmatpush1.msra.mxu0 %v3851
      %3868 = vmatprep.subr.mxu0 0.0
      %3869 = vmatpush1.msra.mxu0 0.0
      %3870 = vmatprep.subr.mxu0 0.0
      %3871 = vmatpush1.msra.mxu0 0.0
      %3872 = vmatprep.subr.mxu0 0.0
      %3873 = vmatpush1.msra.mxu0 0.0
      %3874 = vmatprep.subr.mxu0 0.0
      %3875 = vmatpush1.msra.mxu0 0.0
      %3876 = vmatprep.subr.mxu0 0.0
      %3877 = vmatpush1.msra.mxu0 0.0
      %3878 = vmatprep.subr.mxu0 0.0
      %3879 = vmatpush1.msra.mxu0 0.0
      %3880 = vmatprep.subr.mxu0 0.0
      %3881 = vmatpush1.msra.mxu0 0.0
      %3882 = vmatprep.subr.mxu0 0.0
      %3883 = vmatpush1.msra.mxu0 0.0
      %3884 = vmatprep.subr.mxu0 0.0
      %3885 = vmatpush1.msra.mxu0 0.0
      %3886 = vmatprep.subr.mxu0 0.0
      %3887 = vmatpush1.msra.mxu0 0.0
      %3888 = vmatprep.subr.mxu0 0.0
      %3889 = vmatpush1.msra.mxu0 0.0
      %3890 = vmatprep.subr.mxu0 0.0
      %3891 = vmatpush1.msra.mxu0 0.0
      %3892 = vmatprep.subr.mxu0 0.0
      %3893 = vmatpush1.msra.mxu0 0.0
      %3894 = vmatprep.subr.mxu0 0.0
      %3895 = vmatpush1.msra.mxu0 0.0
      %3896 = vmatprep.subr.mxu0 0.0
      %3897 = vmatpush1.msra.mxu0 0.0
      %3898 = vmatprep.subr.mxu0 0.0
      %3899 = vmatpush1.msra.mxu0 0.0
      %3900 = vmatprep.subr.mxu0 0.0
      %3901 = vmatpush1.msra.mxu0 0.0
      %3902 = vmatprep.subr.mxu0 0.0
      %3903 = vmatpush1.msra.mxu0 0.0
      %3904 = vmatprep.subr.mxu0 0.0
      %3905 = vmatpush1.msra.mxu0 0.0
      %3906 = vmatprep.subr.mxu0 0.0
      %3907 = vmatpush1.msra.mxu0 0.0
      %3908 = vmatprep.subr.mxu0 0.0
      %3909 = vmatpush1.msra.mxu0 0.0
      %3910 = vmatprep.subr.mxu0 0.0
      %3911 = vmatpush1.msra.mxu0 0.0
      %3912 = vmatprep.subr.mxu0 0.0
      %3913 = vmatpush1.msra.mxu0 0.0
      %3914 = vmatprep.subr.mxu0 0.0
      %3915 = vmatpush1.msra.mxu0 0.0
      %3916 = vmatprep.subr.mxu0 0.0
      %3917 = vmatpush1.msra.mxu0 0.0
      %3918 = vmatprep.subr.mxu0 0.0
      %3919 = vmatpush1.msra.mxu0 0.0
      %3920 = vmatprep.subr.mxu0 0.0
      %3921 = vmatpush1.msra.mxu0 0.0
      %3922 = vmatprep.subr.mxu0 0.0
      %3923 = vmatpush1.msra.mxu0 0.0
      %3924 = vmatprep.mubr.f32.mxu0 0.0
      %3925 = vmatmul.mubr.f32.gmra.mrb[0].mxu0 %v2542
      %v3926 = vpop.f32.mrb[0].mxu0
      %v3927 = vadd.f32 %v3858, %v3926
      %v3928 = vpop.f32.mrb[0].mxu0
      %3929 = vdwg.mxu0
      %s3930 = scalar_lea.vmem %s5, 736
      %v3931 = vld [vmem:[%s3930] sm:$0xff]
      %v3932 = vld [vmem:[%s3930 + $0x8] sm:$0xff]
      %v3933 = vld [vmem:[%s3930 + $0x10] sm:$0xff]
      %v3934 = vld [vmem:[%s3930 + $0x18] sm:$0xff]
      %s3935 = scalar_lea.vmem %s6, 23
      %v3936 = vld [vmem:[%s3935] sm:$0x1]
      %v3938 = vlaneseq
      %v3939 = vshrl.u32 %v3938, 7
      %v3940 = vsub.s32 0, %v3939
      %v3941 = vrot.slane %v3936, %v3940
      %3943 = vmatprep.subr.mxu0 0.0
      %3944 = vmatpush1.msra.mxu0 %v3931
      %3945 = vmatprep.subr.mxu0 0.0
      %3946 = vmatpush1.msra.mxu0 %v3932
      %3947 = vmatprep.subr.mxu0 0.0
      %3948 = vmatpush1.msra.mxu0 %v3933
      %3949 = vmatprep.subr.mxu0 0.0
      %3950 = vmatpush1.msra.mxu0 %v3934
      %3951 = vmatprep.subr.mxu0 0.0
      %3952 = vmatpush1.msra.mxu0 0.0
      %3953 = vmatprep.subr.mxu0 0.0
      %3954 = vmatpush1.msra.mxu0 0.0
      %3955 = vmatprep.subr.mxu0 0.0
      %3956 = vmatpush1.msra.mxu0 0.0
      %3957 = vmatprep.subr.mxu0 0.0
      %3958 = vmatpush1.msra.mxu0 0.0
      %3959 = vmatprep.subr.mxu0 0.0
      %3960 = vmatpush1.msra.mxu0 0.0
      %3961 = vmatprep.subr.mxu0 0.0
      %3962 = vmatpush1.msra.mxu0 0.0
      %3963 = vmatprep.subr.mxu0 0.0
      %3964 = vmatpush1.msra.mxu0 0.0
      %3965 = vmatprep.subr.mxu0 0.0
      %3966 = vmatpush1.msra.mxu0 0.0
      %3967 = vmatprep.subr.mxu0 0.0
      %3968 = vmatpush1.msra.mxu0 0.0
      %3969 = vmatprep.subr.mxu0 0.0
      %3970 = vmatpush1.msra.mxu0 0.0
      %3971 = vmatprep.subr.mxu0 0.0
      %3972 = vmatpush1.msra.mxu0 0.0
      %3973 = vmatprep.subr.mxu0 0.0
      %3974 = vmatpush1.msra.mxu0 0.0
      %3975 = vmatprep.subr.mxu0 0.0
      %3976 = vmatpush1.msra.mxu0 0.0
      %3977 = vmatprep.subr.mxu0 0.0
      %3978 = vmatpush1.msra.mxu0 0.0
      %3979 = vmatprep.subr.mxu0 0.0
      %3980 = vmatpush1.msra.mxu0 0.0
      %3981 = vmatprep.subr.mxu0 0.0
      %3982 = vmatpush1.msra.mxu0 0.0
      %3983 = vmatprep.subr.mxu0 0.0
      %3984 = vmatpush1.msra.mxu0 0.0
      %3985 = vmatprep.subr.mxu0 0.0
      %3986 = vmatpush1.msra.mxu0 0.0
      %3987 = vmatprep.subr.mxu0 0.0
      %3988 = vmatpush1.msra.mxu0 0.0
      %3989 = vmatprep.subr.mxu0 0.0
      %3990 = vmatpush1.msra.mxu0 0.0
      %3991 = vmatprep.subr.mxu0 0.0
      %3992 = vmatpush1.msra.mxu0 0.0
      %3993 = vmatprep.subr.mxu0 0.0
      %3994 = vmatpush1.msra.mxu0 0.0
      %3995 = vmatprep.subr.mxu0 0.0
      %3996 = vmatpush1.msra.mxu0 0.0
      %3997 = vmatprep.subr.mxu0 0.0
      %3998 = vmatpush1.msra.mxu0 0.0
      %3999 = vmatprep.subr.mxu0 0.0
      %4000 = vmatpush1.msra.mxu0 0.0
      %4001 = vmatprep.subr.mxu0 0.0
      %4002 = vmatpush1.msra.mxu0 0.0
      %4003 = vmatprep.subr.mxu0 0.0
      %4004 = vmatpush1.msra.mxu0 0.0
      %4005 = vmatprep.subr.mxu0 0.0
      %4006 = vmatpush1.msra.mxu0 0.0
      %4007 = vmatprep.mubr.f32.mxu0 0.0
      %4008 = vmatmul.mubr.f32.gmra.mrb[0].mxu0 %v2542
      %v4009 = vpop.f32.mrb[0].mxu0
      %v4010 = vadd.f32 %v3941, %v4009
      %v4011 = vpop.f32.mrb[0].mxu0
      %4012 = vdwg.mxu0
      %v4014 = vsel %vm807, %v3844, 0
      %v4017 = vsel %vm807, %v3927, 0
      %4019 = vmatprep.subr.mxu0 0.0
      %4020 = vmatpush1.xpose.msra.mxu0 %v4017
      %4021 = vmatprep.subr.mxu0 0.0
      %4022 = vmatpush1.xpose.msra.mxu0 0.0
      %4023 = vmatprep.subr.mxu0 0.0
      %4024 = vmatpush1.xpose.msra.mxu0 0.0
      %4025 = vmatprep.subr.mxu0 0.0
      %4026 = vmatpush1.xpose.msra.mxu0 0.0
      %4027 = vmatprep.subr.mxu0 0.0
      %4028 = vmatpush1.xpose.msra.mxu0 0.0
      %4029 = vmatprep.subr.mxu0 0.0
      %4030 = vmatpush1.xpose.msra.mxu0 0.0
      %4031 = vmatprep.subr.mxu0 0.0
      %4032 = vmatpush1.xpose.msra.mxu0 0.0
      %4033 = vmatprep.subr.mxu0 0.0
      %4034 = vmatpush1.xpose.msra.mxu0 0.0
      %4035 = vmatprep.subr.mxu0 0.0
      %4036 = vmatpush1.xpose.msra.mxu0 0.0
      %4037 = vmatprep.subr.mxu0 0.0
      %4038 = vmatpush1.xpose.msra.mxu0 0.0
      %4039 = vmatprep.subr.mxu0 0.0
      %4040 = vmatpush1.xpose.msra.mxu0 0.0
      %4041 = vmatprep.subr.mxu0 0.0
      %4042 = vmatpush1.xpose.msra.mxu0 0.0
      %4043 = vmatprep.subr.mxu0 0.0
      %4044 = vmatpush1.xpose.msra.mxu0 0.0
      %4045 = vmatprep.subr.mxu0 0.0
      %4046 = vmatpush1.xpose.msra.mxu0 0.0
      %4047 = vmatprep.subr.mxu0 0.0
      %4048 = vmatpush1.xpose.msra.mxu0 0.0
      %4049 = vmatprep.subr.mxu0 0.0
      %4050 = vmatpush1.xpose.msra.mxu0 0.0
      %4051 = vmatprep.subr.mxu0 0.0
      %4052 = vmatpush1.xpose.msra.mxu0 0.0
      %4053 = vmatprep.subr.mxu0 0.0
      %4054 = vmatpush1.xpose.msra.mxu0 0.0
      %4055 = vmatprep.subr.mxu0 0.0
      %4056 = vmatpush1.xpose.msra.mxu0 0.0
      %4057 = vmatprep.subr.mxu0 0.0
      %4058 = vmatpush1.xpose.msra.mxu0 0.0
      %4059 = vmatprep.subr.mxu0 0.0
      %4060 = vmatpush1.xpose.msra.mxu0 0.0
      %4061 = vmatprep.subr.mxu0 0.0
      %4062 = vmatpush1.xpose.msra.mxu0 0.0
      %4063 = vmatprep.subr.mxu0 0.0
      %4064 = vmatpush1.xpose.msra.mxu0 0.0
      %4065 = vmatprep.subr.mxu0 0.0
      %4066 = vmatpush1.xpose.msra.mxu0 0.0
      %4067 = vmatprep.subr.mxu0 0.0
      %4068 = vmatpush1.xpose.msra.mxu0 0.0
      %4069 = vmatprep.subr.mxu0 0.0
      %4070 = vmatpush1.xpose.msra.mxu0 0.0
      %4071 = vmatprep.subr.mxu0 0.0
      %4072 = vmatpush1.xpose.msra.mxu0 0.0
      %4073 = vmatprep.subr.mxu0 0.0
      %4074 = vmatpush1.xpose.msra.mxu0 0.0
      %4075 = vmatprep.subr.mxu0 0.0
      %4076 = vmatpush1.xpose.msra.mxu0 0.0
      %4077 = vmatprep.subr.mxu0 0.0
      %4078 = vmatpush1.xpose.msra.mxu0 0.0
      %4079 = vmatprep.subr.mxu0 0.0
      %4080 = vmatpush1.xpose.msra.mxu0 0.0
      %4081 = vmatprep.subr.mxu0 0.0
      %4082 = vmatpush1.xpose.msra.mxu0 0.0
      %4083 = vmatprep.mubr.f32.mxu0 0.0
      %4084 = vmatmul.mubr.f32.gmra.mrb[0].mxu0 %v4014
      %v4085 = vpop.f32.mrb[0].mxu0
      %v4086 = vadd.f32 0.0, %v4085
      %v4087 = vpop.f32.mrb[0].mxu0
      %4088 = vdwg.mxu0
      %v4089 = vmul.f32 %v4086, 0.35355338
      %v4090 = vadd.f32 %v4089, %v889
      %v4091 = vsel %vm807, %v4090, -inf
      %4092 = vmax.xlane.f32.xlu0 %v4091
      %v4093 = vpop.xlane.xlu0 %4092
      %v4094 = vsub.f32 %v4090, %v4093
      %v4095 = vmul.f32 %v4094, 1.442695
      %v4096 = vpow.pop %v4095
      %v4097 = vsel %vm807, %v4096, 0.0
      %4098 = vadd.xlane.f32.xlu0 %v4097
      %v4099 = vpop.xlane.xlu0 %4098
      %v4100 = vrcp.pop %v4099
      %v4101 = vmul.f32 %v4096, %v4100
      %v4103 = vsel %vm807, %v4101, 0
      %4105 = vmatprep.subr.mxu0 0.0
      %4106 = vmatpush1.msra.mxu0 %v4010
      %4107 = vmatprep.subr.mxu0 0.0
      %4108 = vmatpush1.msra.mxu0 0.0
      %4109 = vmatprep.subr.mxu0 0.0
      %4110 = vmatpush1.msra.mxu0 0.0
      %4111 = vmatprep.subr.mxu0 0.0
      %4112 = vmatpush1.msra.mxu0 0.0
      %4113 = vmatprep.subr.mxu0 0.0
      %4114 = vmatpush1.msra.mxu0 0.0
      %4115 = vmatprep.subr.mxu0 0.0
      %4116 = vmatpush1.msra.mxu0 0.0
      %4117 = vmatprep.subr.mxu0 0.0
      %4118 = vmatpush1.msra.mxu0 0.0
      %4119 = vmatprep.subr.mxu0 0.0
      %4120 = vmatpush1.msra.mxu0 0.0
      %4121 = vmatprep.subr.mxu0 0.0
      %4122 = vmatpush1.msra.mxu0 0.0
      %4123 = vmatprep.subr.mxu0 0.0
      %4124 = vmatpush1.msra.mxu0 0.0
      %4125 = vmatprep.subr.mxu0 0.0
      %4126 = vmatpush1.msra.mxu0 0.0
      %4127 = vmatprep.subr.mxu0 0.0
      %4128 = vmatpush1.msra.mxu0 0.0
      %4129 = vmatprep.subr.mxu0 0.0
      %4130 = vmatpush1.msra.mxu0 0.0
      %4131 = vmatprep.subr.mxu0 0.0
      %4132 = vmatpush1.msra.mxu0 0.0
      %4133 = vmatprep.subr.mxu0 0.0
      %4134 = vmatpush1.msra.mxu0 0.0
      %4135 = vmatprep.subr.mxu0 0.0
      %4136 = vmatpush1.msra.mxu0 0.0
      %4137 = vmatprep.subr.mxu0 0.0
      %4138 = vmatpush1.msra.mxu0 0.0
      %4139 = vmatprep.subr.mxu0 0.0
      %4140 = vmatpush1.msra.mxu0 0.0
      %4141 = vmatprep.subr.mxu0 0.0
      %4142 = vmatpush1.msra.mxu0 0.0
      %4143 = vmatprep.subr.mxu0 0.0
      %4144 = vmatpush1.msra.mxu0 0.0
      %4145 = vmatprep.subr.mxu0 0.0
      %4146 = vmatpush1.msra.mxu0 0.0
      %4147 = vmatprep.subr.mxu0 0.0
      %4148 = vmatpush1.msra.mxu0 0.0
      %4149 = vmatprep.subr.mxu0 0.0
      %4150 = vmatpush1.msra.mxu0 0.0
      %4151 = vmatprep.subr.mxu0 0.0
      %4152 = vmatpush1.msra.mxu0 0.0
      %4153 = vmatprep.subr.mxu0 0.0
      %4154 = vmatpush1.msra.mxu0 0.0
      %4155 = vmatprep.subr.mxu0 0.0
      %4156 = vmatpush1.msra.mxu0 0.0
      %4157 = vmatprep.subr.mxu0 0.0
      %4158 = vmatpush1.msra.mxu0 0.0
      %4159 = vmatprep.subr.mxu0 0.0
      %4160 = vmatpush1.msra.mxu0 0.0
      %4161 = vmatprep.subr.mxu0 0.0
      %4162 = vmatpush1.msra.mxu0 0.0
      %4163 = vmatprep.subr.mxu0 0.0
      %4164 = vmatpush1.msra.mxu0 0.0
      %4165 = vmatprep.subr.mxu0 0.0
      %4166 = vmatpush1.msra.mxu0 0.0
      %4167 = vmatprep.subr.mxu0 0.0
      %4168 = vmatpush1.msra.mxu0 0.0
      %4169 = vmatprep.mubr.f32.mxu0 0.0
      %4170 = vmatmul.mubr.f32.gmra.mrb[0].mxu0 %v4103
      %v4171 = vpop.f32.mrb[0].mxu0
      %v4172 = vadd.f32 0.0, %v4171
      %v4173 = vpop.f32.mrb[0].mxu0
      %4174 = vdwg.mxu0
      %4176 = vrot.lane.b32.xlu0 %v3350, 8
      %v4177 = vpop.permute.xlu0 %4176
      %4180 = vrot.lane.b32.xlu0 %v3761, 16
      %v4181 = vpop.permute.xlu0 %4180
      %4184 = vrot.lane.b32.xlu0 %v4172, 24
      %v4185 = vpop.permute.xlu0 %4184
      %v4187 = vsel %vm807, %v2939, %v4177
      %v4188 = vsel %vm2222, %v4187, %v4181
      %v4189 = vsel %vm2224, %v4188, %v4185
      %s4190 = scalar_lea.vmem %s7, 32
      %v4191 = vld [vmem:[%s4190] sm:$0xff]
      %v4192 = vld [vmem:[%s4190 + $0x8] sm:$0xff]
      %v4193 = vld [vmem:[%s4190 + $0x10] sm:$0xff]
      %v4194 = vld [vmem:[%s4190 + $0x18] sm:$0xff]
      %v4195 = vlaneseq
      %v4196 = vshrl.u32 %v4195, 7
      %v4197 = vsub.s32 4, %v4196
      %v4198 = vrot.slane %v466, %v4197
      %v4200 = vsel %vm567, %v4189, 0
      %4202 = vmatprep.subr.mxu0 0.0
      %4203 = vmatpush1.msra.mxu0 %v4191
      %4204 = vmatprep.subr.mxu0 0.0
      %4205 = vmatpush1.msra.mxu0 %v4192
      %4206 = vmatprep.subr.mxu0 0.0
      %4207 = vmatpush1.msra.mxu0 %v4193
      %4208 = vmatprep.subr.mxu0 0.0
      %4209 = vmatpush1.msra.mxu0 %v4194
      %4210 = vmatprep.subr.mxu0 0.0
      %4211 = vmatpush1.msra.mxu0 0.0
      %4212 = vmatprep.subr.mxu0 0.0
      %4213 = vmatpush1.msra.mxu0 0.0
      %4214 = vmatprep.subr.mxu0 0.0
      %4215 = vmatpush1.msra.mxu0 0.0
      %4216 = vmatprep.subr.mxu0 0.0
      %4217 = vmatpush1.msra.mxu0 0.0
      %4218 = vmatprep.subr.mxu0 0.0
      %4219 = vmatpush1.msra.mxu0 0.0
      %4220 = vmatprep.subr.mxu0 0.0
      %4221 = vmatpush1.msra.mxu0 0.0
      %4222 = vmatprep.subr.mxu0 0.0
      %4223 = vmatpush1.msra.mxu0 0.0
      %4224 = vmatprep.subr.mxu0 0.0
      %4225 = vmatpush1.msra.mxu0 0.0
      %4226 = vmatprep.subr.mxu0 0.0
      %4227 = vmatpush1.msra.mxu0 0.0
      %4228 = vmatprep.subr.mxu0 0.0
      %4229 = vmatpush1.msra.mxu0 0.0
      %4230 = vmatprep.subr.mxu0 0.0
      %4231 = vmatpush1.msra.mxu0 0.0
      %4232 = vmatprep.subr.mxu0 0.0
      %4233 = vmatpush1.msra.mxu0 0.0
      %4234 = vmatprep.subr.mxu0 0.0
      %4235 = vmatpush1.msra.mxu0 0.0
      %4236 = vmatprep.subr.mxu0 0.0
      %4237 = vmatpush1.msra.mxu0 0.0
      %4238 = vmatprep.subr.mxu0 0.0
      %4239 = vmatpush1.msra.mxu0 0.0
      %4240 = vmatprep.subr.mxu0 0.0
      %4241 = vmatpush1.msra.mxu0 0.0
      %4242 = vmatprep.subr.mxu0 0.0
      %4243 = vmatpush1.msra.mxu0 0.0
      %4244 = vmatprep.subr.mxu0 0.0
      %4245 = vmatpush1.msra.mxu0 0.0
      %4246 = vmatprep.subr.mxu0 0.0
      %4247 = vmatpush1.msra.mxu0 0.0
      %4248 = vmatprep.subr.mxu0 0.0
      %4249 = vmatpush1.msra.mxu0 0.0
      %4250 = vmatprep.subr.mxu0 0.0
      %4251 = vmatpush1.msra.mxu0 0.0
      %4252 = vmatprep.subr.mxu0 0.0
      %4253 = vmatpush1.msra.mxu0 0.0
      %4254 = vmatprep.subr.mxu0 0.0
      %4255 = vmatpush1.msra.mxu0 0.0
      %4256 = vmatprep.subr.mxu0 0.0
      %4257 = vmatpush1.msra.mxu0 0.0
      %4258 = vmatprep.subr.mxu0 0.0
      %4259 = vmatpush1.msra.mxu0 0.0
      %4260 = vmatprep.subr.mxu0 0.0
      %4261 = vmatpush1.msra.mxu0 0.0
      %4262 = vmatprep.subr.mxu0 0.0
      %4263 = vmatpush1.msra.mxu0 0.0
      %4264 = vmatprep.subr.mxu0 0.0
      %4265 = vmatpush1.msra.mxu0 0.0
      %4266 = vmatprep.mubr.f32.mxu0 0.0
      %4267 = vmatmul.mubr.f32.gmra.mrb[0].mxu0 %v4200
      %v4268 = vpop.f32.mrb[0].mxu0
      %v4269 = vadd.f32 %v4198, %v4268
      %v4270 = vpop.f32.mrb[0].mxu0
      %4271 = vdwg.mxu0
      %v4272 = vadd.f32 %v2527, %v4269
      %v4273 = vsel %vm567, %v4272, 0.0
      %4274 = vadd.xlane.f32.xlu0 %v4273
      %v4275 = vpop.xlane.xlu0 %4274
      %v4276 = vmul.f32 %v4275, %v2311
      %v4277 = vsub.f32 %v4272, %v4276
      %v4278 = vmul.f32 %v4277, %v4277
      %v4279 = vsel %vm567, %v4278, 0.0
      %4280 = vadd.xlane.f32.xlu0 %v4279
      %v4281 = vpop.xlane.xlu0 %4280
      %v4282 = vmul.f32 %v4281, %v2311
      %v4283 = vadd.f32 %v4282, 1e-05
      %v4284 = vrsqrt.pop %v4283
      %v4285 = vmul.f32 %v4277, %v4284
      %v4286 = vlaneseq
      %v4287 = vshrl.u32 %v4286, 7
      %v4288 = vsub.s32 5, %v4287
      %v4289 = vrot.slane %v466, %v4288
      %v4290 = vmul.f32 %v4285, %v4289
      %v4291 = vlaneseq
      %v4292 = vshrl.u32 %v4291, 7
      %v4293 = vsub.s32 6, %v4292
      %v4294 = vrot.slane %v466, %v4293
      %v4295 = vadd.f32 %v4290, %v4294
      %s4296 = scalar_lea.vmem %s8, 32
      %v4297 = vld [vmem:[%s4296] sm:$0xff]
      %v4298 = vld [vmem:[%s4296 + $0x8] sm:$0xff]
      %v4299 = vld [vmem:[%s4296 + $0x10] sm:$0xff]
      %v4300 = vld [vmem:[%s4296 + $0x18] sm:$0xff]
      %v4301 = vlaneseq
      %v4302 = vshrl.u32 %v4301, 7
      %v4303 = vsub.s32 7, %v4302
      %v4304 = vrot.slane %v466, %v4303
      %v4306 = vsel %vm567, %v4295, 0
      %4308 = vmatprep.subr.mxu0 0.0
      %4309 = vmatpush1.msra.mxu0 %v4297
      %4310 = vmatprep.subr.mxu0 0.0
      %4311 = vmatpush1.msra.mxu0 %v4298
      %4312 = vmatprep.subr.mxu0 0.0
      %4313 = vmatpush1.msra.mxu0 %v4299
      %4314 = vmatprep.subr.mxu0 0.0
      %4315 = vmatpush1.msra.mxu0 %v4300
      %4316 = vmatprep.subr.mxu0 0.0
      %4317 = vmatpush1.msra.mxu0 0.0
      %4318 = vmatprep.subr.mxu0 0.0
      %4319 = vmatpush1.msra.mxu0 0.0
      %4320 = vmatprep.subr.mxu0 0.0
      %4321 = vmatpush1.msra.mxu0 0.0
      %4322 = vmatprep.subr.mxu0 0.0
      %4323 = vmatpush1.msra.mxu0 0.0
      %4324 = vmatprep.subr.mxu0 0.0
      %4325 = vmatpush1.msra.mxu0 0.0
      %4326 = vmatprep.subr.mxu0 0.0
      %4327 = vmatpush1.msra.mxu0 0.0
      %4328 = vmatprep.subr.mxu0 0.0
      %4329 = vmatpush1.msra.mxu0 0.0
      %4330 = vmatprep.subr.mxu0 0.0
      %4331 = vmatpush1.msra.mxu0 0.0
      %4332 = vmatprep.subr.mxu0 0.0
      %4333 = vmatpush1.msra.mxu0 0.0
      %4334 = vmatprep.subr.mxu0 0.0
      %4335 = vmatpush1.msra.mxu0 0.0
      %4336 = vmatprep.subr.mxu0 0.0
      %4337 = vmatpush1.msra.mxu0 0.0
      %4338 = vmatprep.subr.mxu0 0.0
      %4339 = vmatpush1.msra.mxu0 0.0
      %4340 = vmatprep.subr.mxu0 0.0
      %4341 = vmatpush1.msra.mxu0 0.0
      %4342 = vmatprep.subr.mxu0 0.0
      %4343 = vmatpush1.msra.mxu0 0.0
      %4344 = vmatprep.subr.mxu0 0.0
      %4345 = vmatpush1.msra.mxu0 0.0
      %4346 = vmatprep.subr.mxu0 0.0
      %4347 = vmatpush1.msra.mxu0 0.0
      %4348 = vmatprep.subr.mxu0 0.0
      %4349 = vmatpush1.msra.mxu0 0.0
      %4350 = vmatprep.subr.mxu0 0.0
      %4351 = vmatpush1.msra.mxu0 0.0
      %4352 = vmatprep.subr.mxu0 0.0
      %4353 = vmatpush1.msra.mxu0 0.0
      %4354 = vmatprep.subr.mxu0 0.0
      %4355 = vmatpush1.msra.mxu0 0.0
      %4356 = vmatprep.subr.mxu0 0.0
      %4357 = vmatpush1.msra.mxu0 0.0
      %4358 = vmatprep.subr.mxu0 0.0
      %4359 = vmatpush1.msra.mxu0 0.0
      %4360 = vmatprep.subr.mxu0 0.0
      %4361 = vmatpush1.msra.mxu0 0.0
      %4362 = vmatprep.subr.mxu0 0.0
      %4363 = vmatpush1.msra.mxu0 0.0
      %4364 = vmatprep.subr.mxu0 0.0
      %4365 = vmatpush1.msra.mxu0 0.0
      %4366 = vmatprep.subr.mxu0 0.0
      %4367 = vmatpush1.msra.mxu0 0.0
      %4368 = vmatprep.subr.mxu0 0.0
      %4369 = vmatpush1.msra.mxu0 0.0
      %4370 = vmatprep.subr.mxu0 0.0
      %4371 = vmatpush1.msra.mxu0 0.0
      %4372 = vmatprep.mubr.f32.mxu0 0.0
      %4373 = vmatmul.mubr.f32.gmra.mrb[0].mxu0 %v4306
      %v4374 = vpop.f32.mrb[0].mxu0
      %v4375 = vadd.f32 %v4304, %v4374
      %v4376 = vpop.f32.mrb[0].mxu0
      %4377 = vdwg.mxu0
      %v4378 = vmax.f32 %v4375, 0.0
      %s4379 = scalar_lea.vmem %s9, 128
      %v4380 = vld [vmem:[%s4379] sm:$0xff]
      %v4381 = vld [vmem:[%s4379 + $0x8] sm:$0xff]
      %v4382 = vld [vmem:[%s4379 + $0x10] sm:$0xff]
      %v4383 = vld [vmem:[%s4379 + $0x18] sm:$0xff]
      %v4384 = vld [vmem:[%s4379 + $0x20] sm:$0xff]
      %v4385 = vld [vmem:[%s4379 + $0x28] sm:$0xff]
      %v4386 = vld [vmem:[%s4379 + $0x30] sm:$0xff]
      %v4387 = vld [vmem:[%s4379 + $0x38] sm:$0xff]
      %v4388 = vld [vmem:[%s4379 + $0x40] sm:$0xff]
      %v4389 = vld [vmem:[%s4379 + $0x48] sm:$0xff]
      %v4390 = vld [vmem:[%s4379 + $0x50] sm:$0xff]
      %v4391 = vld [vmem:[%s4379 + $0x58] sm:$0xff]
      %v4392 = vld [vmem:[%s4379 + $0x60] sm:$0xff]
      %v4393 = vld [vmem:[%s4379 + $0x68] sm:$0xff]
      %v4394 = vld [vmem:[%s4379 + $0x70] sm:$0xff]
      %v4395 = vld [vmem:[%s4379 + $0x78] sm:$0xff]
      %v4396 = vlaneseq
      %v4397 = vshrl.u32 %v4396, 7
      %v4398 = vsub.s32 0, %v4397
      %v4399 = vrot.slane %v467, %v4398
      %4400 = vmatprep.subr.mxu0 0.0
      %4401 = vmatpush1.msra.mxu0 %v4380
      %4402 = vmatprep.subr.mxu0 0.0
      %4403 = vmatpush1.msra.mxu0 %v4381
      %4404 = vmatprep.subr.mxu0 0.0
      %4405 = vmatpush1.msra.mxu0 %v4382
      %4406 = vmatprep.subr.mxu0 0.0
      %4407 = vmatpush1.msra.mxu0 %v4383
      %4408 = vmatprep.subr.mxu0 0.0
      %4409 = vmatpush1.msra.mxu0 %v4384
      %4410 = vmatprep.subr.mxu0 0.0
      %4411 = vmatpush1.msra.mxu0 %v4385
      %4412 = vmatprep.subr.mxu0 0.0
      %4413 = vmatpush1.msra.mxu0 %v4386
      %4414 = vmatprep.subr.mxu0 0.0
      %4415 = vmatpush1.msra.mxu0 %v4387
      %4416 = vmatprep.subr.mxu0 0.0
      %4417 = vmatpush1.msra.mxu0 %v4388
      %4418 = vmatprep.subr.mxu0 0.0
      %4419 = vmatpush1.msra.mxu0 %v4389
      %4420 = vmatprep.subr.mxu0 0.0
      %4421 = vmatpush1.msra.mxu0 %v4390
      %4422 = vmatprep.subr.mxu0 0.0
      %4423 = vmatpush1.msra.mxu0 %v4391
      %4424 = vmatprep.subr.mxu0 0.0
      %4425 = vmatpush1.msra.mxu0 %v4392
      %4426 = vmatprep.subr.mxu0 0.0
      %4427 = vmatpush1.msra.mxu0 %v4393
      %4428 = vmatprep.subr.mxu0 0.0
      %4429 = vmatpush1.msra.mxu0 %v4394
      %4430 = vmatprep.subr.mxu0 0.0
      %4431 = vmatpush1.msra.mxu0 %v4395
      %4432 = vmatprep.subr.mxu0 0.0
      %4433 = vmatpush1.msra.mxu0 0.0
      %4434 = vmatprep.subr.mxu0 0.0
      %4435 = vmatpush1.msra.mxu0 0.0
      %4436 = vmatprep.subr.mxu0 0.0
      %4437 = vmatpush1.msra.mxu0 0.0
      %4438 = vmatprep.subr.mxu0 0.0
      %4439 = vmatpush1.msra.mxu0 0.0
      %4440 = vmatprep.subr.mxu0 0.0
      %4441 = vmatpush1.msra.mxu0 0.0
      %4442 = vmatprep.subr.mxu0 0.0
      %4443 = vmatpush1.msra.mxu0 0.0
      %4444 = vmatprep.subr.mxu0 0.0
      %4445 = vmatpush1.msra.mxu0 0.0
      %4446 = vmatprep.subr.mxu0 0.0
      %4447 = vmatpush1.msra.mxu0 0.0
      %4448 = vmatprep.subr.mxu0 0.0
      %4449 = vmatpush1.msra.mxu0 0.0
      %4450 = vmatprep.subr.mxu0 0.0
      %4451 = vmatpush1.msra.mxu0 0.0
      %4452 = vmatprep.subr.mxu0 0.0
      %4453 = vmatpush1.msra.mxu0 0.0
      %4454 = vmatprep.subr.mxu0 0.0
      %4455 = vmatpush1.msra.mxu0 0.0
      %4456 = vmatprep.subr.mxu0 0.0
      %4457 = vmatpush1.msra.mxu0 0.0
      %4458 = vmatprep.subr.mxu0 0.0
      %4459 = vmatpush1.msra.mxu0 0.0
      %4460 = vmatprep.subr.mxu0 0.0
      %4461 = vmatpush1.msra.mxu0 0.0
      %4462 = vmatprep.subr.mxu0 0.0
      %4463 = vmatpush1.msra.mxu0 0.0
      %4464 = vmatprep.mubr.f32.mxu0 0.0
      %4465 = vmatmul.mubr.f32.gmra.mrb[0].mxu0 %v4378
      %v4466 = vpop.f32.mrb[0].mxu0
      %v4467 = vadd.f32 %v4399, %v4466
      %v4468 = vpop.f32.mrb[0].mxu0
      %4469 = vdwg.mxu0
      %v4470 = vadd.f32 %v4295, %v4467
      %v4471 = vsel %vm567, %v4470, 0.0
      %4472 = vadd.xlane.f32.xlu0 %v4471
      %v4473 = vpop.xlane.xlu0 %4472
      %v4474 = vmul.f32 %v4473, %v2311
      %v4475 = vsub.f32 %v4470, %v4474
      %v4476 = vmul.f32 %v4475, %v4475
      %v4477 = vsel %vm567, %v4476, 0.0
      %4478 = vadd.xlane.f32.xlu0 %v4477
      %v4479 = vpop.xlane.xlu0 %4478
      %v4480 = vmul.f32 %v4479, %v2311
      %v4481 = vadd.f32 %v4480, 1e-05
      %v4482 = vrsqrt.pop %v4481
      %v4483 = vmul.f32 %v4475, %v4482
      %v4484 = vlaneseq
      %v4485 = vshrl.u32 %v4484, 7
      %v4486 = vsub.s32 1, %v4485
      %v4487 = vrot.slane %v467, %v4486
      %v4488 = vmul.f32 %v4483, %v4487
      %v4489 = vlaneseq
      %v4490 = vshrl.u32 %v4489, 7
      %v4491 = vsub.s32 2, %v4490
      %v4492 = vrot.slane %v467, %v4491
      %v4493 = vadd.f32 %v4488, %v4492
      %v4494 = vld [vmem:[%s461] sm:$0xff]
      %4496 = vset.pattern.permute.xlu0 0
      %4497 = vperm.xlu0 %4496, %v4494
      %v4498 = vpop.permute.xlu0 %4497
      %v4500 = vmul.f32 %v4493, %v4498
      %v4501 = vsel %vm567, %v4500, 0.0
      %v4502 = vrot.slane %v4501, 4
      %v4503 = vadd.f32 %v4501, %v4502
      %v4504 = vrot.slane %v4503, 2
      %v4505 = vadd.f32 %v4503, %v4504
      %v4506 = vrot.slane %v4505, 1
      %v4507 = vadd.f32 %v4505, %v4506
      %v4508 = vsel %vm567, %v4507, 0.0
      %4509 = vadd.xlane.f32.xlu0 %v4508
      %v4510 = vpop.xlane.xlu0 %4509
      %v4511 = vmul.f32 %v4510, %v2311
      %v4512 = vsub.f32 %v4507, %v4511
      %v4513 = vmul.f32 %v4512, %v4512
      %v4514 = vsel %vm567, %v4513, 0.0
      %4515 = vadd.xlane.f32.xlu0 %v4514
      %v4516 = vpop.xlane.xlu0 %4515
      %v4517 = vmul.f32 %v4516, %v2311
      %v4518 = vadd.f32 %v4517, 1e-05
      %v4519 = vrsqrt.pop %v4518
      %v4520 = vmul.f32 %v4512, %v4519
      %v4521 = vmul.f32 %v4520, %v465
      %v4523 = vrot.slane %v465, 1
      %v4525 = vadd.f32 %v4521, %v4523
      %v4526 = vld [vmem:[%s10] sm:$0xff]
      %v4527 = vld [vmem:[%s10 + $0x8] sm:$0xff]
      %v4528 = vld [vmem:[%s10 + $0x10] sm:$0xff]
      %v4529 = vld [vmem:[%s10 + $0x18] sm:$0xff]
      %v4531 = vrot.slane %v4525, 1
      %v4532 = vrot.slane %v465, 3
      %v4534 = vsel %vm567, %v4531, 0
      %4536 = vmatprep.subr.mxu0 0.0
      %4537 = vmatpush1.msra.mxu0 %v4526
      %4538 = vmatprep.subr.mxu0 0.0
      %4539 = vmatpush1.msra.mxu0 %v4527
      %4540 = vmatprep.subr.mxu0 0.0
      %4541 = vmatpush1.msra.mxu0 %v4528
      %4542 = vmatprep.subr.mxu0 0.0
      %4543 = vmatpush1.msra.mxu0 %v4529
      %4544 = vmatprep.subr.mxu0 0.0
      %4545 = vmatpush1.msra.mxu0 0.0
      %4546 = vmatprep.subr.mxu0 0.0
      %4547 = vmatpush1.msra.mxu0 0.0
      %4548 = vmatprep.subr.mxu0 0.0
      %4549 = vmatpush1.msra.mxu0 0.0
      %4550 = vmatprep.subr.mxu0 0.0
      %4551 = vmatpush1.msra.mxu0 0.0
      %4552 = vmatprep.subr.mxu0 0.0
      %4553 = vmatpush1.msra.mxu0 0.0
      %4554 = vmatprep.subr.mxu0 0.0
      %4555 = vmatpush1.msra.mxu0 0.0
      %4556 = vmatprep.subr.mxu0 0.0
      %4557 = vmatpush1.msra.mxu0 0.0
      %4558 = vmatprep.subr.mxu0 0.0
      %4559 = vmatpush1.msra.mxu0 0.0
      %4560 = vmatprep.subr.mxu0 0.0
      %4561 = vmatpush1.msra.mxu0 0.0
      %4562 = vmatprep.subr.mxu0 0.0
      %4563 = vmatpush1.msra.mxu0 0.0
      %4564 = vmatprep.subr.mxu0 0.0
      %4565 = vmatpush1.msra.mxu0 0.0
      %4566 = vmatprep.subr.mxu0 0.0
      %4567 = vmatpush1.msra.mxu0 0.0
      %4568 = vmatprep.subr.mxu0 0.0
      %4569 = vmatpush1.msra.mxu0 0.0
      %4570 = vmatprep.subr.mxu0 0.0
      %4571 = vmatpush1.msra.mxu0 0.0
      %4572 = vmatprep.subr.mxu0 0.0
      %4573 = vmatpush1.msra.mxu0 0.0
      %4574 = vmatprep.subr.mxu0 0.0
      %4575 = vmatpush1.msra.mxu0 0.0
      %4576 = vmatprep.subr.mxu0 0.0
      %4577 = vmatpush1.msra.mxu0 0.0
      %4578 = vmatprep.subr.mxu0 0.0
      %4579 = vmatpush1.msra.mxu0 0.0
      %4580 = vmatprep.subr.mxu0 0.0
      %4581 = vmatpush1.msra.mxu0 0.0
      %4582 = vmatprep.subr.mxu0 0.0
      %4583 = vmatpush1.msra.mxu0 0.0
      %4584 = vmatprep.subr.mxu0 0.0
      %4585 = vmatpush1.msra.mxu0 0.0
      %4586 = vmatprep.subr.mxu0 0.0
      %4587 = vmatpush1.msra.mxu0 0.0
      %4588 = vmatprep.subr.mxu0 0.0
      %4589 = vmatpush1.msra.mxu0 0.0
      %4590 = vmatprep.subr.mxu0 0.0
      %4591 = vmatpush1.msra.mxu0 0.0
      %4592 = vmatprep.subr.mxu0 0.0
      %4593 = vmatpush1.msra.mxu0 0.0
      %4594 = vmatprep.subr.mxu0 0.0
      %4595 = vmatpush1.msra.mxu0 0.0
      %4596 = vmatprep.subr.mxu0 0.0
      %4597 = vmatpush1.msra.mxu0 0.0
      %4598 = vmatprep.subr.mxu0 0.0
      %4599 = vmatpush1.msra.mxu0 0.0
      %4600 = vmatprep.mubr.f32.mxu0 0.0
      %4601 = vmatmul.mubr.f32.gmra.mrb[0].mxu0 %v4534
      %v4602 = vpop.f32.mrb[0].mxu0
      %v4603 = vadd.f32 %v4532, %v4602
      %v4604 = vpop.f32.mrb[0].mxu0
      %4605 = vdwg.mxu0
      %v4606 = vmax.f32 %v4603, 0.0
      %v4607 = vld [vmem:[%s11] sm:$0xff]
      %v4608 = vld [vmem:[%s11 + $0x8] sm:$0xff]
      %v4609 = vld [vmem:[%s11 + $0x10] sm:$0xff]
      %v4610 = vld [vmem:[%s11 + $0x18] sm:$0xff]
      %v4611 = vld [vmem:[%s11 + $0x20] sm:$0xff]
      %v4612 = vld [vmem:[%s11 + $0x28] sm:$0xff]
      %v4613 = vld [vmem:[%s11 + $0x30] sm:$0xff]
      %v4614 = vld [vmem:[%s11 + $0x38] sm:$0xff]
      %v4615 = vrot.slane %v465, 4
      %vm4617 = vcmask 523264
      %v4619 = vsel %vm4617, %v4606, 0
      %4621 = vmatprep.subr.mxu0 0.0
      %4622 = vmatpush1.msra.mxu0 %v4607
      %4623 = vmatprep.subr.mxu0 0.0
      %4624 = vmatpush1.msra.mxu0 %v4608
      %4625 = vmatprep.subr.mxu0 0.0
      %4626 = vmatpush1.msra.mxu0 %v4609
      %4627 = vmatprep.subr.mxu0 0.0
      %4628 = vmatpush1.msra.mxu0 %v4610
      %4629 = vmatprep.subr.mxu0 0.0
      %4630 = vmatpush1.msra.mxu0 %v4611
      %4631 = vmatprep.subr.mxu0 0.0
      %4632 = vmatpush1.msra.mxu0 %v4612
      %4633 = vmatprep.subr.mxu0 0.0
      %4634 = vmatpush1.msra.mxu0 %v4613
      %4635 = vmatprep.subr.mxu0 0.0
      %4636 = vmatpush1.msra.mxu0 %v4614
      %4637 = vmatprep.subr.mxu0 0.0
      %4638 = vmatpush1.msra.mxu0 0.0
      %4639 = vmatprep.subr.mxu0 0.0
      %4640 = vmatpush1.msra.mxu0 0.0
      %4641 = vmatprep.subr.mxu0 0.0
      %4642 = vmatpush1.msra.mxu0 0.0
      %4643 = vmatprep.subr.mxu0 0.0
      %4644 = vmatpush1.msra.mxu0 0.0
      %4645 = vmatprep.subr.mxu0 0.0
      %4646 = vmatpush1.msra.mxu0 0.0
      %4647 = vmatprep.subr.mxu0 0.0
      %4648 = vmatpush1.msra.mxu0 0.0
      %4649 = vmatprep.subr.mxu0 0.0
      %4650 = vmatpush1.msra.mxu0 0.0
      %4651 = vmatprep.subr.mxu0 0.0
      %4652 = vmatpush1.msra.mxu0 0.0
      %4653 = vmatprep.subr.mxu0 0.0
      %4654 = vmatpush1.msra.mxu0 0.0
      %4655 = vmatprep.subr.mxu0 0.0
      %4656 = vmatpush1.msra.mxu0 0.0
      %4657 = vmatprep.subr.mxu0 0.0
      %4658 = vmatpush1.msra.mxu0 0.0
      %4659 = vmatprep.subr.mxu0 0.0
      %4660 = vmatpush1.msra.mxu0 0.0
      %4661 = vmatprep.subr.mxu0 0.0
      %4662 = vmatpush1.msra.mxu0 0.0
      %4663 = vmatprep.subr.mxu0 0.0
      %4664 = vmatpush1.msra.mxu0 0.0
      %4665 = vmatprep.subr.mxu0 0.0
      %4666 = vmatpush1.msra.mxu0 0.0
      %4667 = vmatprep.subr.mxu0 0.0
      %4668 = vmatpush1.msra.mxu0 0.0
      %4669 = vmatprep.subr.mxu0 0.0
      %4670 = vmatpush1.msra.mxu0 0.0
      %4671 = vmatprep.subr.mxu0 0.0
      %4672 = vmatpush1.msra.mxu0 0.0
      %4673 = vmatprep.subr.mxu0 0.0
      %4674 = vmatpush1.msra.mxu0 0.0
      %4675 = vmatprep.subr.mxu0 0.0
      %4676 = vmatpush1.msra.mxu0 0.0
      %4677 = vmatprep.subr.mxu0 0.0
      %4678 = vmatpush1.msra.mxu0 0.0
      %4679 = vmatprep.subr.mxu0 0.0
      %4680 = vmatpush1.msra.mxu0 0.0
      %4681 = vmatprep.subr.mxu0 0.0
      %4682 = vmatpush1.msra.mxu0 0.0
      %4683 = vmatprep.subr.mxu0 0.0
      %4684 = vmatpush1.msra.mxu0 0.0
      %4685 = vmatprep.mubr.f32.mxu0 0.0
      %4686 = vmatmul.mubr.f32.gmra.mrb[0].mxu0 %v4619
      %v4687 = vpop.f32.mrb[0].mxu0
      %v4688 = vadd.f32 %v4615, %v4687
      %v4689 = vpop.f32.mrb[0].mxu0
      %4690 = vdwg.mxu0
      %4691 = vst [vmem:[%s464] sm:$0x1] %v4688
      %p4692 = scmp.lt.s32.totalorder %s24, 1
      %s4693 = scalar_select %p4692, %s24, 1
      %s4694 = scalar_lea.vmem %s13, %s4693
      // Predicated region
      $region73: #{video_classifier_forward.1} parent=71 // pred_check
        %p4695 = pneg %p330
      $region74: #{video_classifier_forward.1} parent=71 // pred_check_branch
        %4697 = sbr.rel (%p4695) target = $region76
      $region75: #{video_classifier_forward.1} parent=71 // pred_region
        _
      $region76: #{video_classifier_forward.1} parent=71 // pred_fallthru
        _
    $region72: #{video_classifier_forward.1} parent=5 // pred_fallthru
      _
    %p4698 = scmp.le.s32.totalorder 2, %s19
    // Predicated region
    $region77: #{video_classifier_forward.1} parent=5 // pred_check
      %p4699 = pneg %p4698
    $region78: #{video_classifier_forward.1} parent=5 // pred_check_branch
      %4701 = sbr.rel (%p4699) target = $region80
    $region79: #{video_classifier_forward.1} parent=5 // pred_region
      %s4702 = ssub.s32 %s19, 2
      // Predicated region
      $region81: #{video_classifier_forward.1} parent=79 // pred_check
        %p4703 = pneg %p336
      $region82: #{video_classifier_forward.1} parent=79 // pred_check_branch
        %4705 = sbr.rel (%p4703) target = $region84
      $region83: #{video_classifier_forward.1} parent=79 // pred_region
        %p4706 = scmp.lt.s32.totalorder %s25, 1
        %s4707 = scalar_select %p4706, %s25, 1
        %s4708 = scalar_lea.vmem %s13, %s4707
      $region84: #{video_classifier_forward.1} parent=79 // pred_fallthru
        _
    $region80: #{video_classifier_forward.1} parent=5 // pred_fallthru
      _
  $region6: #{video_classifier_forward.1} parent=0 // loop_footer
    %s23 = sadd.s32 1, %s19
  $region7: #{video_classifier_forward.1} parent=0 // loop_footer_branch
    %18 = sbr.rel target = $region3
  $region8: #{video_classifier_forward.1} parent=0 // loop_exit
    _

</llo_original>
